<compile_context>
chip_gen: v5e
topology: v5e:2x2
jax: 0.10.0
libtpu: 0.0.40
codegen_flags: <defaults>
</compile_context>

<pallas_src>
import functools

import jax
import jax.numpy as jnp
from jax import lax
from jax.experimental import pallas as pl
from jax.experimental.pallas import tpu as pltpu

BN_EPS = 1e-5
_VMEM_LIMIT = 32 * 1024 * 1024        # explicit: v5e's scoped-VMEM default is 16 MiB
_VMEM_TILE_BUDGET = 24 * 1024 * 1024  # headroom under v7x's 32 MiB scoped / 64 MiB physical


def _round_up(x, m):
    return ((x + m - 1) // m) * m


def _pick_tm(M, Kp, Cp):
    """Largest M tile (multiple of 256 -> full-width v6e/v7x MXU panels) in budget."""
    if M <= 256:
        # bf16 packs two rows per sublane -> keep tm a multiple of 16.
        return _round_up(max(M, 16), 16)
    cap = _round_up(M, 256)
    for tm in (1024, 512, 256):
        if tm > cap:
            continue
        need = (2 * tm * Kp * 2      # double-buffered bf16 patches
                + 2 * tm * Cp * 4    # double-buffered f32 output
                + 2 * tm * Cp * 2    # double-buffered bf16 staged conv output
                + 2 * Kp * Cp * 2    # resident bf16 weight (2 buffers)
                + 4 * 8 * Cp * 4)    # stats tiles + scratch
        if need <= _VMEM_TILE_BUDGET:
            return tm
    return 256


# ---------------------------------------------------------------------------
# Phase 1: conv matmul + per-channel sum / sum-of-squares partials.
#   grid = (n_split, n_half):  axis 0 "parallel" (per-TensorCore slab on v7x),
#   axis 1 "arbitrary" (reduction over M tiles, accumulator resident in VMEM).
#   stats_ref block (16, Cp): rows 0:8 = folded sum partials, 8:16 = sumsq.
# ---------------------------------------------------------------------------
def _stats_body(p_ref, w_ref, stats_ref, conv_ref, sum_sc, sq_sc):
    i = pl.program_id(1)

    @pl.when(i == 0)
    def _init():
        sum_sc[...] = jnp.zeros_like(sum_sc)
        sq_sc[...] = jnp.zeros_like(sq_sc)

    # MXU matmul: bf16 inputs, f32 accumulate.
    acc = jnp.dot(p_ref[...], w_ref[...], preferred_element_type=jnp.float32)

    if conv_ref is not None:
        # Stage the conv result so phase 2 never redoes the matmul.
        conv_ref[...] = acc.astype(conv_ref.dtype)

    # Fold (tm, Cp) -> (tm//8, 8, Cp) and sum the leading axis: pure VPU vreg
    # adds into an 8-row accumulator (no per-iteration cross-sublane reduce,
    # no sub-(8,128) masked RMW stores on the resident output).
    tm, cp = acc.shape
    folded = acc.reshape(tm // 8, 8, cp)
    sum_sc[...] = sum_sc[...] + jnp.sum(folded, axis=0)
    sq_sc[...] = sq_sc[...] + jnp.sum(folded * folded, axis=0)

    @pl.when(i == pl.num_programs(1) - 1)
    def _flush():
        stats_ref[0:8, :] = sum_sc[...]
        stats_ref[8:16, :] = sq_sc[...]


def stats_recompute_kernel(p_ref, w_ref, stats_ref, sum_sc, sq_sc):
    _stats_body(p_ref, w_ref, stats_ref, None, sum_sc, sq_sc)


def stats_staged_kernel(p_ref, w_ref, stats_ref, conv_ref, sum_sc, sq_sc):
    _stats_body(p_ref, w_ref, stats_ref, conv_ref, sum_sc, sq_sc)


# ---------------------------------------------------------------------------
# Phase 2: apply BN scale/shift + ReLU.  "parallel" grid (megacore on v7x).
#   ss_ref row 0 = scale = gamma * rsqrt(var + eps), row 1 = shift = beta - mean*scale.
# ---------------------------------------------------------------------------
def apply_recompute_kernel(p_ref, w_ref, ss_ref, out_ref):
    acc = jnp.dot(p_ref[...], w_ref[...], preferred_element_type=jnp.float32)
    y = acc * ss_ref[0:1, :] + ss_ref[1:2, :]
    out_ref[...] = jnp.maximum(y, 0.0).astype(out_ref.dtype)


def apply_staged_kernel(conv_ref, ss_ref, out_ref):
    y = conv_ref[...].astype(jnp.float32) * ss_ref[0:1, :] + ss_ref[1:2, :]
    out_ref[...] = jnp.maximum(y, 0.0).astype(out_ref.dtype)


def conv_block_forward(x, weight, bias, gamma, beta, *, stride, padding):
    """x: (N, Cin, H, W) f32; weight: (Cout, Cin, KH, KW) f32.

    `bias` is accepted for API parity with nn.Conv2d but intentionally unused:
    a per-channel bias is a mathematical no-op under train-mode BatchNorm.
    """
    del bias  # exactly cancelled by the BN mean subtraction

    N, Cin, H, W = x.shape
    Cout, _, KH, KW = weight.shape
    OH = (H + 2 * padding - KH) // stride + 1
    OW = (W + 2 * padding - KW) // stride + 1
    M = N * OH * OW
    K = Cin * KH * KW

    # ---- glue: im2col patch extraction (plain JAX) ----
    xp = jnp.pad(x, ((0, 0), (0, 0), (padding, padding), (padding, padding)))
    slabs = []
    for kh in range(KH):
        for kw in range(KW):
            slabs.append(
                xp[:, :, kh:kh + stride * OH:stride, kw:kw + stride * OW:stride]
            )  # (N, Cin, OH, OW)
    # (Cin, KH, KW) flattening order matches weight.reshape(Cout, Cin*KH*KW).
    patches = jnp.stack(slabs, axis=2).reshape(N, Cin * KH * KW, OH, OW)
    patches = patches.transpose(0, 2, 3, 1).reshape(M, K)

    # ---- lane-dense padding + tile selection ----
    Kp = _round_up(K, 128)
    # 256-wide Cout panels keep the v6e/v7x 2x256^2 MXU fully fed.
    Cp = _round_up(Cout, 256) if Cout > 128 else _round_up(Cout, 128)
    tm = _pick_tm(M, Kp, Cp)

    n_m = -(-M // tm)
    n_split = 2 if n_m >= 2 else 1       # v7x: shard phase 1 over both TensorCores
    n_m = _round_up(n_m, n_split)
    n_half = n_m // n_split
    Mp = n_m * tm

    # Staged path: when K >> Cout, re-reading patches in phase 2 costs more HBM
    # bytes than staging the bf16 conv result once, and it halves MXU work.
    staged = Kp > 2 * Cp

    patches_p = jnp.pad(patches, ((0, Mp - M), (0, Kp - K))).astype(jnp.bfloat16)
    w2d_p = jnp.pad(
        weight.reshape(Cout, K).T, ((0, Kp - K), (0, Cp - Cout))
    ).astype(jnp.bfloat16)

    # ---- phase 1: per-core partial sums (reduction axis last, "arbitrary") ----
    patch_spec1 = pl.BlockSpec((tm, Kp), lambda c, i: (c * n_half + i, 0))
    w_spec1 = pl.BlockSpec((Kp, Cp), lambda c, i: (0, 0))
    stats_spec = pl.BlockSpec((16, Cp), lambda c, i: (c, 0))

    if staged:
        kern1 = stats_staged_kernel
        out_shape1 = (jax.ShapeDtypeStruct((n_split * 16, Cp), jnp.float32),
                      jax.ShapeDtypeStruct((Mp, Cp), jnp.bfloat16))
        out_specs1 = [stats_spec,
                      pl.BlockSpec((tm, Cp), lambda c, i: (c * n_half + i, 0))]
    else:
        kern1 = stats_recompute_kernel
        out_shape1 = jax.ShapeDtypeStruct((n_split * 16, Cp), jnp.float32)
        out_specs1 = stats_spec

    res1 = pl.pallas_call(
        kern1,
        out_shape=out_shape1,
        grid_spec=pltpu.PrefetchScalarGridSpec(
            num_scalar_prefetch=0,
            grid=(n_split, n_half),
            in_specs=[patch_spec1, w_spec1],
            out_specs=out_specs1,
            scratch_shapes=[pltpu.VMEM((8, Cp), jnp.float32),
                            pltpu.VMEM((8, Cp), jnp.float32)],
        ),
        compiler_params=pltpu.CompilerParams(
            dimension_semantics=("parallel", "arbitrary"),
            vmem_limit_bytes=_VMEM_LIMIT,
            allow_input_fusion=[True, False],
        ),
    )(patches_p, w2d_p)

    if staged:
        stats_raw, conv_bf16 = res1
    else:
        stats_raw = res1

    # ---- tiny cross-core combine + BN scale/shift finalize (wrapper JAX) ----
    parts = stats_raw.reshape(n_split, 2, 8, Cp)
    total_sum = jnp.sum(parts[:, 0], axis=(0, 1))      # (Cp,)
    total_sq = jnp.sum(parts[:, 1], axis=(0, 1))       # (Cp,)
    mean = total_sum / float(M)
    var = jnp.maximum(total_sq / float(M) - mean * mean, 0.0)
    gamma_p = jnp.pad(gamma, (0, Cp - Cout))
    beta_p = jnp.pad(beta, (0, Cp - Cout))
    scale = gamma_p * lax.rsqrt(var + BN_EPS)           # gamma * inv_std
    shift = beta_p - mean * scale                       # beta - mean*scale
    ss = jnp.zeros((8, Cp), jnp.float32).at[0, :].set(scale).at[1, :].set(shift)

    # ---- phase 2: normalize + ReLU (independent tiles -> "parallel") ----
    out_spec2 = pl.BlockSpec((tm, Cp), lambda i: (i, 0))
    ss_spec = pl.BlockSpec((8, Cp), lambda i: (0, 0))

    if staged:
        out_p = pl.pallas_call(
            apply_staged_kernel,
            out_shape=jax.ShapeDtypeStruct((Mp, Cp), jnp.float32),
            grid_spec=pltpu.PrefetchScalarGridSpec(
                num_scalar_prefetch=0,
                grid=(n_m,),
                in_specs=[pl.BlockSpec((tm, Cp), lambda i: (i, 0)), ss_spec],
                out_specs=out_spec2,
            ),
            compiler_params=pltpu.CompilerParams(
                dimension_semantics=("parallel",),
                vmem_limit_bytes=_VMEM_LIMIT,
            ),
        )(conv_bf16, ss)
    else:
        out_p = pl.pallas_call(
            apply_recompute_kernel,
            out_shape=jax.ShapeDtypeStruct((Mp, Cp), jnp.float32),
            grid_spec=pltpu.PrefetchScalarGridSpec(
                num_scalar_prefetch=0,
                grid=(n_m,),
                in_specs=[pl.BlockSpec((tm, Kp), lambda i: (i, 0)),
                          pl.BlockSpec((Kp, Cp), lambda i: (0, 0)),
                          ss_spec],
                out_specs=out_spec2,
            ),
            compiler_params=pltpu.CompilerParams(
                dimension_semantics=("parallel",),
                vmem_limit_bytes=_VMEM_LIMIT,
                allow_input_fusion=[True, False, False],
            ),
        )(patches_p, w2d_p, ss)

    # slice away padding, back to NCHW (see TODO on exposing NHWC downstream)
    out = out_p[:M, :Cout].reshape(N, OH, OW, Cout).transpose(0, 3, 1, 2)
    return out


def reference_forward(x, weight, bias, gamma, beta, *, stride, padding):
    """Pure-JAX reference matching PyTorch Conv2d + train-mode BN + ReLU."""
    conv = lax.conv_general_dilated(
        x, weight,
        window_strides=(stride, stride),
        padding=[(padding, padding), (padding, padding)],
        dimension_numbers=("NCHW", "OIHW", "NCHW"),
    ) + bias.reshape(1, -1, 1, 1)
    mean = jnp.mean(conv, axis=(0, 2, 3), keepdims=True)
    var = jnp.mean((conv - mean) ** 2, axis=(0, 2, 3), keepdims=True)
    bn = (conv - mean) * lax.rsqrt(var + BN_EPS)
    bn = bn * gamma.reshape(1, -1, 1, 1) + beta.reshape(1, -1, 1, 1)
    return jnp.maximum(bn, 0.0)


def _run_case(key, *, N, Cin, H, W, Cout, ksize, stride, padding):
    kx, kw, kb, kg, kbe = jax.random.split(key, 5)
    x = jax.random.normal(kx, (N, Cin, H, W), dtype=jnp.float32)

    fan_in = Cin * ksize * ksize
    bound = 1.0 / (fan_in ** 0.5)
    weight = jax.random.uniform(kw, (Cout, Cin, ksize, ksize),
                                minval=-bound, maxval=bound, dtype=jnp.float32)
    bias = jax.random.uniform(kb, (Cout,), minval=-bound, maxval=bound,
                              dtype=jnp.float32)
    gamma = 1.0 + 0.1 * jax.random.normal(kg, (Cout,), dtype=jnp.float32)
    beta = 0.1 * jax.random.normal(kbe, (Cout,), dtype=jnp.float32)

    fwd = jax.jit(functools.partial(conv_block_forward, stride=stride,
                                    padding=padding))
    out = fwd(x, weight, bias, gamma, beta)
    jax.block_until_ready(out)

    ref = reference_forward(x, weight, bias, gamma, beta,
                            stride=stride, padding=padding)
    assert out.shape == ref.shape, (out.shape, ref.shape)
    # Tolerance accounts for bf16 MXU inputs / staged bf16 conv (f32 BN math).
    assert jnp.allclose(out, ref, atol=5e-2, rtol=5e-2), (
        "mismatch vs pure-JAX reference: max abs err = "
        f"{float(jnp.max(jnp.abs(out - ref)))}")


if __name__ == "__main__":
    key = jax.random.PRNGKey(0)
    k1, k2, k3 = jax.random.split(key, 3)

    # Primary small case: recompute path (Kp <= 2*Cp), single M tile.
    _run_case(k1, N=2, Cin=4, H=16, W=16, Cout=8, ksize=3, stride=1, padding=1)
    # Staged path: Kp=384 > 2*Cp=256 -> phase 1 stages bf16 conv, phase 2 elementwise.
    _run_case(k2, N=2, Cin=32, H=16, W=16, Cout=8, ksize=3, stride=1, padding=1)
    # Multi-tile case: exercises tm=1024 and the 2-way (v7x dual-TC) stats split.
    _run_case(k3, N=2, Cin=4, H=32, W=32, Cout=16, ksize=3, stride=1, padding=1)

    print("KERNEL_OK")
</pallas_src>

<mosaic_0001>
module attributes {stable_mosaic.version = 11 : i64} {
  func.func @stats_recompute_kernel(%arg0: i32, %arg1: i32, %arg2: memref<512x128xbf16, #tpu.memory_space<vmem>>, %arg3: memref<128x128xbf16, #tpu.memory_space<vmem>>, %arg4: memref<16x128xf32, #tpu.memory_space<vmem>>, %arg5: memref<8x128xf32, #tpu.memory_space<vmem>>, %arg6: memref<8x128xf32, #tpu.memory_space<vmem>>) attributes {dimension_semantics = [#tpu.dimension_semantics<parallel>, #tpu.dimension_semantics<arbitrary>], iteration_bounds = array<i64: 1, 1>, scalar_prefetch = 0 : i64, scratch_operands = 2 : i64, tpu.core_type = #tpu.core_type<tc>, window_params = [{transform_indices = @transform_0, window_bounds = array<i64: 512, 128>}, {pipeline_mode = #tpu.pipeline_mode<synchronous>, transform_indices = @transform_1, window_bounds = array<i64: 128, 128>}, {transform_indices = @transform_2, window_bounds = array<i64: 16, 128>}]} {
    %c0_i32 = arith.constant 0 : i32
    %0 = arith.cmpi eq, %arg1, %c0_i32 : i32
    %1 = arith.extui %0 : i1 to i32
    %c0_i32_0 = arith.constant 0 : i32
    %2 = arith.cmpi ne, %1, %c0_i32_0 : i32
    scf.if %2 {
      %cst_16 = arith.constant 0.000000e+00 : f32
      %19 = vector.broadcast %cst_16 : f32 to vector<8x128xf32>
      %c0_17 = arith.constant 0 : index
      %c0_18 = arith.constant 0 : index
      %20 = vector.load %arg5[%c0_17, %c0_18] : memref<8x128xf32, #tpu.memory_space<vmem>>, vector<8x128xf32>
      tpu.vector_store %arg5[%c0_17, %c0_18], %19 {strides = array<i32>} : memref<8x128xf32, #tpu.memory_space<vmem>>, vector<8x128xf32>,
      %cst_19 = arith.constant 0.000000e+00 : f32
      %21 = vector.broadcast %cst_19 : f32 to vector<8x128xf32>
      %c0_20 = arith.constant 0 : index
      %c0_21 = arith.constant 0 : index
      %22 = vector.load %arg6[%c0_20, %c0_21] : memref<8x128xf32, #tpu.memory_space<vmem>>, vector<8x128xf32>
      tpu.vector_store %arg6[%c0_20, %c0_21], %21 {strides = array<i32>} : memref<8x128xf32, #tpu.memory_space<vmem>>, vector<8x128xf32>,
    } else {
    }
    %c0 = arith.constant 0 : index
    %c0_1 = arith.constant 0 : index
    %3 = vector.load %arg2[%c0, %c0_1] : memref<512x128xbf16, #tpu.memory_space<vmem>>, vector<512x128xbf16>
    %c0_2 = arith.constant 0 : index
    %c0_3 = arith.constant 0 : index
    %4 = vector.load %arg3[%c0_2, %c0_3] : memref<128x128xbf16, #tpu.memory_space<vmem>>, vector<128x128xbf16>
    %cst = arith.constant dense<0.000000e+00> : vector<512x128xf32>
    %5 = tpu.matmul %3, %4, %cst {dimension_numbers = #tpu.dot_dimension_numbers<[1], [0], [0], [1], [0, 0, 1, 1], [], []>} : vector<512x128xbf16>, vector<128x128xbf16>, vector<512x128xf32> -> vector<512x128xf32>
    %6 = vector.shape_cast %5 : vector<512x128xf32> to vector<64x8x128xf32>
    %c0_4 = arith.constant 0 : index
    %c0_5 = arith.constant 0 : index
    %7 = vector.load %arg5[%c0_4, %c0_5] : memref<8x128xf32, #tpu.memory_space<vmem>>, vector<8x128xf32>
    %cst_6 = arith.constant dense<0.000000e+00> : vector<8x128xf32>
    %8 = vector.multi_reduction <add>, %6, %cst_6 [0] : vector<64x8x128xf32> to vector<8x128xf32>
    %9 = arith.addf %7, %8 : vector<8x128xf32>
    %c0_7 = arith.constant 0 : index
    %c0_8 = arith.constant 0 : index
    %10 = vector.load %arg5[%c0_7, %c0_8] : memref<8x128xf32, #tpu.memory_space<vmem>>, vector<8x128xf32>
    tpu.vector_store %arg5[%c0_7, %c0_8], %9 {strides = array<i32>} : memref<8x128xf32, #tpu.memory_space<vmem>>, vector<8x128xf32>,
    %c0_9 = arith.constant 0 : index
    %c0_10 = arith.constant 0 : index
    %11 = vector.load %arg6[%c0_9, %c0_10] : memref<8x128xf32, #tpu.memory_space<vmem>>, vector<8x128xf32>
    %12 = arith.mulf %6, %6 : vector<64x8x128xf32>
    %cst_11 = arith.constant dense<0.000000e+00> : vector<8x128xf32>
    %13 = vector.multi_reduction <add>, %12, %cst_11 [0] : vector<64x8x128xf32> to vector<8x128xf32>
    %14 = arith.addf %11, %13 : vector<8x128xf32>
    %c0_12 = arith.constant 0 : index
    %c0_13 = arith.constant 0 : index
    %15 = vector.load %arg6[%c0_12, %c0_13] : memref<8x128xf32, #tpu.memory_space<vmem>>, vector<8x128xf32>
    tpu.vector_store %arg6[%c0_12, %c0_13], %14 {strides = array<i32>} : memref<8x128xf32, #tpu.memory_space<vmem>>, vector<8x128xf32>,
    %c0_i32_14 = arith.constant 0 : i32
    %16 = arith.cmpi eq, %arg1, %c0_i32_14 : i32
    %17 = arith.extui %16 : i1 to i32
    %c0_i32_15 = arith.constant 0 : i32
    %18 = arith.cmpi ne, %17, %c0_i32_15 : i32
    scf.if %18 {
      %c0_16 = arith.constant 0 : index
      %c0_17 = arith.constant 0 : index
      %19 = vector.load %arg5[%c0_16, %c0_17] : memref<8x128xf32, #tpu.memory_space<vmem>>, vector<8x128xf32>
      %c0_18 = arith.constant 0 : index
      %c0_19 = arith.constant 0 : index
      %20 = vector.load %arg4[%c0_18, %c0_19] : memref<16x128xf32, #tpu.memory_space<vmem>>, vector<8x128xf32>
      tpu.vector_store %arg4[%c0_18, %c0_19], %19 {strides = array<i32>} : memref<16x128xf32, #tpu.memory_space<vmem>>, vector<8x128xf32>,
      %c0_20 = arith.constant 0 : index
      %c0_21 = arith.constant 0 : index
      %21 = vector.load %arg6[%c0_20, %c0_21] : memref<8x128xf32, #tpu.memory_space<vmem>>, vector<8x128xf32>
      %c8 = arith.constant 8 : index
      %c0_22 = arith.constant 0 : index
      %22 = vector.load %arg4[%c8, %c0_22] : memref<16x128xf32, #tpu.memory_space<vmem>>, vector<8x128xf32>
      tpu.vector_store %arg4[%c8, %c0_22], %21 {strides = array<i32>} : memref<16x128xf32, #tpu.memory_space<vmem>>, vector<8x128xf32>,
    } else {
    }
    return
  }
  func.func @transform_0(%arg0: i32, %arg1: i32) -> (i32, i32) {
    %c1_i32 = arith.constant 1 : i32
    %0 = arith.muli %arg0, %c1_i32 : i32
    %1 = arith.addi %0, %arg1 : i32
    %c0_i32 = arith.constant 0 : i32
    %c0_i32_0 = arith.constant 0 : i32
    return %1, %c0_i32 : i32, i32
  }
  func.func @transform_1(%arg0: i32, %arg1: i32) -> (i32, i32) {
    %c0_i32 = arith.constant 0 : i32
    %c0_i32_0 = arith.constant 0 : i32
    %c0_i32_1 = arith.constant 0 : i32
    return %c0_i32, %c0_i32_0 : i32, i32
  }
  func.func @transform_2(%arg0: i32, %arg1: i32) -> (i32, i32) {
    %c0_i32 = arith.constant 0 : i32
    %c0_i32_0 = arith.constant 0 : i32
    return %arg0, %c0_i32 : i32, i32
  }
}

module attributes {stable_mosaic.version = 11 : i64} {
  func.func @apply_recompute_kernel(%arg0: i32, %arg1: memref<512x128xbf16, #tpu.memory_space<vmem>>, %arg2: memref<128x128xbf16, #tpu.memory_space<vmem>>, %arg3: memref<8x128xf32, #tpu.memory_space<vmem>>, %arg4: memref<512x128xf32, #tpu.memory_space<vmem>>) attributes {dimension_semantics = [#tpu.dimension_semantics<parallel>], iteration_bounds = array<i64: 1>, scalar_prefetch = 0 : i64, scratch_operands = 0 : i64, tpu.core_type = #tpu.core_type<tc>, window_params = [{transform_indices = @transform_0, window_bounds = array<i64: 512, 128>}, {pipeline_mode = #tpu.pipeline_mode<synchronous>, transform_indices = @transform_1, window_bounds = array<i64: 128, 128>}, {pipeline_mode = #tpu.pipeline_mode<synchronous>, transform_indices = @transform_2, window_bounds = array<i64: 8, 128>}, {transform_indices = @transform_3, window_bounds = array<i64: 512, 128>}]} {
    %c0 = arith.constant 0 : index
    %c0_0 = arith.constant 0 : index
    %0 = vector.load %arg1[%c0, %c0_0] : memref<512x128xbf16, #tpu.memory_space<vmem>>, vector<512x128xbf16>
    %c0_1 = arith.constant 0 : index
    %c0_2 = arith.constant 0 : index
    %1 = vector.load %arg2[%c0_1, %c0_2] : memref<128x128xbf16, #tpu.memory_space<vmem>>, vector<128x128xbf16>
    %cst = arith.constant dense<0.000000e+00> : vector<512x128xf32>
    %2 = tpu.matmul %0, %1, %cst {dimension_numbers = #tpu.dot_dimension_numbers<[1], [0], [0], [1], [0, 0, 1, 1], [], []>} : vector<512x128xbf16>, vector<128x128xbf16>, vector<512x128xf32> -> vector<512x128xf32>
    %c0_3 = arith.constant 0 : index
    %c0_4 = arith.constant 0 : index
    %3 = vector.load %arg3[%c0_3, %c0_4] : memref<8x128xf32, #tpu.memory_space<vmem>>, vector<1x128xf32>
    %4 = vector.broadcast %3 : vector<1x128xf32> to vector<512x128xf32>
    %5 = arith.mulf %2, %4 : vector<512x128xf32>
    %c1 = arith.constant 1 : index
    %c0_5 = arith.constant 0 : index
    %6 = vector.load %arg3[%c1, %c0_5] : memref<8x128xf32, #tpu.memory_space<vmem>>, vector<1x128xf32>
    %7 = vector.broadcast %6 : vector<1x128xf32> to vector<512x128xf32>
    %8 = arith.addf %5, %7 : vector<512x128xf32>
    %cst_6 = arith.constant 0.000000e+00 : f32
    %9 = vector.broadcast %cst_6 : f32 to vector<512x128xf32>
    %10 = arith.maximumf %8, %9 : vector<512x128xf32>
    %c0_7 = arith.constant 0 : index
    %c0_8 = arith.constant 0 : index
    %11 = vector.load %arg4[%c0_7, %c0_8] : memref<512x128xf32, #tpu.memory_space<vmem>>, vector<512x128xf32>
    tpu.vector_store %arg4[%c0_7, %c0_8], %10 {strides = array<i32>} : memref<512x128xf32, #tpu.memory_space<vmem>>, vector<512x128xf32>,
    return
  }
  func.func @transform_0(%arg0: i32) -> (i32, i32) {
    %c0_i32 = arith.constant 0 : i32
    %c0_i32_0 = arith.constant 0 : i32
    return %arg0, %c0_i32 : i32, i32
  }
  func.func @transform_1(%arg0: i32) -> (i32, i32) {
    %c0_i32 = arith.constant 0 : i32
    %c0_i32_0 = arith.constant 0 : i32
    %c0_i32_1 = arith.constant 0 : i32
    return %c0_i32, %c0_i32_0 : i32, i32
  }
  func.func @transform_2(%arg0: i32) -> (i32, i32) {
    %c0_i32 = arith.constant 0 : i32
    %c0_i32_0 = arith.constant 0 : i32
    %c0_i32_1 = arith.constant 0 : i32
    return %c0_i32, %c0_i32_0 : i32, i32
  }
  func.func @transform_3(%arg0: i32) -> (i32, i32) {
    %c0_i32 = arith.constant 0 : i32
    %c0_i32_0 = arith.constant 0 : i32
    return %arg0, %c0_i32 : i32, i32
  }
}

</mosaic_0001>

<llo_original>
// kernel: conv_block_forward.5
$region0: #{conv_block_forward.5}
  #allocation0 [shape = 'u32[]', space=smem, size = 0x4, offset = 0x4, fixed_abs, tag = 'smem constant byte address 0x4 - core index']
  #allocation1 [shape = 'u32[72,128]{1,0:T(1,128)}', space=vmem, size = 0x9000, scoped, tag = 'internal scratch']
  #allocation2 [shape = 'f32[8,128]{1,0:T(8,128)}', space=vmem, size = 0x1000, scoped, tag = 'scratch operand']
  #allocation3 [shape = 'f32[8,128]{1,0:T(8,128)}', space=vmem, size = 0x1000, scoped, tag = 'scratch operand']
  #allocation4 [shape = 'u32[2048]{0}', space=vmem, size = 0x2000, scoped, tag = 'scoped memory for conv_block_forward.5']
  #allocation5 [shape = 'u32[2048]{0}', space=vmem, size = 0x2000, scoped, tag = 'scoped memory for conv_block_forward.5']
  #allocation6 [shape = 'u32[2048]{0}', space=vmem, size = 0x2000, scoped, tag = 'scoped memory for conv_block_forward.5']
  #allocation7 [shape = 'u32[2048]{0}', space=vmem, size = 0x2000, scoped, tag = 'scoped memory for conv_block_forward.5']
  #allocation8 [shape = 'u32[2048]{0}', space=vmem, size = 0x2000, scoped, tag = 'scoped memory for conv_block_forward.5']
  %s0 = inlined_call_operand.vmem [shape: bf16[128,128], index: 0, kind: input, shape index: {}]
  %s1 = inlined_call_operand.vmem [shape: bf16[512,36], index: 1, kind: input, shape index: {}]
  %s2 = inlined_call_operand.<no memory space> [shape: bf16[], index: 2, kind: input, shape index: {}]
  %s3 = inlined_call_operand.vmem [shape: f32[16,128], index: 3, kind: output, shape index: {}]
  %s4 = sld [smem:[#allocation0]]
  $region26: #{conv_block_forward.5} parent=0
    _
  %s6 = ssub.s32 1, %s4
  %s7 = scalar_select 0, %s6, %s4
  %v8 = vstv %s2
  %v9 = vunpack.i.l.bf16 %v8
  %v11 = vunpack.i.h.bf16 %v8
  $region1: #{conv_block_forward.5} parent=0
    #allocation9 [shape = 'u8[131072]{0}', space=vmem, size = 0x20000, dematerialized = true, scoped, tag = 'FusionAdapter Buffer %fusion.3 = bf16[512,128]{1,0:T(8,128)(2,1)} fusion(%param_1.4, %param_2.2), kind=kLoop, calls=%fused_computation.3.clone, metadata={op_name="jit(conv_block_forward)/jit(_pad)/pad" stack_frame_id=17}']
    // Predicated region
    $region2: #{conv_block_forward.5} parent=1 // pred_check
      _
    $region3: #{conv_block_forward.5} parent=1 // pred_check_branch
      %14 = sbr.rel (0) target = $region5
    $region4: #{conv_block_forward.5} parent=1 // pred_region
      %s15 = sadd.s32 0, 0
      %s16 = smul.u32 64, %s15
      %p17 = scmp.lt.s32.totalorder %s16, 63
      %s18 = scalar_select %p17, %s16, 63
      %s19 = smul.addr %s18, 4
      %s20 = scalar_lea.vmem %s1, %s19
      %s21 = sadd.s32 0, 0
      %s22 = smul.u32 64, %s21
    $region5: #{conv_block_forward.5} parent=1 // pred_fallthru
      _
    // Predicated region
    $region6: #{conv_block_forward.5} parent=1 // pred_check
      _
    $region7: #{conv_block_forward.5} parent=1 // pred_check_branch
      %24 = sbr.rel (0) target = $region9
    $region8: #{conv_block_forward.5} parent=1 // pred_region
      _
    $region9: #{conv_block_forward.5} parent=1 // pred_fallthru
      _
    %s25 = sadd.s32 0, 0
    %s26 = smul.u32 64, %s25
    %p27 = scmp.lt.s32.totalorder %s26, 63
    %s28 = scalar_select %p27, %s26, 63
    %s29 = smul.addr %s28, 4
    %s30 = scalar_lea.vmem %s1, %s29
    %s31 = sadd.s32 0, 0
    %s32 = smul.u32 64, %s31
    %p33 = scmp.lt.s32.totalorder %s32, 63
    %s34 = scalar_select %p33, %s32, 63
    %s35 = smul.addr %s34, 4
    %s36 = scalar_lea.vmem %s1, %s35
    %s37 = sadd.s32 0, 0
    %s38 = smul.u32 64, %s37
    %s40 = sor.u32 255, 127
    %s41 = sand.u32 %s40, 85
    %s42 = sshrl.u32 %s41, 1
    %s43 = sor.u32 %s41, %s42
    %s44 = sand.u32 51, %s43
    %s45 = sshrl.u32 %s44, 2
    %s46 = sor.u32 %s44, %s45
    %s47 = sand.u32 15, %s46
    %v48 = vld [vmem:[%s36] sm:%s47]
    %v49 = vunpack.c.l.bf16 %v48
    %v50 = vunpack.c.h.bf16 %v48
    %v51 = vlaneseq
    %v52 = vand.u32 %v51, 127
    %vm54 = vcmp.lt.s32.totalorder %v52, 36
    %v55 = vsel %vm54, %v49, %v9
    %v56 = vpack.c.bf16 0.0, %v55
    %s58 = ssub.s32 16, 1
    %59 = vst [vmem:[#allocation9] sm:%s58] %v56
    %s60 = scalar_lea.vmem %s36, 4
    %s62 = sor.u32 255, 127
    %s63 = sand.u32 %s62, 85
    %s64 = sshrl.u32 %s63, 1
    %s65 = sor.u32 %s63, %s64
    %s66 = sand.u32 51, %s65
    %s67 = sshrl.u32 %s66, 2
    %s68 = sor.u32 %s66, %s67
    %s69 = sand.u32 15, %s68
    %v70 = vld [vmem:[%s60] sm:%s69]
    %v71 = vunpack.c.l.bf16 %v70
    %v72 = vunpack.c.h.bf16 %v70
    %v73 = vlaneseq
    %v74 = vand.u32 %v73, 127
    %vm76 = vcmp.lt.s32.totalorder %v74, 36
    %v77 = vsel %vm76, %v71, %v9
    %s78 = scalar_lea.vmem [#allocation9], 4
    %v79 = vpack.c.bf16 0.0, %v77
    %s81 = ssub.s32 16, 1
    %82 = vst [vmem:[%s78] sm:%s81] %v79
    %s83 = scalar_lea.vmem %s36, 8
    %s85 = sor.u32 255, 127
    %s86 = sand.u32 %s85, 85
    %s87 = sshrl.u32 %s86, 1
    %s88 = sor.u32 %s86, %s87
    %s89 = sand.u32 51, %s88
    %s90 = sshrl.u32 %s89, 2
    %s91 = sor.u32 %s89, %s90
    %s92 = sand.u32 15, %s91
    %v93 = vld [vmem:[%s83] sm:%s92]
    %v94 = vunpack.c.l.bf16 %v93
    %v95 = vunpack.c.h.bf16 %v93
    %v96 = vlaneseq
    %v97 = vand.u32 %v96, 127
    %vm99 = vcmp.lt.s32.totalorder %v97, 36
    %v100 = vsel %vm99, %v94, %v9
    %s101 = scalar_lea.vmem [#allocation9], 8
    %v102 = vpack.c.bf16 0.0, %v100
    %s104 = ssub.s32 16, 1
    %105 = vst [vmem:[%s101] sm:%s104] %v102
    %s106 = scalar_lea.vmem %s36, 12
    %s108 = sor.u32 255, 127
    %s109 = sand.u32 %s108, 85
    %s110 = sshrl.u32 %s109, 1
    %s111 = sor.u32 %s109, %s110
    %s112 = sand.u32 51, %s111
    %s113 = sshrl.u32 %s112, 2
    %s114 = sor.u32 %s112, %s113
    %s115 = sand.u32 15, %s114
    %v116 = vld [vmem:[%s106] sm:%s115]
    %v117 = vunpack.c.l.bf16 %v116
    %v118 = vunpack.c.h.bf16 %v116
    %v119 = vlaneseq
    %v120 = vand.u32 %v119, 127
    %vm122 = vcmp.lt.s32.totalorder %v120, 36
    %v123 = vsel %vm122, %v117, %v9
    %s124 = scalar_lea.vmem [#allocation9], 12
    %v125 = vpack.c.bf16 0.0, %v123
    %s127 = ssub.s32 16, 1
    %128 = vst [vmem:[%s124] sm:%s127] %v125
    %s129 = scalar_lea.vmem %s36, 16
    %s131 = sor.u32 255, 127
    %s132 = sand.u32 %s131, 85
    %s133 = sshrl.u32 %s132, 1
    %s134 = sor.u32 %s132, %s133
    %s135 = sand.u32 51, %s134
    %s136 = sshrl.u32 %s135, 2
    %s137 = sor.u32 %s135, %s136
    %s138 = sand.u32 15, %s137
    %v139 = vld [vmem:[%s129] sm:%s138]
    %v140 = vunpack.c.l.bf16 %v139
    %v141 = vunpack.c.h.bf16 %v139
    %v142 = vlaneseq
    %v143 = vand.u32 %v142, 127
    %vm145 = vcmp.lt.s32.totalorder %v143, 36
    %v146 = vsel %vm145, %v140, %v9
    %s147 = scalar_lea.vmem [#allocation9], 16
    %v148 = vpack.c.bf16 0.0, %v146
    %s150 = ssub.s32 16, 1
    %151 = vst [vmem:[%s147] sm:%s150] %v148
    %s152 = scalar_lea.vmem %s36, 20
    %s154 = sor.u32 255, 127
    %s155 = sand.u32 %s154, 85
    %s156 = sshrl.u32 %s155, 1
    %s157 = sor.u32 %s155, %s156
    %s158 = sand.u32 51, %s157
    %s159 = sshrl.u32 %s158, 2
    %s160 = sor.u32 %s158, %s159
    %s161 = sand.u32 15, %s160
    %v162 = vld [vmem:[%s152] sm:%s161]
    %v163 = vunpack.c.l.bf16 %v162
    %v164 = vunpack.c.h.bf16 %v162
    %v165 = vlaneseq
    %v166 = vand.u32 %v165, 127
    %vm168 = vcmp.lt.s32.totalorder %v166, 36
    %v169 = vsel %vm168, %v163, %v9
    %s170 = scalar_lea.vmem [#allocation9], 20
    %v171 = vpack.c.bf16 0.0, %v169
    %s173 = ssub.s32 16, 1
    %174 = vst [vmem:[%s170] sm:%s173] %v171
    %s175 = scalar_lea.vmem %s36, 24
    %s177 = sor.u32 255, 127
    %s178 = sand.u32 %s177, 85
    %s179 = sshrl.u32 %s178, 1
    %s180 = sor.u32 %s178, %s179
    %s181 = sand.u32 51, %s180
    %s182 = sshrl.u32 %s181, 2
    %s183 = sor.u32 %s181, %s182
    %s184 = sand.u32 15, %s183
    %v185 = vld [vmem:[%s175] sm:%s184]
    %v186 = vunpack.c.l.bf16 %v185
    %v187 = vunpack.c.h.bf16 %v185
    %v188 = vlaneseq
    %v189 = vand.u32 %v188, 127
    %vm191 = vcmp.lt.s32.totalorder %v189, 36
    %v192 = vsel %vm191, %v186, %v9
    %s193 = scalar_lea.vmem [#allocation9], 24
    %v194 = vpack.c.bf16 0.0, %v192
    %s196 = ssub.s32 16, 1
    %197 = vst [vmem:[%s193] sm:%s196] %v194
    %s198 = scalar_lea.vmem %s36, 28
    %s200 = sor.u32 255, 127
    %s201 = sand.u32 %s200, 85
    %s202 = sshrl.u32 %s201, 1
    %s203 = sor.u32 %s201, %s202
    %s204 = sand.u32 51, %s203
    %s205 = sshrl.u32 %s204, 2
    %s206 = sor.u32 %s204, %s205
    %s207 = sand.u32 15, %s206
    %v208 = vld [vmem:[%s198] sm:%s207]
    %v209 = vunpack.c.l.bf16 %v208
    %v210 = vunpack.c.h.bf16 %v208
    %v211 = vlaneseq
    %v212 = vand.u32 %v211, 127
    %vm214 = vcmp.lt.s32.totalorder %v212, 36
    %v215 = vsel %vm214, %v209, %v9
    %s216 = scalar_lea.vmem [#allocation9], 28
    %v217 = vpack.c.bf16 0.0, %v215
    %s219 = ssub.s32 16, 1
    %220 = vst [vmem:[%s216] sm:%s219] %v217
    %s221 = scalar_lea.vmem %s36, 32
    %s223 = sor.u32 255, 127
    %s224 = sand.u32 %s223, 85
    %s225 = sshrl.u32 %s224, 1
    %s226 = sor.u32 %s224, %s225
    %s227 = sand.u32 51, %s226
    %s228 = sshrl.u32 %s227, 2
    %s229 = sor.u32 %s227, %s228
    %s230 = sand.u32 15, %s229
    %v231 = vld [vmem:[%s221] sm:%s230]
    %v232 = vunpack.c.l.bf16 %v231
    %v233 = vunpack.c.h.bf16 %v231
    %v234 = vlaneseq
    %v235 = vand.u32 %v234, 127
    %vm237 = vcmp.lt.s32.totalorder %v235, 36
    %v238 = vsel %vm237, %v232, %v9
    %s239 = scalar_lea.vmem [#allocation9], 32
    %v240 = vpack.c.bf16 0.0, %v238
    %s242 = ssub.s32 16, 1
    %243 = vst [vmem:[%s239] sm:%s242] %v240
    %s244 = scalar_lea.vmem %s36, 36
    %s246 = sor.u32 255, 127
    %s247 = sand.u32 %s246, 85
    %s248 = sshrl.u32 %s247, 1
    %s249 = sor.u32 %s247, %s248
    %s250 = sand.u32 51, %s249
    %s251 = sshrl.u32 %s250, 2
    %s252 = sor.u32 %s250, %s251
    %s253 = sand.u32 15, %s252
    %v254 = vld [vmem:[%s244] sm:%s253]
    %v255 = vunpack.c.l.bf16 %v254
    %v256 = vunpack.c.h.bf16 %v254
    %v257 = vlaneseq
    %v258 = vand.u32 %v257, 127
    %vm260 = vcmp.lt.s32.totalorder %v258, 36
    %v261 = vsel %vm260, %v255, %v9
    %s262 = scalar_lea.vmem [#allocation9], 36
    %v263 = vpack.c.bf16 0.0, %v261
    %s265 = ssub.s32 16, 1
    %266 = vst [vmem:[%s262] sm:%s265] %v263
    %s267 = scalar_lea.vmem %s36, 40
    %s269 = sor.u32 255, 127
    %s270 = sand.u32 %s269, 85
    %s271 = sshrl.u32 %s270, 1
    %s272 = sor.u32 %s270, %s271
    %s273 = sand.u32 51, %s272
    %s274 = sshrl.u32 %s273, 2
    %s275 = sor.u32 %s273, %s274
    %s276 = sand.u32 15, %s275
    %v277 = vld [vmem:[%s267] sm:%s276]
    %v278 = vunpack.c.l.bf16 %v277
    %v279 = vunpack.c.h.bf16 %v277
    %v280 = vlaneseq
    %v281 = vand.u32 %v280, 127
    %vm283 = vcmp.lt.s32.totalorder %v281, 36
    %v284 = vsel %vm283, %v278, %v9
    %s285 = scalar_lea.vmem [#allocation9], 40
    %v286 = vpack.c.bf16 0.0, %v284
    %s288 = ssub.s32 16, 1
    %289 = vst [vmem:[%s285] sm:%s288] %v286
    %s290 = scalar_lea.vmem %s36, 44
    %s292 = sor.u32 255, 127
    %s293 = sand.u32 %s292, 85
    %s294 = sshrl.u32 %s293, 1
    %s295 = sor.u32 %s293, %s294
    %s296 = sand.u32 51, %s295
    %s297 = sshrl.u32 %s296, 2
    %s298 = sor.u32 %s296, %s297
    %s299 = sand.u32 15, %s298
    %v300 = vld [vmem:[%s290] sm:%s299]
    %v301 = vunpack.c.l.bf16 %v300
    %v302 = vunpack.c.h.bf16 %v300
    %v303 = vlaneseq
    %v304 = vand.u32 %v303, 127
    %vm306 = vcmp.lt.s32.totalorder %v304, 36
    %v307 = vsel %vm306, %v301, %v9
    %s308 = scalar_lea.vmem [#allocation9], 44
    %v309 = vpack.c.bf16 0.0, %v307
    %s311 = ssub.s32 16, 1
    %312 = vst [vmem:[%s308] sm:%s311] %v309
    %s313 = scalar_lea.vmem %s36, 48
    %s315 = sor.u32 255, 127
    %s316 = sand.u32 %s315, 85
    %s317 = sshrl.u32 %s316, 1
    %s318 = sor.u32 %s316, %s317
    %s319 = sand.u32 51, %s318
    %s320 = sshrl.u32 %s319, 2
    %s321 = sor.u32 %s319, %s320
    %s322 = sand.u32 15, %s321
    %v323 = vld [vmem:[%s313] sm:%s322]
    %v324 = vunpack.c.l.bf16 %v323
    %v325 = vunpack.c.h.bf16 %v323
    %v326 = vlaneseq
    %v327 = vand.u32 %v326, 127
    %vm329 = vcmp.lt.s32.totalorder %v327, 36
    %v330 = vsel %vm329, %v324, %v9
    %s331 = scalar_lea.vmem [#allocation9], 48
    %v332 = vpack.c.bf16 0.0, %v330
    %s334 = ssub.s32 16, 1
    %335 = vst [vmem:[%s331] sm:%s334] %v332
    %s336 = scalar_lea.vmem %s36, 52
    %s338 = sor.u32 255, 127
    %s339 = sand.u32 %s338, 85
    %s340 = sshrl.u32 %s339, 1
    %s341 = sor.u32 %s339, %s340
    %s342 = sand.u32 51, %s341
    %s343 = sshrl.u32 %s342, 2
    %s344 = sor.u32 %s342, %s343
    %s345 = sand.u32 15, %s344
    %v346 = vld [vmem:[%s336] sm:%s345]
    %v347 = vunpack.c.l.bf16 %v346
    %v348 = vunpack.c.h.bf16 %v346
    %v349 = vlaneseq
    %v350 = vand.u32 %v349, 127
    %vm352 = vcmp.lt.s32.totalorder %v350, 36
    %v353 = vsel %vm352, %v347, %v9
    %s354 = scalar_lea.vmem [#allocation9], 52
    %v355 = vpack.c.bf16 0.0, %v353
    %s357 = ssub.s32 16, 1
    %358 = vst [vmem:[%s354] sm:%s357] %v355
    %s359 = scalar_lea.vmem %s36, 56
    %s361 = sor.u32 255, 127
    %s362 = sand.u32 %s361, 85
    %s363 = sshrl.u32 %s362, 1
    %s364 = sor.u32 %s362, %s363
    %s365 = sand.u32 51, %s364
    %s366 = sshrl.u32 %s365, 2
    %s367 = sor.u32 %s365, %s366
    %s368 = sand.u32 15, %s367
    %v369 = vld [vmem:[%s359] sm:%s368]
    %v370 = vunpack.c.l.bf16 %v369
    %v371 = vunpack.c.h.bf16 %v369
    %v372 = vlaneseq
    %v373 = vand.u32 %v372, 127
    %vm375 = vcmp.lt.s32.totalorder %v373, 36
    %v376 = vsel %vm375, %v370, %v9
    %s377 = scalar_lea.vmem [#allocation9], 56
    %v378 = vpack.c.bf16 0.0, %v376
    %s380 = ssub.s32 16, 1
    %381 = vst [vmem:[%s377] sm:%s380] %v378
    %s382 = scalar_lea.vmem %s36, 60
    %s384 = sor.u32 255, 127
    %s385 = sand.u32 %s384, 85
    %s386 = sshrl.u32 %s385, 1
    %s387 = sor.u32 %s385, %s386
    %s388 = sand.u32 51, %s387
    %s389 = sshrl.u32 %s388, 2
    %s390 = sor.u32 %s388, %s389
    %s391 = sand.u32 15, %s390
    %v392 = vld [vmem:[%s382] sm:%s391]
    %v393 = vunpack.c.l.bf16 %v392
    %v394 = vunpack.c.h.bf16 %v392
    %v395 = vlaneseq
    %v396 = vand.u32 %v395, 127
    %vm398 = vcmp.lt.s32.totalorder %v396, 36
    %v399 = vsel %vm398, %v393, %v9
    %s400 = scalar_lea.vmem [#allocation9], 60
    %v401 = vpack.c.bf16 0.0, %v399
    %s403 = ssub.s32 16, 1
    %404 = vst [vmem:[%s400] sm:%s403] %v401
    %s405 = scalar_lea.vmem %s36, 64
    %s407 = sor.u32 255, 127
    %s408 = sand.u32 %s407, 85
    %s409 = sshrl.u32 %s408, 1
    %s410 = sor.u32 %s408, %s409
    %s411 = sand.u32 51, %s410
    %s412 = sshrl.u32 %s411, 2
    %s413 = sor.u32 %s411, %s412
    %s414 = sand.u32 15, %s413
    %v415 = vld [vmem:[%s405] sm:%s414]
    %v416 = vunpack.c.l.bf16 %v415
    %v417 = vunpack.c.h.bf16 %v415
    %v418 = vlaneseq
    %v419 = vand.u32 %v418, 127
    %vm421 = vcmp.lt.s32.totalorder %v419, 36
    %v422 = vsel %vm421, %v416, %v9
    %s423 = scalar_lea.vmem [#allocation9], 64
    %v424 = vpack.c.bf16 0.0, %v422
    %s426 = ssub.s32 16, 1
    %427 = vst [vmem:[%s423] sm:%s426] %v424
    %s428 = scalar_lea.vmem %s36, 68
    %s430 = sor.u32 255, 127
    %s431 = sand.u32 %s430, 85
    %s432 = sshrl.u32 %s431, 1
    %s433 = sor.u32 %s431, %s432
    %s434 = sand.u32 51, %s433
    %s435 = sshrl.u32 %s434, 2
    %s436 = sor.u32 %s434, %s435
    %s437 = sand.u32 15, %s436
    %v438 = vld [vmem:[%s428] sm:%s437]
    %v439 = vunpack.c.l.bf16 %v438
    %v440 = vunpack.c.h.bf16 %v438
    %v441 = vlaneseq
    %v442 = vand.u32 %v441, 127
    %vm444 = vcmp.lt.s32.totalorder %v442, 36
    %v445 = vsel %vm444, %v439, %v9
    %s446 = scalar_lea.vmem [#allocation9], 68
    %v447 = vpack.c.bf16 0.0, %v445
    %s449 = ssub.s32 16, 1
    %450 = vst [vmem:[%s446] sm:%s449] %v447
    %s451 = scalar_lea.vmem %s36, 72
    %s453 = sor.u32 255, 127
    %s454 = sand.u32 %s453, 85
    %s455 = sshrl.u32 %s454, 1
    %s456 = sor.u32 %s454, %s455
    %s457 = sand.u32 51, %s456
    %s458 = sshrl.u32 %s457, 2
    %s459 = sor.u32 %s457, %s458
    %s460 = sand.u32 15, %s459
    %v461 = vld [vmem:[%s451] sm:%s460]
    %v462 = vunpack.c.l.bf16 %v461
    %v463 = vunpack.c.h.bf16 %v461
    %v464 = vlaneseq
    %v465 = vand.u32 %v464, 127
    %vm467 = vcmp.lt.s32.totalorder %v465, 36
    %v468 = vsel %vm467, %v462, %v9
    %s469 = scalar_lea.vmem [#allocation9], 72
    %v470 = vpack.c.bf16 0.0, %v468
    %s472 = ssub.s32 16, 1
    %473 = vst [vmem:[%s469] sm:%s472] %v470
    %s474 = scalar_lea.vmem %s36, 76
    %s476 = sor.u32 255, 127
    %s477 = sand.u32 %s476, 85
    %s478 = sshrl.u32 %s477, 1
    %s479 = sor.u32 %s477, %s478
    %s480 = sand.u32 51, %s479
    %s481 = sshrl.u32 %s480, 2
    %s482 = sor.u32 %s480, %s481
    %s483 = sand.u32 15, %s482
    %v484 = vld [vmem:[%s474] sm:%s483]
    %v485 = vunpack.c.l.bf16 %v484
    %v486 = vunpack.c.h.bf16 %v484
    %v487 = vlaneseq
    %v488 = vand.u32 %v487, 127
    %vm490 = vcmp.lt.s32.totalorder %v488, 36
    %v491 = vsel %vm490, %v485, %v9
    %s492 = scalar_lea.vmem [#allocation9], 76
    %v493 = vpack.c.bf16 0.0, %v491
    %s495 = ssub.s32 16, 1
    %496 = vst [vmem:[%s492] sm:%s495] %v493
    %s497 = scalar_lea.vmem %s36, 80
    %s499 = sor.u32 255, 127
    %s500 = sand.u32 %s499, 85
    %s501 = sshrl.u32 %s500, 1
    %s502 = sor.u32 %s500, %s501
    %s503 = sand.u32 51, %s502
    %s504 = sshrl.u32 %s503, 2
    %s505 = sor.u32 %s503, %s504
    %s506 = sand.u32 15, %s505
    %v507 = vld [vmem:[%s497] sm:%s506]
    %v508 = vunpack.c.l.bf16 %v507
    %v509 = vunpack.c.h.bf16 %v507
    %v510 = vlaneseq
    %v511 = vand.u32 %v510, 127
    %vm513 = vcmp.lt.s32.totalorder %v511, 36
    %v514 = vsel %vm513, %v508, %v9
    %s515 = scalar_lea.vmem [#allocation9], 80
    %v516 = vpack.c.bf16 0.0, %v514
    %s518 = ssub.s32 16, 1
    %519 = vst [vmem:[%s515] sm:%s518] %v516
    %s520 = scalar_lea.vmem %s36, 84
    %s522 = sor.u32 255, 127
    %s523 = sand.u32 %s522, 85
    %s524 = sshrl.u32 %s523, 1
    %s525 = sor.u32 %s523, %s524
    %s526 = sand.u32 51, %s525
    %s527 = sshrl.u32 %s526, 2
    %s528 = sor.u32 %s526, %s527
    %s529 = sand.u32 15, %s528
    %v530 = vld [vmem:[%s520] sm:%s529]
    %v531 = vunpack.c.l.bf16 %v530
    %v532 = vunpack.c.h.bf16 %v530
    %v533 = vlaneseq
    %v534 = vand.u32 %v533, 127
    %vm536 = vcmp.lt.s32.totalorder %v534, 36
    %v537 = vsel %vm536, %v531, %v9
    %s538 = scalar_lea.vmem [#allocation9], 84
    %v539 = vpack.c.bf16 0.0, %v537
    %s541 = ssub.s32 16, 1
    %542 = vst [vmem:[%s538] sm:%s541] %v539
    %s543 = scalar_lea.vmem %s36, 88
    %s545 = sor.u32 255, 127
    %s546 = sand.u32 %s545, 85
    %s547 = sshrl.u32 %s546, 1
    %s548 = sor.u32 %s546, %s547
    %s549 = sand.u32 51, %s548
    %s550 = sshrl.u32 %s549, 2
    %s551 = sor.u32 %s549, %s550
    %s552 = sand.u32 15, %s551
    %v553 = vld [vmem:[%s543] sm:%s552]
    %v554 = vunpack.c.l.bf16 %v553
    %v555 = vunpack.c.h.bf16 %v553
    %v556 = vlaneseq
    %v557 = vand.u32 %v556, 127
    %vm559 = vcmp.lt.s32.totalorder %v557, 36
    %v560 = vsel %vm559, %v554, %v9
    %s561 = scalar_lea.vmem [#allocation9], 88
    %v562 = vpack.c.bf16 0.0, %v560
    %s564 = ssub.s32 16, 1
    %565 = vst [vmem:[%s561] sm:%s564] %v562
    %s566 = scalar_lea.vmem %s36, 92
    %s568 = sor.u32 255, 127
    %s569 = sand.u32 %s568, 85
    %s570 = sshrl.u32 %s569, 1
    %s571 = sor.u32 %s569, %s570
    %s572 = sand.u32 51, %s571
    %s573 = sshrl.u32 %s572, 2
    %s574 = sor.u32 %s572, %s573
    %s575 = sand.u32 15, %s574
    %v576 = vld [vmem:[%s566] sm:%s575]
    %v577 = vunpack.c.l.bf16 %v576
    %v578 = vunpack.c.h.bf16 %v576
    %v579 = vlaneseq
    %v580 = vand.u32 %v579, 127
    %vm582 = vcmp.lt.s32.totalorder %v580, 36
    %v583 = vsel %vm582, %v577, %v9
    %s584 = scalar_lea.vmem [#allocation9], 92
    %v585 = vpack.c.bf16 0.0, %v583
    %s587 = ssub.s32 16, 1
    %588 = vst [vmem:[%s584] sm:%s587] %v585
    %s589 = scalar_lea.vmem %s36, 96
    %s591 = sor.u32 255, 127
    %s592 = sand.u32 %s591, 85
    %s593 = sshrl.u32 %s592, 1
    %s594 = sor.u32 %s592, %s593
    %s595 = sand.u32 51, %s594
    %s596 = sshrl.u32 %s595, 2
    %s597 = sor.u32 %s595, %s596
    %s598 = sand.u32 15, %s597
    %v599 = vld [vmem:[%s589] sm:%s598]
    %v600 = vunpack.c.l.bf16 %v599
    %v601 = vunpack.c.h.bf16 %v599
    %v602 = vlaneseq
    %v603 = vand.u32 %v602, 127
    %vm605 = vcmp.lt.s32.totalorder %v603, 36
    %v606 = vsel %vm605, %v600, %v9
    %s607 = scalar_lea.vmem [#allocation9], 96
    %v608 = vpack.c.bf16 0.0, %v606
    %s610 = ssub.s32 16, 1
    %611 = vst [vmem:[%s607] sm:%s610] %v608
    %s612 = scalar_lea.vmem %s36, 100
    %s614 = sor.u32 255, 127
    %s615 = sand.u32 %s614, 85
    %s616 = sshrl.u32 %s615, 1
    %s617 = sor.u32 %s615, %s616
    %s618 = sand.u32 51, %s617
    %s619 = sshrl.u32 %s618, 2
    %s620 = sor.u32 %s618, %s619
    %s621 = sand.u32 15, %s620
    %v622 = vld [vmem:[%s612] sm:%s621]
    %v623 = vunpack.c.l.bf16 %v622
    %v624 = vunpack.c.h.bf16 %v622
    %v625 = vlaneseq
    %v626 = vand.u32 %v625, 127
    %vm628 = vcmp.lt.s32.totalorder %v626, 36
    %v629 = vsel %vm628, %v623, %v9
    %s630 = scalar_lea.vmem [#allocation9], 100
    %v631 = vpack.c.bf16 0.0, %v629
    %s633 = ssub.s32 16, 1
    %634 = vst [vmem:[%s630] sm:%s633] %v631
    %s635 = scalar_lea.vmem %s36, 104
    %s637 = sor.u32 255, 127
    %s638 = sand.u32 %s637, 85
    %s639 = sshrl.u32 %s638, 1
    %s640 = sor.u32 %s638, %s639
    %s641 = sand.u32 51, %s640
    %s642 = sshrl.u32 %s641, 2
    %s643 = sor.u32 %s641, %s642
    %s644 = sand.u32 15, %s643
    %v645 = vld [vmem:[%s635] sm:%s644]
    %v646 = vunpack.c.l.bf16 %v645
    %v647 = vunpack.c.h.bf16 %v645
    %v648 = vlaneseq
    %v649 = vand.u32 %v648, 127
    %vm651 = vcmp.lt.s32.totalorder %v649, 36
    %v652 = vsel %vm651, %v646, %v9
    %s653 = scalar_lea.vmem [#allocation9], 104
    %v654 = vpack.c.bf16 0.0, %v652
    %s656 = ssub.s32 16, 1
    %657 = vst [vmem:[%s653] sm:%s656] %v654
    %s658 = scalar_lea.vmem %s36, 108
    %s660 = sor.u32 255, 127
    %s661 = sand.u32 %s660, 85
    %s662 = sshrl.u32 %s661, 1
    %s663 = sor.u32 %s661, %s662
    %s664 = sand.u32 51, %s663
    %s665 = sshrl.u32 %s664, 2
    %s666 = sor.u32 %s664, %s665
    %s667 = sand.u32 15, %s666
    %v668 = vld [vmem:[%s658] sm:%s667]
    %v669 = vunpack.c.l.bf16 %v668
    %v670 = vunpack.c.h.bf16 %v668
    %v671 = vlaneseq
    %v672 = vand.u32 %v671, 127
    %vm674 = vcmp.lt.s32.totalorder %v672, 36
    %v675 = vsel %vm674, %v669, %v9
    %s676 = scalar_lea.vmem [#allocation9], 108
    %v677 = vpack.c.bf16 0.0, %v675
    %s679 = ssub.s32 16, 1
    %680 = vst [vmem:[%s676] sm:%s679] %v677
    %s681 = scalar_lea.vmem %s36, 112
    %s683 = sor.u32 255, 127
    %s684 = sand.u32 %s683, 85
    %s685 = sshrl.u32 %s684, 1
    %s686 = sor.u32 %s684, %s685
    %s687 = sand.u32 51, %s686
    %s688 = sshrl.u32 %s687, 2
    %s689 = sor.u32 %s687, %s688
    %s690 = sand.u32 15, %s689
    %v691 = vld [vmem:[%s681] sm:%s690]
    %v692 = vunpack.c.l.bf16 %v691
    %v693 = vunpack.c.h.bf16 %v691
    %v694 = vlaneseq
    %v695 = vand.u32 %v694, 127
    %vm697 = vcmp.lt.s32.totalorder %v695, 36
    %v698 = vsel %vm697, %v692, %v9
    %s699 = scalar_lea.vmem [#allocation9], 112
    %v700 = vpack.c.bf16 0.0, %v698
    %s702 = ssub.s32 16, 1
    %703 = vst [vmem:[%s699] sm:%s702] %v700
    %s704 = scalar_lea.vmem %s36, 116
    %s706 = sor.u32 255, 127
    %s707 = sand.u32 %s706, 85
    %s708 = sshrl.u32 %s707, 1
    %s709 = sor.u32 %s707, %s708
    %s710 = sand.u32 51, %s709
    %s711 = sshrl.u32 %s710, 2
    %s712 = sor.u32 %s710, %s711
    %s713 = sand.u32 15, %s712
    %v714 = vld [vmem:[%s704] sm:%s713]
    %v715 = vunpack.c.l.bf16 %v714
    %v716 = vunpack.c.h.bf16 %v714
    %v717 = vlaneseq
    %v718 = vand.u32 %v717, 127
    %vm720 = vcmp.lt.s32.totalorder %v718, 36
    %v721 = vsel %vm720, %v715, %v9
    %s722 = scalar_lea.vmem [#allocation9], 116
    %v723 = vpack.c.bf16 0.0, %v721
    %s725 = ssub.s32 16, 1
    %726 = vst [vmem:[%s722] sm:%s725] %v723
    %s727 = scalar_lea.vmem %s36, 120
    %s729 = sor.u32 255, 127
    %s730 = sand.u32 %s729, 85
    %s731 = sshrl.u32 %s730, 1
    %s732 = sor.u32 %s730, %s731
    %s733 = sand.u32 51, %s732
    %s734 = sshrl.u32 %s733, 2
    %s735 = sor.u32 %s733, %s734
    %s736 = sand.u32 15, %s735
    %v737 = vld [vmem:[%s727] sm:%s736]
    %v738 = vunpack.c.l.bf16 %v737
    %v739 = vunpack.c.h.bf16 %v737
    %v740 = vlaneseq
    %v741 = vand.u32 %v740, 127
    %vm743 = vcmp.lt.s32.totalorder %v741, 36
    %v744 = vsel %vm743, %v738, %v9
    %s745 = scalar_lea.vmem [#allocation9], 120
    %v746 = vpack.c.bf16 0.0, %v744
    %s748 = ssub.s32 16, 1
    %749 = vst [vmem:[%s745] sm:%s748] %v746
    %s750 = scalar_lea.vmem %s36, 124
    %s752 = sor.u32 255, 127
    %s753 = sand.u32 %s752, 85
    %s754 = sshrl.u32 %s753, 1
    %s755 = sor.u32 %s753, %s754
    %s756 = sand.u32 51, %s755
    %s757 = sshrl.u32 %s756, 2
    %s758 = sor.u32 %s756, %s757
    %s759 = sand.u32 15, %s758
    %v760 = vld [vmem:[%s750] sm:%s759]
    %v761 = vunpack.c.l.bf16 %v760
    %v762 = vunpack.c.h.bf16 %v760
    %v763 = vlaneseq
    %v764 = vand.u32 %v763, 127
    %vm766 = vcmp.lt.s32.totalorder %v764, 36
    %v767 = vsel %vm766, %v761, %v9
    %s768 = scalar_lea.vmem [#allocation9], 124
    %v769 = vpack.c.bf16 0.0, %v767
    %s771 = ssub.s32 16, 1
    %772 = vst [vmem:[%s768] sm:%s771] %v769
    %s773 = scalar_lea.vmem %s36, 128
    %s775 = sor.u32 255, 127
    %s776 = sand.u32 %s775, 85
    %s777 = sshrl.u32 %s776, 1
    %s778 = sor.u32 %s776, %s777
    %s779 = sand.u32 51, %s778
    %s780 = sshrl.u32 %s779, 2
    %s781 = sor.u32 %s779, %s780
    %s782 = sand.u32 15, %s781
    %v783 = vld [vmem:[%s773] sm:%s782]
    %v784 = vunpack.c.l.bf16 %v783
    %v785 = vunpack.c.h.bf16 %v783
    %v786 = vlaneseq
    %v787 = vand.u32 %v786, 127
    %vm789 = vcmp.lt.s32.totalorder %v787, 36
    %v790 = vsel %vm789, %v784, %v9
    %s791 = scalar_lea.vmem [#allocation9], 128
    %v792 = vpack.c.bf16 0.0, %v790
    %s794 = ssub.s32 16, 1
    %795 = vst [vmem:[%s791] sm:%s794] %v792
    %s796 = scalar_lea.vmem %s36, 132
    %s798 = sor.u32 255, 127
    %s799 = sand.u32 %s798, 85
    %s800 = sshrl.u32 %s799, 1
    %s801 = sor.u32 %s799, %s800
    %s802 = sand.u32 51, %s801
    %s803 = sshrl.u32 %s802, 2
    %s804 = sor.u32 %s802, %s803
    %s805 = sand.u32 15, %s804
    %v806 = vld [vmem:[%s796] sm:%s805]
    %v807 = vunpack.c.l.bf16 %v806
    %v808 = vunpack.c.h.bf16 %v806
    %v809 = vlaneseq
    %v810 = vand.u32 %v809, 127
    %vm812 = vcmp.lt.s32.totalorder %v810, 36
    %v813 = vsel %vm812, %v807, %v9
    %s814 = scalar_lea.vmem [#allocation9], 132
    %v815 = vpack.c.bf16 0.0, %v813
    %s817 = ssub.s32 16, 1
    %818 = vst [vmem:[%s814] sm:%s817] %v815
    %s819 = scalar_lea.vmem %s36, 136
    %s821 = sor.u32 255, 127
    %s822 = sand.u32 %s821, 85
    %s823 = sshrl.u32 %s822, 1
    %s824 = sor.u32 %s822, %s823
    %s825 = sand.u32 51, %s824
    %s826 = sshrl.u32 %s825, 2
    %s827 = sor.u32 %s825, %s826
    %s828 = sand.u32 15, %s827
    %v829 = vld [vmem:[%s819] sm:%s828]
    %v830 = vunpack.c.l.bf16 %v829
    %v831 = vunpack.c.h.bf16 %v829
    %v832 = vlaneseq
    %v833 = vand.u32 %v832, 127
    %vm835 = vcmp.lt.s32.totalorder %v833, 36
    %v836 = vsel %vm835, %v830, %v9
    %s837 = scalar_lea.vmem [#allocation9], 136
    %v838 = vpack.c.bf16 0.0, %v836
    %s840 = ssub.s32 16, 1
    %841 = vst [vmem:[%s837] sm:%s840] %v838
    %s842 = scalar_lea.vmem %s36, 140
    %s844 = sor.u32 255, 127
    %s845 = sand.u32 %s844, 85
    %s846 = sshrl.u32 %s845, 1
    %s847 = sor.u32 %s845, %s846
    %s848 = sand.u32 51, %s847
    %s849 = sshrl.u32 %s848, 2
    %s850 = sor.u32 %s848, %s849
    %s851 = sand.u32 15, %s850
    %v852 = vld [vmem:[%s842] sm:%s851]
    %v853 = vunpack.c.l.bf16 %v852
    %v854 = vunpack.c.h.bf16 %v852
    %v855 = vlaneseq
    %v856 = vand.u32 %v855, 127
    %vm858 = vcmp.lt.s32.totalorder %v856, 36
    %v859 = vsel %vm858, %v853, %v9
    %s860 = scalar_lea.vmem [#allocation9], 140
    %v861 = vpack.c.bf16 0.0, %v859
    %s863 = ssub.s32 16, 1
    %864 = vst [vmem:[%s860] sm:%s863] %v861
    %s865 = scalar_lea.vmem %s36, 144
    %s867 = sor.u32 255, 127
    %s868 = sand.u32 %s867, 85
    %s869 = sshrl.u32 %s868, 1
    %s870 = sor.u32 %s868, %s869
    %s871 = sand.u32 51, %s870
    %s872 = sshrl.u32 %s871, 2
    %s873 = sor.u32 %s871, %s872
    %s874 = sand.u32 15, %s873
    %v875 = vld [vmem:[%s865] sm:%s874]
    %v876 = vunpack.c.l.bf16 %v875
    %v877 = vunpack.c.h.bf16 %v875
    %v878 = vlaneseq
    %v879 = vand.u32 %v878, 127
    %vm881 = vcmp.lt.s32.totalorder %v879, 36
    %v882 = vsel %vm881, %v876, %v9
    %s883 = scalar_lea.vmem [#allocation9], 144
    %v884 = vpack.c.bf16 0.0, %v882
    %s886 = ssub.s32 16, 1
    %887 = vst [vmem:[%s883] sm:%s886] %v884
    %s888 = scalar_lea.vmem %s36, 148
    %s890 = sor.u32 255, 127
    %s891 = sand.u32 %s890, 85
    %s892 = sshrl.u32 %s891, 1
    %s893 = sor.u32 %s891, %s892
    %s894 = sand.u32 51, %s893
    %s895 = sshrl.u32 %s894, 2
    %s896 = sor.u32 %s894, %s895
    %s897 = sand.u32 15, %s896
    %v898 = vld [vmem:[%s888] sm:%s897]
    %v899 = vunpack.c.l.bf16 %v898
    %v900 = vunpack.c.h.bf16 %v898
    %v901 = vlaneseq
    %v902 = vand.u32 %v901, 127
    %vm904 = vcmp.lt.s32.totalorder %v902, 36
    %v905 = vsel %vm904, %v899, %v9
    %s906 = scalar_lea.vmem [#allocation9], 148
    %v907 = vpack.c.bf16 0.0, %v905
    %s909 = ssub.s32 16, 1
    %910 = vst [vmem:[%s906] sm:%s909] %v907
    %s911 = scalar_lea.vmem %s36, 152
    %s913 = sor.u32 255, 127
    %s914 = sand.u32 %s913, 85
    %s915 = sshrl.u32 %s914, 1
    %s916 = sor.u32 %s914, %s915
    %s917 = sand.u32 51, %s916
    %s918 = sshrl.u32 %s917, 2
    %s919 = sor.u32 %s917, %s918
    %s920 = sand.u32 15, %s919
    %v921 = vld [vmem:[%s911] sm:%s920]
    %v922 = vunpack.c.l.bf16 %v921
    %v923 = vunpack.c.h.bf16 %v921
    %v924 = vlaneseq
    %v925 = vand.u32 %v924, 127
    %vm927 = vcmp.lt.s32.totalorder %v925, 36
    %v928 = vsel %vm927, %v922, %v9
    %s929 = scalar_lea.vmem [#allocation9], 152
    %v930 = vpack.c.bf16 0.0, %v928
    %s932 = ssub.s32 16, 1
    %933 = vst [vmem:[%s929] sm:%s932] %v930
    %s934 = scalar_lea.vmem %s36, 156
    %s936 = sor.u32 255, 127
    %s937 = sand.u32 %s936, 85
    %s938 = sshrl.u32 %s937, 1
    %s939 = sor.u32 %s937, %s938
    %s940 = sand.u32 51, %s939
    %s941 = sshrl.u32 %s940, 2
    %s942 = sor.u32 %s940, %s941
    %s943 = sand.u32 15, %s942
    %v944 = vld [vmem:[%s934] sm:%s943]
    %v945 = vunpack.c.l.bf16 %v944
    %v946 = vunpack.c.h.bf16 %v944
    %v947 = vlaneseq
    %v948 = vand.u32 %v947, 127
    %vm950 = vcmp.lt.s32.totalorder %v948, 36
    %v951 = vsel %vm950, %v945, %v9
    %s952 = scalar_lea.vmem [#allocation9], 156
    %v953 = vpack.c.bf16 0.0, %v951
    %s955 = ssub.s32 16, 1
    %956 = vst [vmem:[%s952] sm:%s955] %v953
    %s957 = scalar_lea.vmem %s36, 160
    %s959 = sor.u32 255, 127
    %s960 = sand.u32 %s959, 85
    %s961 = sshrl.u32 %s960, 1
    %s962 = sor.u32 %s960, %s961
    %s963 = sand.u32 51, %s962
    %s964 = sshrl.u32 %s963, 2
    %s965 = sor.u32 %s963, %s964
    %s966 = sand.u32 15, %s965
    %v967 = vld [vmem:[%s957] sm:%s966]
    %v968 = vunpack.c.l.bf16 %v967
    %v969 = vunpack.c.h.bf16 %v967
    %v970 = vlaneseq
    %v971 = vand.u32 %v970, 127
    %vm973 = vcmp.lt.s32.totalorder %v971, 36
    %v974 = vsel %vm973, %v968, %v9
    %s975 = scalar_lea.vmem [#allocation9], 160
    %v976 = vpack.c.bf16 0.0, %v974
    %s978 = ssub.s32 16, 1
    %979 = vst [vmem:[%s975] sm:%s978] %v976
    %s980 = scalar_lea.vmem %s36, 164
    %s982 = sor.u32 255, 127
    %s983 = sand.u32 %s982, 85
    %s984 = sshrl.u32 %s983, 1
    %s985 = sor.u32 %s983, %s984
    %s986 = sand.u32 51, %s985
    %s987 = sshrl.u32 %s986, 2
    %s988 = sor.u32 %s986, %s987
    %s989 = sand.u32 15, %s988
    %v990 = vld [vmem:[%s980] sm:%s989]
    %v991 = vunpack.c.l.bf16 %v990
    %v992 = vunpack.c.h.bf16 %v990
    %v993 = vlaneseq
    %v994 = vand.u32 %v993, 127
    %vm996 = vcmp.lt.s32.totalorder %v994, 36
    %v997 = vsel %vm996, %v991, %v9
    %s998 = scalar_lea.vmem [#allocation9], 164
    %v999 = vpack.c.bf16 0.0, %v997
    %s1001 = ssub.s32 16, 1
    %1002 = vst [vmem:[%s998] sm:%s1001] %v999
    %s1003 = scalar_lea.vmem %s36, 168
    %s1005 = sor.u32 255, 127
    %s1006 = sand.u32 %s1005, 85
    %s1007 = sshrl.u32 %s1006, 1
    %s1008 = sor.u32 %s1006, %s1007
    %s1009 = sand.u32 51, %s1008
    %s1010 = sshrl.u32 %s1009, 2
    %s1011 = sor.u32 %s1009, %s1010
    %s1012 = sand.u32 15, %s1011
    %v1013 = vld [vmem:[%s1003] sm:%s1012]
    %v1014 = vunpack.c.l.bf16 %v1013
    %v1015 = vunpack.c.h.bf16 %v1013
    %v1016 = vlaneseq
    %v1017 = vand.u32 %v1016, 127
    %vm1019 = vcmp.lt.s32.totalorder %v1017, 36
    %v1020 = vsel %vm1019, %v1014, %v9
    %s1021 = scalar_lea.vmem [#allocation9], 168
    %v1022 = vpack.c.bf16 0.0, %v1020
    %s1024 = ssub.s32 16, 1
    %1025 = vst [vmem:[%s1021] sm:%s1024] %v1022
    %s1026 = scalar_lea.vmem %s36, 172
    %s1028 = sor.u32 255, 127
    %s1029 = sand.u32 %s1028, 85
    %s1030 = sshrl.u32 %s1029, 1
    %s1031 = sor.u32 %s1029, %s1030
    %s1032 = sand.u32 51, %s1031
    %s1033 = sshrl.u32 %s1032, 2
    %s1034 = sor.u32 %s1032, %s1033
    %s1035 = sand.u32 15, %s1034
    %v1036 = vld [vmem:[%s1026] sm:%s1035]
    %v1037 = vunpack.c.l.bf16 %v1036
    %v1038 = vunpack.c.h.bf16 %v1036
    %v1039 = vlaneseq
    %v1040 = vand.u32 %v1039, 127
    %vm1042 = vcmp.lt.s32.totalorder %v1040, 36
    %v1043 = vsel %vm1042, %v1037, %v9
    %s1044 = scalar_lea.vmem [#allocation9], 172
    %v1045 = vpack.c.bf16 0.0, %v1043
    %s1047 = ssub.s32 16, 1
    %1048 = vst [vmem:[%s1044] sm:%s1047] %v1045
    %s1049 = scalar_lea.vmem %s36, 176
    %s1051 = sor.u32 255, 127
    %s1052 = sand.u32 %s1051, 85
    %s1053 = sshrl.u32 %s1052, 1
    %s1054 = sor.u32 %s1052, %s1053
    %s1055 = sand.u32 51, %s1054
    %s1056 = sshrl.u32 %s1055, 2
    %s1057 = sor.u32 %s1055, %s1056
    %s1058 = sand.u32 15, %s1057
    %v1059 = vld [vmem:[%s1049] sm:%s1058]
    %v1060 = vunpack.c.l.bf16 %v1059
    %v1061 = vunpack.c.h.bf16 %v1059
    %v1062 = vlaneseq
    %v1063 = vand.u32 %v1062, 127
    %vm1065 = vcmp.lt.s32.totalorder %v1063, 36
    %v1066 = vsel %vm1065, %v1060, %v9
    %s1067 = scalar_lea.vmem [#allocation9], 176
    %v1068 = vpack.c.bf16 0.0, %v1066
    %s1070 = ssub.s32 16, 1
    %1071 = vst [vmem:[%s1067] sm:%s1070] %v1068
    %s1072 = scalar_lea.vmem %s36, 180
    %s1074 = sor.u32 255, 127
    %s1075 = sand.u32 %s1074, 85
    %s1076 = sshrl.u32 %s1075, 1
    %s1077 = sor.u32 %s1075, %s1076
    %s1078 = sand.u32 51, %s1077
    %s1079 = sshrl.u32 %s1078, 2
    %s1080 = sor.u32 %s1078, %s1079
    %s1081 = sand.u32 15, %s1080
    %v1082 = vld [vmem:[%s1072] sm:%s1081]
    %v1083 = vunpack.c.l.bf16 %v1082
    %v1084 = vunpack.c.h.bf16 %v1082
    %v1085 = vlaneseq
    %v1086 = vand.u32 %v1085, 127
    %vm1088 = vcmp.lt.s32.totalorder %v1086, 36
    %v1089 = vsel %vm1088, %v1083, %v9
    %s1090 = scalar_lea.vmem [#allocation9], 180
    %v1091 = vpack.c.bf16 0.0, %v1089
    %s1093 = ssub.s32 16, 1
    %1094 = vst [vmem:[%s1090] sm:%s1093] %v1091
    %s1095 = scalar_lea.vmem %s36, 184
    %s1097 = sor.u32 255, 127
    %s1098 = sand.u32 %s1097, 85
    %s1099 = sshrl.u32 %s1098, 1
    %s1100 = sor.u32 %s1098, %s1099
    %s1101 = sand.u32 51, %s1100
    %s1102 = sshrl.u32 %s1101, 2
    %s1103 = sor.u32 %s1101, %s1102
    %s1104 = sand.u32 15, %s1103
    %v1105 = vld [vmem:[%s1095] sm:%s1104]
    %v1106 = vunpack.c.l.bf16 %v1105
    %v1107 = vunpack.c.h.bf16 %v1105
    %v1108 = vlaneseq
    %v1109 = vand.u32 %v1108, 127
    %vm1111 = vcmp.lt.s32.totalorder %v1109, 36
    %v1112 = vsel %vm1111, %v1106, %v9
    %s1113 = scalar_lea.vmem [#allocation9], 184
    %v1114 = vpack.c.bf16 0.0, %v1112
    %s1116 = ssub.s32 16, 1
    %1117 = vst [vmem:[%s1113] sm:%s1116] %v1114
    %s1118 = scalar_lea.vmem %s36, 188
    %s1120 = sor.u32 255, 127
    %s1121 = sand.u32 %s1120, 85
    %s1122 = sshrl.u32 %s1121, 1
    %s1123 = sor.u32 %s1121, %s1122
    %s1124 = sand.u32 51, %s1123
    %s1125 = sshrl.u32 %s1124, 2
    %s1126 = sor.u32 %s1124, %s1125
    %s1127 = sand.u32 15, %s1126
    %v1128 = vld [vmem:[%s1118] sm:%s1127]
    %v1129 = vunpack.c.l.bf16 %v1128
    %v1130 = vunpack.c.h.bf16 %v1128
    %v1131 = vlaneseq
    %v1132 = vand.u32 %v1131, 127
    %vm1134 = vcmp.lt.s32.totalorder %v1132, 36
    %v1135 = vsel %vm1134, %v1129, %v9
    %s1136 = scalar_lea.vmem [#allocation9], 188
    %v1137 = vpack.c.bf16 0.0, %v1135
    %s1139 = ssub.s32 16, 1
    %1140 = vst [vmem:[%s1136] sm:%s1139] %v1137
    %s1141 = scalar_lea.vmem %s36, 192
    %s1143 = sor.u32 255, 127
    %s1144 = sand.u32 %s1143, 85
    %s1145 = sshrl.u32 %s1144, 1
    %s1146 = sor.u32 %s1144, %s1145
    %s1147 = sand.u32 51, %s1146
    %s1148 = sshrl.u32 %s1147, 2
    %s1149 = sor.u32 %s1147, %s1148
    %s1150 = sand.u32 15, %s1149
    %v1151 = vld [vmem:[%s1141] sm:%s1150]
    %v1152 = vunpack.c.l.bf16 %v1151
    %v1153 = vunpack.c.h.bf16 %v1151
    %v1154 = vlaneseq
    %v1155 = vand.u32 %v1154, 127
    %vm1157 = vcmp.lt.s32.totalorder %v1155, 36
    %v1158 = vsel %vm1157, %v1152, %v9
    %s1159 = scalar_lea.vmem [#allocation9], 192
    %v1160 = vpack.c.bf16 0.0, %v1158
    %s1162 = ssub.s32 16, 1
    %1163 = vst [vmem:[%s1159] sm:%s1162] %v1160
    %s1164 = scalar_lea.vmem %s36, 196
    %s1166 = sor.u32 255, 127
    %s1167 = sand.u32 %s1166, 85
    %s1168 = sshrl.u32 %s1167, 1
    %s1169 = sor.u32 %s1167, %s1168
    %s1170 = sand.u32 51, %s1169
    %s1171 = sshrl.u32 %s1170, 2
    %s1172 = sor.u32 %s1170, %s1171
    %s1173 = sand.u32 15, %s1172
    %v1174 = vld [vmem:[%s1164] sm:%s1173]
    %v1175 = vunpack.c.l.bf16 %v1174
    %v1176 = vunpack.c.h.bf16 %v1174
    %v1177 = vlaneseq
    %v1178 = vand.u32 %v1177, 127
    %vm1180 = vcmp.lt.s32.totalorder %v1178, 36
    %v1181 = vsel %vm1180, %v1175, %v9
    %s1182 = scalar_lea.vmem [#allocation9], 196
    %v1183 = vpack.c.bf16 0.0, %v1181
    %s1185 = ssub.s32 16, 1
    %1186 = vst [vmem:[%s1182] sm:%s1185] %v1183
    %s1187 = scalar_lea.vmem %s36, 200
    %s1189 = sor.u32 255, 127
    %s1190 = sand.u32 %s1189, 85
    %s1191 = sshrl.u32 %s1190, 1
    %s1192 = sor.u32 %s1190, %s1191
    %s1193 = sand.u32 51, %s1192
    %s1194 = sshrl.u32 %s1193, 2
    %s1195 = sor.u32 %s1193, %s1194
    %s1196 = sand.u32 15, %s1195
    %v1197 = vld [vmem:[%s1187] sm:%s1196]
    %v1198 = vunpack.c.l.bf16 %v1197
    %v1199 = vunpack.c.h.bf16 %v1197
    %v1200 = vlaneseq
    %v1201 = vand.u32 %v1200, 127
    %vm1203 = vcmp.lt.s32.totalorder %v1201, 36
    %v1204 = vsel %vm1203, %v1198, %v9
    %s1205 = scalar_lea.vmem [#allocation9], 200
    %v1206 = vpack.c.bf16 0.0, %v1204
    %s1208 = ssub.s32 16, 1
    %1209 = vst [vmem:[%s1205] sm:%s1208] %v1206
    %s1210 = scalar_lea.vmem %s36, 204
    %s1212 = sor.u32 255, 127
    %s1213 = sand.u32 %s1212, 85
    %s1214 = sshrl.u32 %s1213, 1
    %s1215 = sor.u32 %s1213, %s1214
    %s1216 = sand.u32 51, %s1215
    %s1217 = sshrl.u32 %s1216, 2
    %s1218 = sor.u32 %s1216, %s1217
    %s1219 = sand.u32 15, %s1218
    %v1220 = vld [vmem:[%s1210] sm:%s1219]
    %v1221 = vunpack.c.l.bf16 %v1220
    %v1222 = vunpack.c.h.bf16 %v1220
    %v1223 = vlaneseq
    %v1224 = vand.u32 %v1223, 127
    %vm1226 = vcmp.lt.s32.totalorder %v1224, 36
    %v1227 = vsel %vm1226, %v1221, %v9
    %s1228 = scalar_lea.vmem [#allocation9], 204
    %v1229 = vpack.c.bf16 0.0, %v1227
    %s1231 = ssub.s32 16, 1
    %1232 = vst [vmem:[%s1228] sm:%s1231] %v1229
    %s1233 = scalar_lea.vmem %s36, 208
    %s1235 = sor.u32 255, 127
    %s1236 = sand.u32 %s1235, 85
    %s1237 = sshrl.u32 %s1236, 1
    %s1238 = sor.u32 %s1236, %s1237
    %s1239 = sand.u32 51, %s1238
    %s1240 = sshrl.u32 %s1239, 2
    %s1241 = sor.u32 %s1239, %s1240
    %s1242 = sand.u32 15, %s1241
    %v1243 = vld [vmem:[%s1233] sm:%s1242]
    %v1244 = vunpack.c.l.bf16 %v1243
    %v1245 = vunpack.c.h.bf16 %v1243
    %v1246 = vlaneseq
    %v1247 = vand.u32 %v1246, 127
    %vm1249 = vcmp.lt.s32.totalorder %v1247, 36
    %v1250 = vsel %vm1249, %v1244, %v9
    %s1251 = scalar_lea.vmem [#allocation9], 208
    %v1252 = vpack.c.bf16 0.0, %v1250
    %s1254 = ssub.s32 16, 1
    %1255 = vst [vmem:[%s1251] sm:%s1254] %v1252
    %s1256 = scalar_lea.vmem %s36, 212
    %s1258 = sor.u32 255, 127
    %s1259 = sand.u32 %s1258, 85
    %s1260 = sshrl.u32 %s1259, 1
    %s1261 = sor.u32 %s1259, %s1260
    %s1262 = sand.u32 51, %s1261
    %s1263 = sshrl.u32 %s1262, 2
    %s1264 = sor.u32 %s1262, %s1263
    %s1265 = sand.u32 15, %s1264
    %v1266 = vld [vmem:[%s1256] sm:%s1265]
    %v1267 = vunpack.c.l.bf16 %v1266
    %v1268 = vunpack.c.h.bf16 %v1266
    %v1269 = vlaneseq
    %v1270 = vand.u32 %v1269, 127
    %vm1272 = vcmp.lt.s32.totalorder %v1270, 36
    %v1273 = vsel %vm1272, %v1267, %v9
    %s1274 = scalar_lea.vmem [#allocation9], 212
    %v1275 = vpack.c.bf16 0.0, %v1273
    %s1277 = ssub.s32 16, 1
    %1278 = vst [vmem:[%s1274] sm:%s1277] %v1275
    %s1279 = scalar_lea.vmem %s36, 216
    %s1281 = sor.u32 255, 127
    %s1282 = sand.u32 %s1281, 85
    %s1283 = sshrl.u32 %s1282, 1
    %s1284 = sor.u32 %s1282, %s1283
    %s1285 = sand.u32 51, %s1284
    %s1286 = sshrl.u32 %s1285, 2
    %s1287 = sor.u32 %s1285, %s1286
    %s1288 = sand.u32 15, %s1287
    %v1289 = vld [vmem:[%s1279] sm:%s1288]
    %v1290 = vunpack.c.l.bf16 %v1289
    %v1291 = vunpack.c.h.bf16 %v1289
    %v1292 = vlaneseq
    %v1293 = vand.u32 %v1292, 127
    %vm1295 = vcmp.lt.s32.totalorder %v1293, 36
    %v1296 = vsel %vm1295, %v1290, %v9
    %s1297 = scalar_lea.vmem [#allocation9], 216
    %v1298 = vpack.c.bf16 0.0, %v1296
    %s1300 = ssub.s32 16, 1
    %1301 = vst [vmem:[%s1297] sm:%s1300] %v1298
    %s1302 = scalar_lea.vmem %s36, 220
    %s1304 = sor.u32 255, 127
    %s1305 = sand.u32 %s1304, 85
    %s1306 = sshrl.u32 %s1305, 1
    %s1307 = sor.u32 %s1305, %s1306
    %s1308 = sand.u32 51, %s1307
    %s1309 = sshrl.u32 %s1308, 2
    %s1310 = sor.u32 %s1308, %s1309
    %s1311 = sand.u32 15, %s1310
    %v1312 = vld [vmem:[%s1302] sm:%s1311]
    %v1313 = vunpack.c.l.bf16 %v1312
    %v1314 = vunpack.c.h.bf16 %v1312
    %v1315 = vlaneseq
    %v1316 = vand.u32 %v1315, 127
    %vm1318 = vcmp.lt.s32.totalorder %v1316, 36
    %v1319 = vsel %vm1318, %v1313, %v9
    %s1320 = scalar_lea.vmem [#allocation9], 220
    %v1321 = vpack.c.bf16 0.0, %v1319
    %s1323 = ssub.s32 16, 1
    %1324 = vst [vmem:[%s1320] sm:%s1323] %v1321
    %s1325 = scalar_lea.vmem %s36, 224
    %s1327 = sor.u32 255, 127
    %s1328 = sand.u32 %s1327, 85
    %s1329 = sshrl.u32 %s1328, 1
    %s1330 = sor.u32 %s1328, %s1329
    %s1331 = sand.u32 51, %s1330
    %s1332 = sshrl.u32 %s1331, 2
    %s1333 = sor.u32 %s1331, %s1332
    %s1334 = sand.u32 15, %s1333
    %v1335 = vld [vmem:[%s1325] sm:%s1334]
    %v1336 = vunpack.c.l.bf16 %v1335
    %v1337 = vunpack.c.h.bf16 %v1335
    %v1338 = vlaneseq
    %v1339 = vand.u32 %v1338, 127
    %vm1341 = vcmp.lt.s32.totalorder %v1339, 36
    %v1342 = vsel %vm1341, %v1336, %v9
    %s1343 = scalar_lea.vmem [#allocation9], 224
    %v1344 = vpack.c.bf16 0.0, %v1342
    %s1346 = ssub.s32 16, 1
    %1347 = vst [vmem:[%s1343] sm:%s1346] %v1344
    %s1348 = scalar_lea.vmem %s36, 228
    %s1350 = sor.u32 255, 127
    %s1351 = sand.u32 %s1350, 85
    %s1352 = sshrl.u32 %s1351, 1
    %s1353 = sor.u32 %s1351, %s1352
    %s1354 = sand.u32 51, %s1353
    %s1355 = sshrl.u32 %s1354, 2
    %s1356 = sor.u32 %s1354, %s1355
    %s1357 = sand.u32 15, %s1356
    %v1358 = vld [vmem:[%s1348] sm:%s1357]
    %v1359 = vunpack.c.l.bf16 %v1358
    %v1360 = vunpack.c.h.bf16 %v1358
    %v1361 = vlaneseq
    %v1362 = vand.u32 %v1361, 127
    %vm1364 = vcmp.lt.s32.totalorder %v1362, 36
    %v1365 = vsel %vm1364, %v1359, %v9
    %s1366 = scalar_lea.vmem [#allocation9], 228
    %v1367 = vpack.c.bf16 0.0, %v1365
    %s1369 = ssub.s32 16, 1
    %1370 = vst [vmem:[%s1366] sm:%s1369] %v1367
    %s1371 = scalar_lea.vmem %s36, 232
    %s1373 = sor.u32 255, 127
    %s1374 = sand.u32 %s1373, 85
    %s1375 = sshrl.u32 %s1374, 1
    %s1376 = sor.u32 %s1374, %s1375
    %s1377 = sand.u32 51, %s1376
    %s1378 = sshrl.u32 %s1377, 2
    %s1379 = sor.u32 %s1377, %s1378
    %s1380 = sand.u32 15, %s1379
    %v1381 = vld [vmem:[%s1371] sm:%s1380]
    %v1382 = vunpack.c.l.bf16 %v1381
    %v1383 = vunpack.c.h.bf16 %v1381
    %v1384 = vlaneseq
    %v1385 = vand.u32 %v1384, 127
    %vm1387 = vcmp.lt.s32.totalorder %v1385, 36
    %v1388 = vsel %vm1387, %v1382, %v9
    %s1389 = scalar_lea.vmem [#allocation9], 232
    %v1390 = vpack.c.bf16 0.0, %v1388
    %s1392 = ssub.s32 16, 1
    %1393 = vst [vmem:[%s1389] sm:%s1392] %v1390
    %s1394 = scalar_lea.vmem %s36, 236
    %s1396 = sor.u32 255, 127
    %s1397 = sand.u32 %s1396, 85
    %s1398 = sshrl.u32 %s1397, 1
    %s1399 = sor.u32 %s1397, %s1398
    %s1400 = sand.u32 51, %s1399
    %s1401 = sshrl.u32 %s1400, 2
    %s1402 = sor.u32 %s1400, %s1401
    %s1403 = sand.u32 15, %s1402
    %v1404 = vld [vmem:[%s1394] sm:%s1403]
    %v1405 = vunpack.c.l.bf16 %v1404
    %v1406 = vunpack.c.h.bf16 %v1404
    %v1407 = vlaneseq
    %v1408 = vand.u32 %v1407, 127
    %vm1410 = vcmp.lt.s32.totalorder %v1408, 36
    %v1411 = vsel %vm1410, %v1405, %v9
    %s1412 = scalar_lea.vmem [#allocation9], 236
    %v1413 = vpack.c.bf16 0.0, %v1411
    %s1415 = ssub.s32 16, 1
    %1416 = vst [vmem:[%s1412] sm:%s1415] %v1413
    %s1417 = scalar_lea.vmem %s36, 240
    %s1419 = sor.u32 255, 127
    %s1420 = sand.u32 %s1419, 85
    %s1421 = sshrl.u32 %s1420, 1
    %s1422 = sor.u32 %s1420, %s1421
    %s1423 = sand.u32 51, %s1422
    %s1424 = sshrl.u32 %s1423, 2
    %s1425 = sor.u32 %s1423, %s1424
    %s1426 = sand.u32 15, %s1425
    %v1427 = vld [vmem:[%s1417] sm:%s1426]
    %v1428 = vunpack.c.l.bf16 %v1427
    %v1429 = vunpack.c.h.bf16 %v1427
    %v1430 = vlaneseq
    %v1431 = vand.u32 %v1430, 127
    %vm1433 = vcmp.lt.s32.totalorder %v1431, 36
    %v1434 = vsel %vm1433, %v1428, %v9
    %s1435 = scalar_lea.vmem [#allocation9], 240
    %v1436 = vpack.c.bf16 0.0, %v1434
    %s1438 = ssub.s32 16, 1
    %1439 = vst [vmem:[%s1435] sm:%s1438] %v1436
    %s1440 = scalar_lea.vmem %s36, 244
    %s1442 = sor.u32 255, 127
    %s1443 = sand.u32 %s1442, 85
    %s1444 = sshrl.u32 %s1443, 1
    %s1445 = sor.u32 %s1443, %s1444
    %s1446 = sand.u32 51, %s1445
    %s1447 = sshrl.u32 %s1446, 2
    %s1448 = sor.u32 %s1446, %s1447
    %s1449 = sand.u32 15, %s1448
    %v1450 = vld [vmem:[%s1440] sm:%s1449]
    %v1451 = vunpack.c.l.bf16 %v1450
    %v1452 = vunpack.c.h.bf16 %v1450
    %v1453 = vlaneseq
    %v1454 = vand.u32 %v1453, 127
    %vm1456 = vcmp.lt.s32.totalorder %v1454, 36
    %v1457 = vsel %vm1456, %v1451, %v9
    %s1458 = scalar_lea.vmem [#allocation9], 244
    %v1459 = vpack.c.bf16 0.0, %v1457
    %s1461 = ssub.s32 16, 1
    %1462 = vst [vmem:[%s1458] sm:%s1461] %v1459
    %s1463 = scalar_lea.vmem %s36, 248
    %s1465 = sor.u32 255, 127
    %s1466 = sand.u32 %s1465, 85
    %s1467 = sshrl.u32 %s1466, 1
    %s1468 = sor.u32 %s1466, %s1467
    %s1469 = sand.u32 51, %s1468
    %s1470 = sshrl.u32 %s1469, 2
    %s1471 = sor.u32 %s1469, %s1470
    %s1472 = sand.u32 15, %s1471
    %v1473 = vld [vmem:[%s1463] sm:%s1472]
    %v1474 = vunpack.c.l.bf16 %v1473
    %v1475 = vunpack.c.h.bf16 %v1473
    %v1476 = vlaneseq
    %v1477 = vand.u32 %v1476, 127
    %vm1479 = vcmp.lt.s32.totalorder %v1477, 36
    %v1480 = vsel %vm1479, %v1474, %v9
    %s1481 = scalar_lea.vmem [#allocation9], 248
    %v1482 = vpack.c.bf16 0.0, %v1480
    %s1484 = ssub.s32 16, 1
    %1485 = vst [vmem:[%s1481] sm:%s1484] %v1482
    %s1486 = scalar_lea.vmem %s36, 252
    %s1488 = sor.u32 255, 127
    %s1489 = sand.u32 %s1488, 85
    %s1490 = sshrl.u32 %s1489, 1
    %s1491 = sor.u32 %s1489, %s1490
    %s1492 = sand.u32 51, %s1491
    %s1493 = sshrl.u32 %s1492, 2
    %s1494 = sor.u32 %s1492, %s1493
    %s1495 = sand.u32 15, %s1494
    %v1496 = vld [vmem:[%s1486] sm:%s1495]
    %v1497 = vunpack.c.l.bf16 %v1496
    %v1498 = vunpack.c.h.bf16 %v1496
    %v1499 = vlaneseq
    %v1500 = vand.u32 %v1499, 127
    %vm1502 = vcmp.lt.s32.totalorder %v1500, 36
    %v1503 = vsel %vm1502, %v1497, %v9
    %s1504 = scalar_lea.vmem [#allocation9], 252
    %v1505 = vpack.c.bf16 0.0, %v1503
    %s1507 = ssub.s32 16, 1
    %1508 = vst [vmem:[%s1504] sm:%s1507] %v1505
    %p1509 = scmp.eq.s32.totalorder 0, 0
    // Predicated region
    $region10: #{conv_block_forward.5} parent=1 // pred_check
      %p1510 = pneg %p1509
    $region11: #{conv_block_forward.5} parent=1 // pred_check_branch
      %1512 = sbr.rel (%p1510) target = $region13
    $region12: #{conv_block_forward.5} parent=1 // pred_region
      %1513 = vst [vmem:[#allocation2] sm:$0xff] 0.0
      %1514 = vst [vmem:[#allocation3] sm:$0xff] 0.0
    $region13: #{conv_block_forward.5} parent=1 // pred_fallthru
      _
    %v1515 = vld [vmem:[#allocation9] sm:$0xf]
    %v1516 = vld [vmem:[#allocation9 + $0x4] sm:$0xf]
    %v1517 = vld [vmem:[#allocation9 + $0x8] sm:$0xf]
    %v1518 = vld [vmem:[#allocation9 + $0xc] sm:$0xf]
    %v1519 = vld [vmem:[#allocation9 + $0x10] sm:$0xf]
    %v1520 = vld [vmem:[#allocation9 + $0x14] sm:$0xf]
    %v1521 = vld [vmem:[#allocation9 + $0x18] sm:$0xf]
    %v1522 = vld [vmem:[#allocation9 + $0x1c] sm:$0xf]
    %v1523 = vld [vmem:[#allocation9 + $0x20] sm:$0xf]
    %v1524 = vld [vmem:[#allocation9 + $0x24] sm:$0xf]
    %v1525 = vld [vmem:[#allocation9 + $0x28] sm:$0xf]
    %v1526 = vld [vmem:[#allocation9 + $0x2c] sm:$0xf]
    %v1527 = vld [vmem:[#allocation9 + $0x30] sm:$0xf]
    %v1528 = vld [vmem:[#allocation9 + $0x34] sm:$0xf]
    %v1529 = vld [vmem:[#allocation9 + $0x38] sm:$0xf]
    %v1530 = vld [vmem:[#allocation9 + $0x3c] sm:$0xf]
    %v1531 = vld [vmem:[#allocation9 + $0x40] sm:$0xf]
    %v1532 = vld [vmem:[#allocation9 + $0x44] sm:$0xf]
    %v1533 = vld [vmem:[#allocation9 + $0x48] sm:$0xf]
    %v1534 = vld [vmem:[#allocation9 + $0x4c] sm:$0xf]
    %v1535 = vld [vmem:[#allocation9 + $0x50] sm:$0xf]
    %v1536 = vld [vmem:[#allocation9 + $0x54] sm:$0xf]
    %v1537 = vld [vmem:[#allocation9 + $0x58] sm:$0xf]
    %v1538 = vld [vmem:[#allocation9 + $0x5c] sm:$0xf]
    %v1539 = vld [vmem:[#allocation9 + $0x60] sm:$0xf]
    %v1540 = vld [vmem:[#allocation9 + $0x64] sm:$0xf]
    %v1541 = vld [vmem:[#allocation9 + $0x68] sm:$0xf]
    %v1542 = vld [vmem:[#allocation9 + $0x6c] sm:$0xf]
    %v1543 = vld [vmem:[#allocation9 + $0x70] sm:$0xf]
    %v1544 = vld [vmem:[#allocation9 + $0x74] sm:$0xf]
    %v1545 = vld [vmem:[#allocation9 + $0x78] sm:$0xf]
    %v1546 = vld [vmem:[#allocation9 + $0x7c] sm:$0xf]
    %v1547 = vld [vmem:[#allocation9 + $0x80] sm:$0xf]
    %v1548 = vld [vmem:[#allocation9 + $0x84] sm:$0xf]
    %v1549 = vld [vmem:[#allocation9 + $0x88] sm:$0xf]
    %v1550 = vld [vmem:[#allocation9 + $0x8c] sm:$0xf]
    %v1551 = vld [vmem:[#allocation9 + $0x90] sm:$0xf]
    %v1552 = vld [vmem:[#allocation9 + $0x94] sm:$0xf]
    %v1553 = vld [vmem:[#allocation9 + $0x98] sm:$0xf]
    %v1554 = vld [vmem:[#allocation9 + $0x9c] sm:$0xf]
    %v1555 = vld [vmem:[#allocation9 + $0xa0] sm:$0xf]
    %v1556 = vld [vmem:[#allocation9 + $0xa4] sm:$0xf]
    %v1557 = vld [vmem:[#allocation9 + $0xa8] sm:$0xf]
    %v1558 = vld [vmem:[#allocation9 + $0xac] sm:$0xf]
    %v1559 = vld [vmem:[#allocation9 + $0xb0] sm:$0xf]
    %v1560 = vld [vmem:[#allocation9 + $0xb4] sm:$0xf]
    %v1561 = vld [vmem:[#allocation9 + $0xb8] sm:$0xf]
    %v1562 = vld [vmem:[#allocation9 + $0xbc] sm:$0xf]
    %v1563 = vld [vmem:[#allocation9 + $0xc0] sm:$0xf]
    %v1564 = vld [vmem:[#allocation9 + $0xc4] sm:$0xf]
    %v1565 = vld [vmem:[#allocation9 + $0xc8] sm:$0xf]
    %v1566 = vld [vmem:[#allocation9 + $0xcc] sm:$0xf]
    %v1567 = vld [vmem:[#allocation9 + $0xd0] sm:$0xf]
    %v1568 = vld [vmem:[#allocation9 + $0xd4] sm:$0xf]
    %v1569 = vld [vmem:[#allocation9 + $0xd8] sm:$0xf]
    %v1570 = vld [vmem:[#allocation9 + $0xdc] sm:$0xf]
    %v1571 = vld [vmem:[#allocation9 + $0xe0] sm:$0xf]
    %v1572 = vld [vmem:[#allocation9 + $0xe4] sm:$0xf]
    %v1573 = vld [vmem:[#allocation9 + $0xe8] sm:$0xf]
    %v1574 = vld [vmem:[#allocation9 + $0xec] sm:$0xf]
    %v1575 = vld [vmem:[#allocation9 + $0xf0] sm:$0xf]
    %v1576 = vld [vmem:[#allocation9 + $0xf4] sm:$0xf]
    %v1577 = vld [vmem:[#allocation9 + $0xf8] sm:$0xf]
    %v1578 = vld [vmem:[#allocation9 + $0xfc] sm:$0xf]
    %v1579 = vld [vmem:[%s0] sm:$0xf]
    %v1580 = vld [vmem:[%s0 + $0x4] sm:$0xf]
    %v1581 = vld [vmem:[%s0 + $0x8] sm:$0xf]
    %v1582 = vld [vmem:[%s0 + $0xc] sm:$0xf]
    %v1583 = vld [vmem:[%s0 + $0x10] sm:$0xf]
    %v1584 = vld [vmem:[%s0 + $0x14] sm:$0xf]
    %v1585 = vld [vmem:[%s0 + $0x18] sm:$0xf]
    %v1586 = vld [vmem:[%s0 + $0x1c] sm:$0xf]
    %v1587 = vld [vmem:[%s0 + $0x20] sm:$0xf]
    %v1588 = vld [vmem:[%s0 + $0x24] sm:$0xf]
    %v1589 = vld [vmem:[%s0 + $0x28] sm:$0xf]
    %v1590 = vld [vmem:[%s0 + $0x2c] sm:$0xf]
    %v1591 = vld [vmem:[%s0 + $0x30] sm:$0xf]
    %v1592 = vld [vmem:[%s0 + $0x34] sm:$0xf]
    %v1593 = vld [vmem:[%s0 + $0x38] sm:$0xf]
    %v1594 = vld [vmem:[%s0 + $0x3c] sm:$0xf]
    %v1659 = vunpack.c.l.b16 %v1515
    %v1660 = vunpack.c.l.b16 %v1516
    %v1661 = vunpack.c.l.b16 %v1517
    %v1662 = vunpack.c.l.b16 %v1518
    %v1663 = vunpack.c.l.b16 %v1519
    %v1664 = vunpack.c.l.b16 %v1520
    %v1665 = vunpack.c.l.b16 %v1521
    %v1666 = vunpack.c.l.b16 %v1522
    %v1667 = vunpack.c.l.b16 %v1523
    %v1668 = vunpack.c.l.b16 %v1524
    %v1669 = vunpack.c.l.b16 %v1525
    %v1670 = vunpack.c.l.b16 %v1526
    %v1671 = vunpack.c.l.b16 %v1527
    %v1672 = vunpack.c.l.b16 %v1528
    %v1673 = vunpack.c.l.b16 %v1529
    %v1674 = vunpack.c.l.b16 %v1530
    %v1675 = vunpack.c.l.b16 %v1531
    %v1676 = vunpack.c.l.b16 %v1532
    %v1677 = vunpack.c.l.b16 %v1533
    %v1678 = vunpack.c.l.b16 %v1534
    %v1679 = vunpack.c.l.b16 %v1535
    %v1680 = vunpack.c.l.b16 %v1536
    %v1681 = vunpack.c.l.b16 %v1537
    %v1682 = vunpack.c.l.b16 %v1538
    %v1683 = vunpack.c.l.b16 %v1539
    %v1684 = vunpack.c.l.b16 %v1540
    %v1685 = vunpack.c.l.b16 %v1541
    %v1686 = vunpack.c.l.b16 %v1542
    %v1687 = vunpack.c.l.b16 %v1543
    %v1688 = vunpack.c.l.b16 %v1544
    %v1689 = vunpack.c.l.b16 %v1545
    %v1690 = vunpack.c.l.b16 %v1546
    %v1691 = vunpack.c.l.b16 %v1547
    %v1692 = vunpack.c.l.b16 %v1548
    %v1693 = vunpack.c.l.b16 %v1549
    %v1694 = vunpack.c.l.b16 %v1550
    %v1695 = vunpack.c.l.b16 %v1551
    %v1696 = vunpack.c.l.b16 %v1552
    %v1697 = vunpack.c.l.b16 %v1553
    %v1698 = vunpack.c.l.b16 %v1554
    %v1699 = vunpack.c.l.b16 %v1555
    %v1700 = vunpack.c.l.b16 %v1556
    %v1701 = vunpack.c.l.b16 %v1557
    %v1702 = vunpack.c.l.b16 %v1558
    %v1703 = vunpack.c.l.b16 %v1559
    %v1704 = vunpack.c.l.b16 %v1560
    %v1705 = vunpack.c.l.b16 %v1561
    %v1706 = vunpack.c.l.b16 %v1562
    %v1707 = vunpack.c.l.b16 %v1563
    %v1708 = vunpack.c.l.b16 %v1564
    %v1709 = vunpack.c.l.b16 %v1565
    %v1710 = vunpack.c.l.b16 %v1566
    %v1711 = vunpack.c.l.b16 %v1567
    %v1712 = vunpack.c.l.b16 %v1568
    %v1713 = vunpack.c.l.b16 %v1569
    %v1714 = vunpack.c.l.b16 %v1570
    %v1715 = vunpack.c.l.b16 %v1571
    %v1716 = vunpack.c.l.b16 %v1572
    %v1717 = vunpack.c.l.b16 %v1573
    %v1718 = vunpack.c.l.b16 %v1574
    %v1719 = vunpack.c.l.b16 %v1575
    %v1720 = vunpack.c.l.b16 %v1576
    %v1721 = vunpack.c.l.b16 %v1577
    %v1722 = vunpack.c.l.b16 %v1578
    %v1723 = vpack.c.b16 %v1660, %v1659
    %v1724 = vpack.c.b16 %v1662, %v1661
    %v1725 = vpack.c.b16 %v1664, %v1663
    %v1726 = vpack.c.b16 %v1666, %v1665
    %v1727 = vpack.c.b16 %v1668, %v1667
    %v1728 = vpack.c.b16 %v1670, %v1669
    %v1729 = vpack.c.b16 %v1672, %v1671
    %v1730 = vpack.c.b16 %v1674, %v1673
    %v1731 = vpack.c.b16 %v1676, %v1675
    %v1732 = vpack.c.b16 %v1678, %v1677
    %v1733 = vpack.c.b16 %v1680, %v1679
    %v1734 = vpack.c.b16 %v1682, %v1681
    %v1735 = vpack.c.b16 %v1684, %v1683
    %v1736 = vpack.c.b16 %v1686, %v1685
    %v1737 = vpack.c.b16 %v1688, %v1687
    %v1738 = vpack.c.b16 %v1690, %v1689
    %v1739 = vpack.c.b16 %v1692, %v1691
    %v1740 = vpack.c.b16 %v1694, %v1693
    %v1741 = vpack.c.b16 %v1696, %v1695
    %v1742 = vpack.c.b16 %v1698, %v1697
    %v1743 = vpack.c.b16 %v1700, %v1699
    %v1744 = vpack.c.b16 %v1702, %v1701
    %v1745 = vpack.c.b16 %v1704, %v1703
    %v1746 = vpack.c.b16 %v1706, %v1705
    %v1747 = vpack.c.b16 %v1708, %v1707
    %v1748 = vpack.c.b16 %v1710, %v1709
    %v1749 = vpack.c.b16 %v1712, %v1711
    %v1750 = vpack.c.b16 %v1714, %v1713
    %v1751 = vpack.c.b16 %v1716, %v1715
    %v1752 = vpack.c.b16 %v1718, %v1717
    %v1753 = vpack.c.b16 %v1720, %v1719
    %v1754 = vpack.c.b16 %v1722, %v1721
    %v1803 = vunpack.c.l.b16 %v1579
    %v1804 = vunpack.c.l.b16 %v1580
    %v1805 = vunpack.c.l.b16 %v1581
    %v1806 = vunpack.c.l.b16 %v1582
    %v1807 = vunpack.c.l.b16 %v1583
    %v1808 = vunpack.c.l.b16 %v1584
    %v1809 = vunpack.c.l.b16 %v1585
    %v1810 = vunpack.c.l.b16 %v1586
    %v1811 = vunpack.c.l.b16 %v1587
    %v1812 = vunpack.c.l.b16 %v1588
    %v1813 = vunpack.c.l.b16 %v1589
    %v1814 = vunpack.c.l.b16 %v1590
    %v1815 = vunpack.c.l.b16 %v1591
    %v1816 = vunpack.c.l.b16 %v1592
    %v1817 = vunpack.c.l.b16 %v1593
    %v1818 = vunpack.c.l.b16 %v1594
    %v1819 = vpack.c.b16 %v1804, %v1803
    %v1820 = vpack.c.b16 %v1806, %v1805
    %v1821 = vpack.c.b16 %v1808, %v1807
    %v1822 = vpack.c.b16 %v1810, %v1809
    %v1823 = vpack.c.b16 %v1812, %v1811
    %v1824 = vpack.c.b16 %v1814, %v1813
    %v1825 = vpack.c.b16 %v1816, %v1815
    %v1826 = vpack.c.b16 %v1818, %v1817
    %1835 = vmatpush.bf16.msra.mxu0 %v1826
    %1836 = vmatpush.bf16.msra.mxu0 %v1825
    %1837 = vmatpush.bf16.msra.mxu0 %v1824
    %1838 = vmatpush.bf16.msra.mxu0 %v1823
    %1839 = vmatpush.bf16.msra.mxu0 %v1822
    %1840 = vmatpush.bf16.msra.mxu0 %v1821
    %1841 = vmatpush.bf16.msra.mxu0 %v1820
    %1842 = vmatpush.bf16.msra.mxu0 %v1819
    %1843 = vmatmul.bf16.gmra.mxu0 %v1723
    %v1844 = vpop.f32.mrf.mxu0
    %v1845 = vadd.f32 0.0, %v1844
    %v1846 = vpop.f32.mrf.mxu0
    %v1847 = vadd.f32 0.0, %v1846
    %1848 = vmatmul.bf16.gmra.mxu0 %v1724
    %v1849 = vpop.f32.mrf.mxu0
    %v1850 = vadd.f32 0.0, %v1849
    %v1851 = vpop.f32.mrf.mxu0
    %v1852 = vadd.f32 0.0, %v1851
    %1853 = vmatmul.bf16.gmra.mxu0 %v1725
    %v1854 = vpop.f32.mrf.mxu0
    %v1855 = vadd.f32 0.0, %v1854
    %v1856 = vpop.f32.mrf.mxu0
    %v1857 = vadd.f32 0.0, %v1856
    %1858 = vmatmul.bf16.gmra.mxu0 %v1726
    %v1859 = vpop.f32.mrf.mxu0
    %v1860 = vadd.f32 0.0, %v1859
    %v1861 = vpop.f32.mrf.mxu0
    %v1862 = vadd.f32 0.0, %v1861
    %1863 = vmatmul.bf16.gmra.mxu0 %v1727
    %v1864 = vpop.f32.mrf.mxu0
    %v1865 = vadd.f32 0.0, %v1864
    %v1866 = vpop.f32.mrf.mxu0
    %v1867 = vadd.f32 0.0, %v1866
    %1868 = vmatmul.bf16.gmra.mxu0 %v1728
    %v1869 = vpop.f32.mrf.mxu0
    %v1870 = vadd.f32 0.0, %v1869
    %v1871 = vpop.f32.mrf.mxu0
    %v1872 = vadd.f32 0.0, %v1871
    %1873 = vmatmul.bf16.gmra.mxu0 %v1729
    %v1874 = vpop.f32.mrf.mxu0
    %v1875 = vadd.f32 0.0, %v1874
    %v1876 = vpop.f32.mrf.mxu0
    %v1877 = vadd.f32 0.0, %v1876
    %1878 = vmatmul.bf16.gmra.mxu0 %v1730
    %v1879 = vpop.f32.mrf.mxu0
    %v1880 = vadd.f32 0.0, %v1879
    %v1881 = vpop.f32.mrf.mxu0
    %v1882 = vadd.f32 0.0, %v1881
    %1883 = vmatmul.bf16.gmra.mxu0 %v1731
    %v1884 = vpop.f32.mrf.mxu0
    %v1885 = vadd.f32 0.0, %v1884
    %v1886 = vpop.f32.mrf.mxu0
    %v1887 = vadd.f32 0.0, %v1886
    %1888 = vmatmul.bf16.gmra.mxu0 %v1732
    %v1889 = vpop.f32.mrf.mxu0
    %v1890 = vadd.f32 0.0, %v1889
    %v1891 = vpop.f32.mrf.mxu0
    %v1892 = vadd.f32 0.0, %v1891
    %1893 = vmatmul.bf16.gmra.mxu0 %v1733
    %v1894 = vpop.f32.mrf.mxu0
    %v1895 = vadd.f32 0.0, %v1894
    %v1896 = vpop.f32.mrf.mxu0
    %v1897 = vadd.f32 0.0, %v1896
    %1898 = vmatmul.bf16.gmra.mxu0 %v1734
    %v1899 = vpop.f32.mrf.mxu0
    %v1900 = vadd.f32 0.0, %v1899
    %v1901 = vpop.f32.mrf.mxu0
    %v1902 = vadd.f32 0.0, %v1901
    %1903 = vmatmul.bf16.gmra.mxu0 %v1735
    %v1904 = vpop.f32.mrf.mxu0
    %v1905 = vadd.f32 0.0, %v1904
    %v1906 = vpop.f32.mrf.mxu0
    %v1907 = vadd.f32 0.0, %v1906
    %1908 = vmatmul.bf16.gmra.mxu0 %v1736
    %v1909 = vpop.f32.mrf.mxu0
    %v1910 = vadd.f32 0.0, %v1909
    %v1911 = vpop.f32.mrf.mxu0
    %v1912 = vadd.f32 0.0, %v1911
    %1913 = vmatmul.bf16.gmra.mxu0 %v1737
    %v1914 = vpop.f32.mrf.mxu0
    %v1915 = vadd.f32 0.0, %v1914
    %v1916 = vpop.f32.mrf.mxu0
    %v1917 = vadd.f32 0.0, %v1916
    %1918 = vmatmul.bf16.gmra.mxu0 %v1738
    %v1919 = vpop.f32.mrf.mxu0
    %v1920 = vadd.f32 0.0, %v1919
    %v1921 = vpop.f32.mrf.mxu0
    %v1922 = vadd.f32 0.0, %v1921
    %1923 = vmatmul.bf16.gmra.mxu0 %v1739
    %v1924 = vpop.f32.mrf.mxu0
    %v1925 = vadd.f32 0.0, %v1924
    %v1926 = vpop.f32.mrf.mxu0
    %v1927 = vadd.f32 0.0, %v1926
    %1928 = vmatmul.bf16.gmra.mxu0 %v1740
    %v1929 = vpop.f32.mrf.mxu0
    %v1930 = vadd.f32 0.0, %v1929
    %v1931 = vpop.f32.mrf.mxu0
    %v1932 = vadd.f32 0.0, %v1931
    %1933 = vmatmul.bf16.gmra.mxu0 %v1741
    %v1934 = vpop.f32.mrf.mxu0
    %v1935 = vadd.f32 0.0, %v1934
    %v1936 = vpop.f32.mrf.mxu0
    %v1937 = vadd.f32 0.0, %v1936
    %1938 = vmatmul.bf16.gmra.mxu0 %v1742
    %v1939 = vpop.f32.mrf.mxu0
    %v1940 = vadd.f32 0.0, %v1939
    %v1941 = vpop.f32.mrf.mxu0
    %v1942 = vadd.f32 0.0, %v1941
    %1943 = vmatmul.bf16.gmra.mxu0 %v1743
    %v1944 = vpop.f32.mrf.mxu0
    %v1945 = vadd.f32 0.0, %v1944
    %v1946 = vpop.f32.mrf.mxu0
    %v1947 = vadd.f32 0.0, %v1946
    %1948 = vmatmul.bf16.gmra.mxu0 %v1744
    %v1949 = vpop.f32.mrf.mxu0
    %v1950 = vadd.f32 0.0, %v1949
    %v1951 = vpop.f32.mrf.mxu0
    %v1952 = vadd.f32 0.0, %v1951
    %1953 = vmatmul.bf16.gmra.mxu0 %v1745
    %v1954 = vpop.f32.mrf.mxu0
    %v1955 = vadd.f32 0.0, %v1954
    %v1956 = vpop.f32.mrf.mxu0
    %v1957 = vadd.f32 0.0, %v1956
    %1958 = vmatmul.bf16.gmra.mxu0 %v1746
    %v1959 = vpop.f32.mrf.mxu0
    %v1960 = vadd.f32 0.0, %v1959
    %v1961 = vpop.f32.mrf.mxu0
    %v1962 = vadd.f32 0.0, %v1961
    %1963 = vmatmul.bf16.gmra.mxu0 %v1747
    %v1964 = vpop.f32.mrf.mxu0
    %v1965 = vadd.f32 0.0, %v1964
    %v1966 = vpop.f32.mrf.mxu0
    %v1967 = vadd.f32 0.0, %v1966
    %1968 = vmatmul.bf16.gmra.mxu0 %v1748
    %v1969 = vpop.f32.mrf.mxu0
    %v1970 = vadd.f32 0.0, %v1969
    %v1971 = vpop.f32.mrf.mxu0
    %v1972 = vadd.f32 0.0, %v1971
    %1973 = vmatmul.bf16.gmra.mxu0 %v1749
    %v1974 = vpop.f32.mrf.mxu0
    %v1975 = vadd.f32 0.0, %v1974
    %v1976 = vpop.f32.mrf.mxu0
    %v1977 = vadd.f32 0.0, %v1976
    %1978 = vmatmul.bf16.gmra.mxu0 %v1750
    %v1979 = vpop.f32.mrf.mxu0
    %v1980 = vadd.f32 0.0, %v1979
    %v1981 = vpop.f32.mrf.mxu0
    %v1982 = vadd.f32 0.0, %v1981
    %1983 = vmatmul.bf16.gmra.mxu0 %v1751
    %v1984 = vpop.f32.mrf.mxu0
    %v1985 = vadd.f32 0.0, %v1984
    %v1986 = vpop.f32.mrf.mxu0
    %v1987 = vadd.f32 0.0, %v1986
    %1988 = vmatmul.bf16.gmra.mxu0 %v1752
    %v1989 = vpop.f32.mrf.mxu0
    %v1990 = vadd.f32 0.0, %v1989
    %v1991 = vpop.f32.mrf.mxu0
    %v1992 = vadd.f32 0.0, %v1991
    %1993 = vmatmul.bf16.gmra.mxu0 %v1753
    %v1994 = vpop.f32.mrf.mxu0
    %v1995 = vadd.f32 0.0, %v1994
    %v1996 = vpop.f32.mrf.mxu0
    %v1997 = vadd.f32 0.0, %v1996
    %1998 = vmatmul.bf16.gmra.mxu0 %v1754
    %v1999 = vpop.f32.mrf.mxu0
    %v2000 = vadd.f32 0.0, %v1999
    %v2001 = vpop.f32.mrf.mxu0
    %v2002 = vadd.f32 0.0, %v2001
    %2003 = vdwg.mxu0
    %v2004 = vld [vmem:[#allocation2] sm:$0xff]
    %v2005 = vadd.f32 %v1845, %v1847
    %v2006 = vadd.f32 %v2005, %v1850
    %v2007 = vadd.f32 %v2006, %v1852
    %v2008 = vadd.f32 %v2007, %v1855
    %v2009 = vadd.f32 %v2008, %v1857
    %v2010 = vadd.f32 %v2009, %v1860
    %v2011 = vadd.f32 %v2010, %v1862
    %v2012 = vadd.f32 %v2011, %v1865
    %v2013 = vadd.f32 %v2012, %v1867
    %v2014 = vadd.f32 %v2013, %v1870
    %v2015 = vadd.f32 %v2014, %v1872
    %v2016 = vadd.f32 %v2015, %v1875
    %v2017 = vadd.f32 %v2016, %v1877
    %v2018 = vadd.f32 %v2017, %v1880
    %v2019 = vadd.f32 %v2018, %v1882
    %v2020 = vadd.f32 %v2019, %v1885
    %v2021 = vadd.f32 %v2020, %v1887
    %v2022 = vadd.f32 %v2021, %v1890
    %v2023 = vadd.f32 %v2022, %v1892
    %v2024 = vadd.f32 %v2023, %v1895
    %v2025 = vadd.f32 %v2024, %v1897
    %v2026 = vadd.f32 %v2025, %v1900
    %v2027 = vadd.f32 %v2026, %v1902
    %v2028 = vadd.f32 %v2027, %v1905
    %v2029 = vadd.f32 %v2028, %v1907
    %v2030 = vadd.f32 %v2029, %v1910
    %v2031 = vadd.f32 %v2030, %v1912
    %v2032 = vadd.f32 %v2031, %v1915
    %v2033 = vadd.f32 %v2032, %v1917
    %v2034 = vadd.f32 %v2033, %v1920
    %v2035 = vadd.f32 %v2034, %v1922
    %v2036 = vadd.f32 %v2035, %v1925
    %v2037 = vadd.f32 %v2036, %v1927
    %v2038 = vadd.f32 %v2037, %v1930
    %v2039 = vadd.f32 %v2038, %v1932
    %v2040 = vadd.f32 %v2039, %v1935
    %v2041 = vadd.f32 %v2040, %v1937
    %v2042 = vadd.f32 %v2041, %v1940
    %v2043 = vadd.f32 %v2042, %v1942
    %v2044 = vadd.f32 %v2043, %v1945
    %v2045 = vadd.f32 %v2044, %v1947
    %v2046 = vadd.f32 %v2045, %v1950
    %v2047 = vadd.f32 %v2046, %v1952
    %v2048 = vadd.f32 %v2047, %v1955
    %v2049 = vadd.f32 %v2048, %v1957
    %v2050 = vadd.f32 %v2049, %v1960
    %v2051 = vadd.f32 %v2050, %v1962
    %v2052 = vadd.f32 %v2051, %v1965
    %v2053 = vadd.f32 %v2052, %v1967
    %v2054 = vadd.f32 %v2053, %v1970
    %v2055 = vadd.f32 %v2054, %v1972
    %v2056 = vadd.f32 %v2055, %v1975
    %v2057 = vadd.f32 %v2056, %v1977
    %v2058 = vadd.f32 %v2057, %v1980
    %v2059 = vadd.f32 %v2058, %v1982
    %v2060 = vadd.f32 %v2059, %v1985
    %v2061 = vadd.f32 %v2060, %v1987
    %v2062 = vadd.f32 %v2061, %v1990
    %v2063 = vadd.f32 %v2062, %v1992
    %v2064 = vadd.f32 %v2063, %v1995
    %v2065 = vadd.f32 %v2064, %v1997
    %v2066 = vadd.f32 %v2065, %v2000
    %v2067 = vadd.f32 %v2066, %v2002
    %v2068 = vadd.f32 %v2004, %v2067
    %2069 = vst [vmem:[#allocation2] sm:$0xff] %v2068
    %v2070 = vld [vmem:[#allocation3] sm:$0xff]
    %v2071 = vmul.f32 %v1845, %v1845
    %v2072 = vmul.f32 %v1847, %v1847
    %v2073 = vmul.f32 %v1850, %v1850
    %v2074 = vmul.f32 %v1852, %v1852
    %v2075 = vmul.f32 %v1855, %v1855
    %v2076 = vmul.f32 %v1857, %v1857
    %v2077 = vmul.f32 %v1860, %v1860
    %v2078 = vmul.f32 %v1862, %v1862
    %v2079 = vmul.f32 %v1865, %v1865
    %v2080 = vmul.f32 %v1867, %v1867
    %v2081 = vmul.f32 %v1870, %v1870
    %v2082 = vmul.f32 %v1872, %v1872
    %v2083 = vmul.f32 %v1875, %v1875
    %v2084 = vmul.f32 %v1877, %v1877
    %v2085 = vmul.f32 %v1880, %v1880
    %v2086 = vmul.f32 %v1882, %v1882
    %v2087 = vmul.f32 %v1885, %v1885
    %v2088 = vmul.f32 %v1887, %v1887
    %v2089 = vmul.f32 %v1890, %v1890
    %v2090 = vmul.f32 %v1892, %v1892
    %v2091 = vmul.f32 %v1895, %v1895
    %v2092 = vmul.f32 %v1897, %v1897
    %v2093 = vmul.f32 %v1900, %v1900
    %v2094 = vmul.f32 %v1902, %v1902
    %v2095 = vmul.f32 %v1905, %v1905
    %v2096 = vmul.f32 %v1907, %v1907
    %v2097 = vmul.f32 %v1910, %v1910
    %v2098 = vmul.f32 %v1912, %v1912
    %v2099 = vmul.f32 %v1915, %v1915
    %v2100 = vmul.f32 %v1917, %v1917
    %v2101 = vmul.f32 %v1920, %v1920
    %v2102 = vmul.f32 %v1922, %v1922
    %v2103 = vmul.f32 %v1925, %v1925
    %v2104 = vmul.f32 %v1927, %v1927
    %v2105 = vmul.f32 %v1930, %v1930
    %v2106 = vmul.f32 %v1932, %v1932
    %v2107 = vmul.f32 %v1935, %v1935
    %v2108 = vmul.f32 %v1937, %v1937
    %v2109 = vmul.f32 %v1940, %v1940
    %v2110 = vmul.f32 %v1942, %v1942
    %v2111 = vmul.f32 %v1945, %v1945
    %v2112 = vmul.f32 %v1947, %v1947
    %v2113 = vmul.f32 %v1950, %v1950
    %v2114 = vmul.f32 %v1952, %v1952
    %v2115 = vmul.f32 %v1955, %v1955
    %v2116 = vmul.f32 %v1957, %v1957
    %v2117 = vmul.f32 %v1960, %v1960
    %v2118 = vmul.f32 %v1962, %v1962
    %v2119 = vmul.f32 %v1965, %v1965
    %v2120 = vmul.f32 %v1967, %v1967
    %v2121 = vmul.f32 %v1970, %v1970
    %v2122 = vmul.f32 %v1972, %v1972
    %v2123 = vmul.f32 %v1975, %v1975
    %v2124 = vmul.f32 %v1977, %v1977
    %v2125 = vmul.f32 %v1980, %v1980
    %v2126 = vmul.f32 %v1982, %v1982
    %v2127 = vmul.f32 %v1985, %v1985
    %v2128 = vmul.f32 %v1987, %v1987
    %v2129 = vmul.f32 %v1990, %v1990
    %v2130 = vmul.f32 %v1992, %v1992
    %v2131 = vmul.f32 %v1995, %v1995
    %v2132 = vmul.f32 %v1997, %v1997
    %v2133 = vmul.f32 %v2000, %v2000
    %v2134 = vmul.f32 %v2002, %v2002
    %v2135 = vadd.f32 %v2071, %v2072
    %v2136 = vadd.f32 %v2135, %v2073
    %v2137 = vadd.f32 %v2136, %v2074
    %v2138 = vadd.f32 %v2137, %v2075
    %v2139 = vadd.f32 %v2138, %v2076
    %v2140 = vadd.f32 %v2139, %v2077
    %v2141 = vadd.f32 %v2140, %v2078
    %v2142 = vadd.f32 %v2141, %v2079
    %v2143 = vadd.f32 %v2142, %v2080
    %v2144 = vadd.f32 %v2143, %v2081
    %v2145 = vadd.f32 %v2144, %v2082
    %v2146 = vadd.f32 %v2145, %v2083
    %v2147 = vadd.f32 %v2146, %v2084
    %v2148 = vadd.f32 %v2147, %v2085
    %v2149 = vadd.f32 %v2148, %v2086
    %v2150 = vadd.f32 %v2149, %v2087
    %v2151 = vadd.f32 %v2150, %v2088
    %v2152 = vadd.f32 %v2151, %v2089
    %v2153 = vadd.f32 %v2152, %v2090
    %v2154 = vadd.f32 %v2153, %v2091
    %v2155 = vadd.f32 %v2154, %v2092
    %v2156 = vadd.f32 %v2155, %v2093
    %v2157 = vadd.f32 %v2156, %v2094
    %v2158 = vadd.f32 %v2157, %v2095
    %v2159 = vadd.f32 %v2158, %v2096
    %v2160 = vadd.f32 %v2159, %v2097
    %v2161 = vadd.f32 %v2160, %v2098
    %v2162 = vadd.f32 %v2161, %v2099
    %v2163 = vadd.f32 %v2162, %v2100
    %v2164 = vadd.f32 %v2163, %v2101
    %v2165 = vadd.f32 %v2164, %v2102
    %v2166 = vadd.f32 %v2165, %v2103
    %v2167 = vadd.f32 %v2166, %v2104
    %v2168 = vadd.f32 %v2167, %v2105
    %v2169 = vadd.f32 %v2168, %v2106
    %v2170 = vadd.f32 %v2169, %v2107
    %v2171 = vadd.f32 %v2170, %v2108
    %v2172 = vadd.f32 %v2171, %v2109
    %v2173 = vadd.f32 %v2172, %v2110
    %v2174 = vadd.f32 %v2173, %v2111
    %v2175 = vadd.f32 %v2174, %v2112
    %v2176 = vadd.f32 %v2175, %v2113
    %v2177 = vadd.f32 %v2176, %v2114
    %v2178 = vadd.f32 %v2177, %v2115
    %v2179 = vadd.f32 %v2178, %v2116
    %v2180 = vadd.f32 %v2179, %v2117
    %v2181 = vadd.f32 %v2180, %v2118
    %v2182 = vadd.f32 %v2181, %v2119
    %v2183 = vadd.f32 %v2182, %v2120
    %v2184 = vadd.f32 %v2183, %v2121
    %v2185 = vadd.f32 %v2184, %v2122
    %v2186 = vadd.f32 %v2185, %v2123
    %v2187 = vadd.f32 %v2186, %v2124
    %v2188 = vadd.f32 %v2187, %v2125
    %v2189 = vadd.f32 %v2188, %v2126
    %v2190 = vadd.f32 %v2189, %v2127
    %v2191 = vadd.f32 %v2190, %v2128
    %v2192 = vadd.f32 %v2191, %v2129
    %v2193 = vadd.f32 %v2192, %v2130
    %v2194 = vadd.f32 %v2193, %v2131
    %v2195 = vadd.f32 %v2194, %v2132
    %v2196 = vadd.f32 %v2195, %v2133
    %v2197 = vadd.f32 %v2196, %v2134
    %v2198 = vadd.f32 %v2070, %v2197
    %2199 = vst [vmem:[#allocation3] sm:$0xff] %v2198
    // Predicated region
    $region14: #{conv_block_forward.5} parent=1 // pred_check
      %p2200 = pneg %p1509
    $region15: #{conv_block_forward.5} parent=1 // pred_check_branch
      %2202 = sbr.rel (%p2200) target = $region17
    $region16: #{conv_block_forward.5} parent=1 // pred_region
      %v2203 = vld [vmem:[#allocation2] sm:$0xff]
      %2204 = vst [vmem:[%s3] sm:$0xff] %v2203
      %v2205 = vld [vmem:[#allocation3] sm:$0xff]
      %2206 = vst [vmem:[%s3 + $0x8] sm:$0xff] %v2205
    $region17: #{conv_block_forward.5} parent=1 // pred_fallthru
      _
    // Predicated region
    $region18: #{conv_block_forward.5} parent=1 // pred_check
      _
    $region19: #{conv_block_forward.5} parent=1 // pred_check_branch
      %2208 = sbr.rel (0) target = $region21
    $region20: #{conv_block_forward.5} parent=1 // pred_region
      _
    $region21: #{conv_block_forward.5} parent=1 // pred_fallthru
      _
    // Predicated region
    $region22: #{conv_block_forward.5} parent=1 // pred_check
      _
    $region23: #{conv_block_forward.5} parent=1 // pred_check_branch
      %2210 = sbr.rel (0) target = $region25
    $region24: #{conv_block_forward.5} parent=1 // pred_region
      _
    $region25: #{conv_block_forward.5} parent=1 // pred_fallthru
      _

// kernel: conv_block_forward.4
$region0: #{conv_block_forward.4}
  #allocation0 [shape = 'u32[]', space=smem, size = 0x4, offset = 0x4, fixed_abs, tag = 'smem constant byte address 0x4 - core index']
  #allocation1 [shape = 'u32[72,128]{1,0:T(1,128)}', space=vmem, size = 0x9000, scoped, tag = 'internal scratch']
  #allocation2 [shape = 'u32[2048]{0}', space=vmem, size = 0x2000, scoped, tag = 'scoped memory for conv_block_forward.4']
  #allocation3 [shape = 'u32[2048]{0}', space=vmem, size = 0x2000, scoped, tag = 'scoped memory for conv_block_forward.4']
  #allocation4 [shape = 'u32[2048]{0}', space=vmem, size = 0x2000, scoped, tag = 'scoped memory for conv_block_forward.4']
  #allocation5 [shape = 'u32[2048]{0}', space=vmem, size = 0x2000, scoped, tag = 'scoped memory for conv_block_forward.4']
  #allocation6 [shape = 'u32[2048]{0}', space=vmem, size = 0x2000, scoped, tag = 'scoped memory for conv_block_forward.4']
  %s0 = inlined_call_operand.vmem [shape: bf16[128,128], index: 0, kind: input, shape index: {}]
  %s1 = inlined_call_operand.vmem [shape: f32[8,128], index: 1, kind: input, shape index: {}]
  %s2 = inlined_call_operand.vmem [shape: bf16[512,36], index: 2, kind: input, shape index: {}]
  %s3 = inlined_call_operand.<no memory space> [shape: bf16[], index: 3, kind: input, shape index: {}]
  %s4 = inlined_call_operand.vmem [shape: f32[512,128], index: 4, kind: output, shape index: {}]
  %s5 = sld [smem:[#allocation0]]
  $region22: #{conv_block_forward.4} parent=0
    _
  %s7 = ssub.s32 1, %s5
  %s8 = scalar_select 0, %s7, %s5
  %v9 = vstv %s3
  %v10 = vunpack.i.l.bf16 %v9
  %v12 = vunpack.i.h.bf16 %v9
  $region1: #{conv_block_forward.4} parent=0
    #allocation7 [shape = 'u8[131072]{0}', space=vmem, size = 0x20000, dematerialized = true, scoped, tag = 'FusionAdapter Buffer %fusion.1 = bf16[512,128]{1,0:T(8,128)(2,1)} fusion(%param_2.1, %param_3), kind=kLoop, calls=%fused_computation.1.clone, metadata={op_name="jit(conv_block_forward)/jit(_pad)/pad" stack_frame_id=17}']
    // Predicated region
    $region2: #{conv_block_forward.4} parent=1 // pred_check
      _
    $region3: #{conv_block_forward.4} parent=1 // pred_check_branch
      %15 = sbr.rel (0) target = $region5
    $region4: #{conv_block_forward.4} parent=1 // pred_region
      _
    $region5: #{conv_block_forward.4} parent=1 // pred_fallthru
      _
    // Predicated region
    $region6: #{conv_block_forward.4} parent=1 // pred_check
      _
    $region7: #{conv_block_forward.4} parent=1 // pred_check_branch
      %17 = sbr.rel (0) target = $region9
    $region8: #{conv_block_forward.4} parent=1 // pred_region
      _
    $region9: #{conv_block_forward.4} parent=1 // pred_fallthru
      _
    // Predicated region
    $region10: #{conv_block_forward.4} parent=1 // pred_check
      _
    $region11: #{conv_block_forward.4} parent=1 // pred_check_branch
      %19 = sbr.rel (0) target = $region13
    $region12: #{conv_block_forward.4} parent=1 // pred_region
      _
    $region13: #{conv_block_forward.4} parent=1 // pred_fallthru
      _
    %s21 = sor.u32 255, 127
    %s22 = sand.u32 %s21, 85
    %s23 = sshrl.u32 %s22, 1
    %s24 = sor.u32 %s22, %s23
    %s25 = sand.u32 51, %s24
    %s26 = sshrl.u32 %s25, 2
    %s27 = sor.u32 %s25, %s26
    %s28 = sand.u32 15, %s27
    %v29 = vld [vmem:[%s2] sm:%s28]
    %v30 = vunpack.c.l.bf16 %v29
    %v31 = vunpack.c.h.bf16 %v29
    %v32 = vlaneseq
    %v33 = vand.u32 %v32, 127
    %vm35 = vcmp.lt.s32.totalorder %v33, 36
    %v36 = vsel %vm35, %v30, %v10
    %v37 = vpack.c.bf16 0.0, %v36
    %s39 = ssub.s32 16, 1
    %40 = vst [vmem:[#allocation7] sm:%s39] %v37
    %s41 = scalar_lea.vmem %s2, 4
    %s43 = sor.u32 255, 127
    %s44 = sand.u32 %s43, 85
    %s45 = sshrl.u32 %s44, 1
    %s46 = sor.u32 %s44, %s45
    %s47 = sand.u32 51, %s46
    %s48 = sshrl.u32 %s47, 2
    %s49 = sor.u32 %s47, %s48
    %s50 = sand.u32 15, %s49
    %v51 = vld [vmem:[%s41] sm:%s50]
    %v52 = vunpack.c.l.bf16 %v51
    %v53 = vunpack.c.h.bf16 %v51
    %v54 = vlaneseq
    %v55 = vand.u32 %v54, 127
    %vm57 = vcmp.lt.s32.totalorder %v55, 36
    %v58 = vsel %vm57, %v52, %v10
    %s59 = scalar_lea.vmem [#allocation7], 4
    %v60 = vpack.c.bf16 0.0, %v58
    %s62 = ssub.s32 16, 1
    %63 = vst [vmem:[%s59] sm:%s62] %v60
    %s64 = scalar_lea.vmem %s2, 8
    %s66 = sor.u32 255, 127
    %s67 = sand.u32 %s66, 85
    %s68 = sshrl.u32 %s67, 1
    %s69 = sor.u32 %s67, %s68
    %s70 = sand.u32 51, %s69
    %s71 = sshrl.u32 %s70, 2
    %s72 = sor.u32 %s70, %s71
    %s73 = sand.u32 15, %s72
    %v74 = vld [vmem:[%s64] sm:%s73]
    %v75 = vunpack.c.l.bf16 %v74
    %v76 = vunpack.c.h.bf16 %v74
    %v77 = vlaneseq
    %v78 = vand.u32 %v77, 127
    %vm80 = vcmp.lt.s32.totalorder %v78, 36
    %v81 = vsel %vm80, %v75, %v10
    %s82 = scalar_lea.vmem [#allocation7], 8
    %v83 = vpack.c.bf16 0.0, %v81
    %s85 = ssub.s32 16, 1
    %86 = vst [vmem:[%s82] sm:%s85] %v83
    %s87 = scalar_lea.vmem %s2, 12
    %s89 = sor.u32 255, 127
    %s90 = sand.u32 %s89, 85
    %s91 = sshrl.u32 %s90, 1
    %s92 = sor.u32 %s90, %s91
    %s93 = sand.u32 51, %s92
    %s94 = sshrl.u32 %s93, 2
    %s95 = sor.u32 %s93, %s94
    %s96 = sand.u32 15, %s95
    %v97 = vld [vmem:[%s87] sm:%s96]
    %v98 = vunpack.c.l.bf16 %v97
    %v99 = vunpack.c.h.bf16 %v97
    %v100 = vlaneseq
    %v101 = vand.u32 %v100, 127
    %vm103 = vcmp.lt.s32.totalorder %v101, 36
    %v104 = vsel %vm103, %v98, %v10
    %s105 = scalar_lea.vmem [#allocation7], 12
    %v106 = vpack.c.bf16 0.0, %v104
    %s108 = ssub.s32 16, 1
    %109 = vst [vmem:[%s105] sm:%s108] %v106
    %s110 = scalar_lea.vmem %s2, 16
    %s112 = sor.u32 255, 127
    %s113 = sand.u32 %s112, 85
    %s114 = sshrl.u32 %s113, 1
    %s115 = sor.u32 %s113, %s114
    %s116 = sand.u32 51, %s115
    %s117 = sshrl.u32 %s116, 2
    %s118 = sor.u32 %s116, %s117
    %s119 = sand.u32 15, %s118
    %v120 = vld [vmem:[%s110] sm:%s119]
    %v121 = vunpack.c.l.bf16 %v120
    %v122 = vunpack.c.h.bf16 %v120
    %v123 = vlaneseq
    %v124 = vand.u32 %v123, 127
    %vm126 = vcmp.lt.s32.totalorder %v124, 36
    %v127 = vsel %vm126, %v121, %v10
    %s128 = scalar_lea.vmem [#allocation7], 16
    %v129 = vpack.c.bf16 0.0, %v127
    %s131 = ssub.s32 16, 1
    %132 = vst [vmem:[%s128] sm:%s131] %v129
    %s133 = scalar_lea.vmem %s2, 20
    %s135 = sor.u32 255, 127
    %s136 = sand.u32 %s135, 85
    %s137 = sshrl.u32 %s136, 1
    %s138 = sor.u32 %s136, %s137
    %s139 = sand.u32 51, %s138
    %s140 = sshrl.u32 %s139, 2
    %s141 = sor.u32 %s139, %s140
    %s142 = sand.u32 15, %s141
    %v143 = vld [vmem:[%s133] sm:%s142]
    %v144 = vunpack.c.l.bf16 %v143
    %v145 = vunpack.c.h.bf16 %v143
    %v146 = vlaneseq
    %v147 = vand.u32 %v146, 127
    %vm149 = vcmp.lt.s32.totalorder %v147, 36
    %v150 = vsel %vm149, %v144, %v10
    %s151 = scalar_lea.vmem [#allocation7], 20
    %v152 = vpack.c.bf16 0.0, %v150
    %s154 = ssub.s32 16, 1
    %155 = vst [vmem:[%s151] sm:%s154] %v152
    %s156 = scalar_lea.vmem %s2, 24
    %s158 = sor.u32 255, 127
    %s159 = sand.u32 %s158, 85
    %s160 = sshrl.u32 %s159, 1
    %s161 = sor.u32 %s159, %s160
    %s162 = sand.u32 51, %s161
    %s163 = sshrl.u32 %s162, 2
    %s164 = sor.u32 %s162, %s163
    %s165 = sand.u32 15, %s164
    %v166 = vld [vmem:[%s156] sm:%s165]
    %v167 = vunpack.c.l.bf16 %v166
    %v168 = vunpack.c.h.bf16 %v166
    %v169 = vlaneseq
    %v170 = vand.u32 %v169, 127
    %vm172 = vcmp.lt.s32.totalorder %v170, 36
    %v173 = vsel %vm172, %v167, %v10
    %s174 = scalar_lea.vmem [#allocation7], 24
    %v175 = vpack.c.bf16 0.0, %v173
    %s177 = ssub.s32 16, 1
    %178 = vst [vmem:[%s174] sm:%s177] %v175
    %s179 = scalar_lea.vmem %s2, 28
    %s181 = sor.u32 255, 127
    %s182 = sand.u32 %s181, 85
    %s183 = sshrl.u32 %s182, 1
    %s184 = sor.u32 %s182, %s183
    %s185 = sand.u32 51, %s184
    %s186 = sshrl.u32 %s185, 2
    %s187 = sor.u32 %s185, %s186
    %s188 = sand.u32 15, %s187
    %v189 = vld [vmem:[%s179] sm:%s188]
    %v190 = vunpack.c.l.bf16 %v189
    %v191 = vunpack.c.h.bf16 %v189
    %v192 = vlaneseq
    %v193 = vand.u32 %v192, 127
    %vm195 = vcmp.lt.s32.totalorder %v193, 36
    %v196 = vsel %vm195, %v190, %v10
    %s197 = scalar_lea.vmem [#allocation7], 28
    %v198 = vpack.c.bf16 0.0, %v196
    %s200 = ssub.s32 16, 1
    %201 = vst [vmem:[%s197] sm:%s200] %v198
    %s202 = scalar_lea.vmem %s2, 32
    %s204 = sor.u32 255, 127
    %s205 = sand.u32 %s204, 85
    %s206 = sshrl.u32 %s205, 1
    %s207 = sor.u32 %s205, %s206
    %s208 = sand.u32 51, %s207
    %s209 = sshrl.u32 %s208, 2
    %s210 = sor.u32 %s208, %s209
    %s211 = sand.u32 15, %s210
    %v212 = vld [vmem:[%s202] sm:%s211]
    %v213 = vunpack.c.l.bf16 %v212
    %v214 = vunpack.c.h.bf16 %v212
    %v215 = vlaneseq
    %v216 = vand.u32 %v215, 127
    %vm218 = vcmp.lt.s32.totalorder %v216, 36
    %v219 = vsel %vm218, %v213, %v10
    %s220 = scalar_lea.vmem [#allocation7], 32
    %v221 = vpack.c.bf16 0.0, %v219
    %s223 = ssub.s32 16, 1
    %224 = vst [vmem:[%s220] sm:%s223] %v221
    %s225 = scalar_lea.vmem %s2, 36
    %s227 = sor.u32 255, 127
    %s228 = sand.u32 %s227, 85
    %s229 = sshrl.u32 %s228, 1
    %s230 = sor.u32 %s228, %s229
    %s231 = sand.u32 51, %s230
    %s232 = sshrl.u32 %s231, 2
    %s233 = sor.u32 %s231, %s232
    %s234 = sand.u32 15, %s233
    %v235 = vld [vmem:[%s225] sm:%s234]
    %v236 = vunpack.c.l.bf16 %v235
    %v237 = vunpack.c.h.bf16 %v235
    %v238 = vlaneseq
    %v239 = vand.u32 %v238, 127
    %vm241 = vcmp.lt.s32.totalorder %v239, 36
    %v242 = vsel %vm241, %v236, %v10
    %s243 = scalar_lea.vmem [#allocation7], 36
    %v244 = vpack.c.bf16 0.0, %v242
    %s246 = ssub.s32 16, 1
    %247 = vst [vmem:[%s243] sm:%s246] %v244
    %s248 = scalar_lea.vmem %s2, 40
    %s250 = sor.u32 255, 127
    %s251 = sand.u32 %s250, 85
    %s252 = sshrl.u32 %s251, 1
    %s253 = sor.u32 %s251, %s252
    %s254 = sand.u32 51, %s253
    %s255 = sshrl.u32 %s254, 2
    %s256 = sor.u32 %s254, %s255
    %s257 = sand.u32 15, %s256
    %v258 = vld [vmem:[%s248] sm:%s257]
    %v259 = vunpack.c.l.bf16 %v258
    %v260 = vunpack.c.h.bf16 %v258
    %v261 = vlaneseq
    %v262 = vand.u32 %v261, 127
    %vm264 = vcmp.lt.s32.totalorder %v262, 36
    %v265 = vsel %vm264, %v259, %v10
    %s266 = scalar_lea.vmem [#allocation7], 40
    %v267 = vpack.c.bf16 0.0, %v265
    %s269 = ssub.s32 16, 1
    %270 = vst [vmem:[%s266] sm:%s269] %v267
    %s271 = scalar_lea.vmem %s2, 44
    %s273 = sor.u32 255, 127
    %s274 = sand.u32 %s273, 85
    %s275 = sshrl.u32 %s274, 1
    %s276 = sor.u32 %s274, %s275
    %s277 = sand.u32 51, %s276
    %s278 = sshrl.u32 %s277, 2
    %s279 = sor.u32 %s277, %s278
    %s280 = sand.u32 15, %s279
    %v281 = vld [vmem:[%s271] sm:%s280]
    %v282 = vunpack.c.l.bf16 %v281
    %v283 = vunpack.c.h.bf16 %v281
    %v284 = vlaneseq
    %v285 = vand.u32 %v284, 127
    %vm287 = vcmp.lt.s32.totalorder %v285, 36
    %v288 = vsel %vm287, %v282, %v10
    %s289 = scalar_lea.vmem [#allocation7], 44
    %v290 = vpack.c.bf16 0.0, %v288
    %s292 = ssub.s32 16, 1
    %293 = vst [vmem:[%s289] sm:%s292] %v290
    %s294 = scalar_lea.vmem %s2, 48
    %s296 = sor.u32 255, 127
    %s297 = sand.u32 %s296, 85
    %s298 = sshrl.u32 %s297, 1
    %s299 = sor.u32 %s297, %s298
    %s300 = sand.u32 51, %s299
    %s301 = sshrl.u32 %s300, 2
    %s302 = sor.u32 %s300, %s301
    %s303 = sand.u32 15, %s302
    %v304 = vld [vmem:[%s294] sm:%s303]
    %v305 = vunpack.c.l.bf16 %v304
    %v306 = vunpack.c.h.bf16 %v304
    %v307 = vlaneseq
    %v308 = vand.u32 %v307, 127
    %vm310 = vcmp.lt.s32.totalorder %v308, 36
    %v311 = vsel %vm310, %v305, %v10
    %s312 = scalar_lea.vmem [#allocation7], 48
    %v313 = vpack.c.bf16 0.0, %v311
    %s315 = ssub.s32 16, 1
    %316 = vst [vmem:[%s312] sm:%s315] %v313
    %s317 = scalar_lea.vmem %s2, 52
    %s319 = sor.u32 255, 127
    %s320 = sand.u32 %s319, 85
    %s321 = sshrl.u32 %s320, 1
    %s322 = sor.u32 %s320, %s321
    %s323 = sand.u32 51, %s322
    %s324 = sshrl.u32 %s323, 2
    %s325 = sor.u32 %s323, %s324
    %s326 = sand.u32 15, %s325
    %v327 = vld [vmem:[%s317] sm:%s326]
    %v328 = vunpack.c.l.bf16 %v327
    %v329 = vunpack.c.h.bf16 %v327
    %v330 = vlaneseq
    %v331 = vand.u32 %v330, 127
    %vm333 = vcmp.lt.s32.totalorder %v331, 36
    %v334 = vsel %vm333, %v328, %v10
    %s335 = scalar_lea.vmem [#allocation7], 52
    %v336 = vpack.c.bf16 0.0, %v334
    %s338 = ssub.s32 16, 1
    %339 = vst [vmem:[%s335] sm:%s338] %v336
    %s340 = scalar_lea.vmem %s2, 56
    %s342 = sor.u32 255, 127
    %s343 = sand.u32 %s342, 85
    %s344 = sshrl.u32 %s343, 1
    %s345 = sor.u32 %s343, %s344
    %s346 = sand.u32 51, %s345
    %s347 = sshrl.u32 %s346, 2
    %s348 = sor.u32 %s346, %s347
    %s349 = sand.u32 15, %s348
    %v350 = vld [vmem:[%s340] sm:%s349]
    %v351 = vunpack.c.l.bf16 %v350
    %v352 = vunpack.c.h.bf16 %v350
    %v353 = vlaneseq
    %v354 = vand.u32 %v353, 127
    %vm356 = vcmp.lt.s32.totalorder %v354, 36
    %v357 = vsel %vm356, %v351, %v10
    %s358 = scalar_lea.vmem [#allocation7], 56
    %v359 = vpack.c.bf16 0.0, %v357
    %s361 = ssub.s32 16, 1
    %362 = vst [vmem:[%s358] sm:%s361] %v359
    %s363 = scalar_lea.vmem %s2, 60
    %s365 = sor.u32 255, 127
    %s366 = sand.u32 %s365, 85
    %s367 = sshrl.u32 %s366, 1
    %s368 = sor.u32 %s366, %s367
    %s369 = sand.u32 51, %s368
    %s370 = sshrl.u32 %s369, 2
    %s371 = sor.u32 %s369, %s370
    %s372 = sand.u32 15, %s371
    %v373 = vld [vmem:[%s363] sm:%s372]
    %v374 = vunpack.c.l.bf16 %v373
    %v375 = vunpack.c.h.bf16 %v373
    %v376 = vlaneseq
    %v377 = vand.u32 %v376, 127
    %vm379 = vcmp.lt.s32.totalorder %v377, 36
    %v380 = vsel %vm379, %v374, %v10
    %s381 = scalar_lea.vmem [#allocation7], 60
    %v382 = vpack.c.bf16 0.0, %v380
    %s384 = ssub.s32 16, 1
    %385 = vst [vmem:[%s381] sm:%s384] %v382
    %s386 = scalar_lea.vmem %s2, 64
    %s388 = sor.u32 255, 127
    %s389 = sand.u32 %s388, 85
    %s390 = sshrl.u32 %s389, 1
    %s391 = sor.u32 %s389, %s390
    %s392 = sand.u32 51, %s391
    %s393 = sshrl.u32 %s392, 2
    %s394 = sor.u32 %s392, %s393
    %s395 = sand.u32 15, %s394
    %v396 = vld [vmem:[%s386] sm:%s395]
    %v397 = vunpack.c.l.bf16 %v396
    %v398 = vunpack.c.h.bf16 %v396
    %v399 = vlaneseq
    %v400 = vand.u32 %v399, 127
    %vm402 = vcmp.lt.s32.totalorder %v400, 36
    %v403 = vsel %vm402, %v397, %v10
    %s404 = scalar_lea.vmem [#allocation7], 64
    %v405 = vpack.c.bf16 0.0, %v403
    %s407 = ssub.s32 16, 1
    %408 = vst [vmem:[%s404] sm:%s407] %v405
    %s409 = scalar_lea.vmem %s2, 68
    %s411 = sor.u32 255, 127
    %s412 = sand.u32 %s411, 85
    %s413 = sshrl.u32 %s412, 1
    %s414 = sor.u32 %s412, %s413
    %s415 = sand.u32 51, %s414
    %s416 = sshrl.u32 %s415, 2
    %s417 = sor.u32 %s415, %s416
    %s418 = sand.u32 15, %s417
    %v419 = vld [vmem:[%s409] sm:%s418]
    %v420 = vunpack.c.l.bf16 %v419
    %v421 = vunpack.c.h.bf16 %v419
    %v422 = vlaneseq
    %v423 = vand.u32 %v422, 127
    %vm425 = vcmp.lt.s32.totalorder %v423, 36
    %v426 = vsel %vm425, %v420, %v10
    %s427 = scalar_lea.vmem [#allocation7], 68
    %v428 = vpack.c.bf16 0.0, %v426
    %s430 = ssub.s32 16, 1
    %431 = vst [vmem:[%s427] sm:%s430] %v428
    %s432 = scalar_lea.vmem %s2, 72
    %s434 = sor.u32 255, 127
    %s435 = sand.u32 %s434, 85
    %s436 = sshrl.u32 %s435, 1
    %s437 = sor.u32 %s435, %s436
    %s438 = sand.u32 51, %s437
    %s439 = sshrl.u32 %s438, 2
    %s440 = sor.u32 %s438, %s439
    %s441 = sand.u32 15, %s440
    %v442 = vld [vmem:[%s432] sm:%s441]
    %v443 = vunpack.c.l.bf16 %v442
    %v444 = vunpack.c.h.bf16 %v442
    %v445 = vlaneseq
    %v446 = vand.u32 %v445, 127
    %vm448 = vcmp.lt.s32.totalorder %v446, 36
    %v449 = vsel %vm448, %v443, %v10
    %s450 = scalar_lea.vmem [#allocation7], 72
    %v451 = vpack.c.bf16 0.0, %v449
    %s453 = ssub.s32 16, 1
    %454 = vst [vmem:[%s450] sm:%s453] %v451
    %s455 = scalar_lea.vmem %s2, 76
    %s457 = sor.u32 255, 127
    %s458 = sand.u32 %s457, 85
    %s459 = sshrl.u32 %s458, 1
    %s460 = sor.u32 %s458, %s459
    %s461 = sand.u32 51, %s460
    %s462 = sshrl.u32 %s461, 2
    %s463 = sor.u32 %s461, %s462
    %s464 = sand.u32 15, %s463
    %v465 = vld [vmem:[%s455] sm:%s464]
    %v466 = vunpack.c.l.bf16 %v465
    %v467 = vunpack.c.h.bf16 %v465
    %v468 = vlaneseq
    %v469 = vand.u32 %v468, 127
    %vm471 = vcmp.lt.s32.totalorder %v469, 36
    %v472 = vsel %vm471, %v466, %v10
    %s473 = scalar_lea.vmem [#allocation7], 76
    %v474 = vpack.c.bf16 0.0, %v472
    %s476 = ssub.s32 16, 1
    %477 = vst [vmem:[%s473] sm:%s476] %v474
    %s478 = scalar_lea.vmem %s2, 80
    %s480 = sor.u32 255, 127
    %s481 = sand.u32 %s480, 85
    %s482 = sshrl.u32 %s481, 1
    %s483 = sor.u32 %s481, %s482
    %s484 = sand.u32 51, %s483
    %s485 = sshrl.u32 %s484, 2
    %s486 = sor.u32 %s484, %s485
    %s487 = sand.u32 15, %s486
    %v488 = vld [vmem:[%s478] sm:%s487]
    %v489 = vunpack.c.l.bf16 %v488
    %v490 = vunpack.c.h.bf16 %v488
    %v491 = vlaneseq
    %v492 = vand.u32 %v491, 127
    %vm494 = vcmp.lt.s32.totalorder %v492, 36
    %v495 = vsel %vm494, %v489, %v10
    %s496 = scalar_lea.vmem [#allocation7], 80
    %v497 = vpack.c.bf16 0.0, %v495
    %s499 = ssub.s32 16, 1
    %500 = vst [vmem:[%s496] sm:%s499] %v497
    %s501 = scalar_lea.vmem %s2, 84
    %s503 = sor.u32 255, 127
    %s504 = sand.u32 %s503, 85
    %s505 = sshrl.u32 %s504, 1
    %s506 = sor.u32 %s504, %s505
    %s507 = sand.u32 51, %s506
    %s508 = sshrl.u32 %s507, 2
    %s509 = sor.u32 %s507, %s508
    %s510 = sand.u32 15, %s509
    %v511 = vld [vmem:[%s501] sm:%s510]
    %v512 = vunpack.c.l.bf16 %v511
    %v513 = vunpack.c.h.bf16 %v511
    %v514 = vlaneseq
    %v515 = vand.u32 %v514, 127
    %vm517 = vcmp.lt.s32.totalorder %v515, 36
    %v518 = vsel %vm517, %v512, %v10
    %s519 = scalar_lea.vmem [#allocation7], 84
    %v520 = vpack.c.bf16 0.0, %v518
    %s522 = ssub.s32 16, 1
    %523 = vst [vmem:[%s519] sm:%s522] %v520
    %s524 = scalar_lea.vmem %s2, 88
    %s526 = sor.u32 255, 127
    %s527 = sand.u32 %s526, 85
    %s528 = sshrl.u32 %s527, 1
    %s529 = sor.u32 %s527, %s528
    %s530 = sand.u32 51, %s529
    %s531 = sshrl.u32 %s530, 2
    %s532 = sor.u32 %s530, %s531
    %s533 = sand.u32 15, %s532
    %v534 = vld [vmem:[%s524] sm:%s533]
    %v535 = vunpack.c.l.bf16 %v534
    %v536 = vunpack.c.h.bf16 %v534
    %v537 = vlaneseq
    %v538 = vand.u32 %v537, 127
    %vm540 = vcmp.lt.s32.totalorder %v538, 36
    %v541 = vsel %vm540, %v535, %v10
    %s542 = scalar_lea.vmem [#allocation7], 88
    %v543 = vpack.c.bf16 0.0, %v541
    %s545 = ssub.s32 16, 1
    %546 = vst [vmem:[%s542] sm:%s545] %v543
    %s547 = scalar_lea.vmem %s2, 92
    %s549 = sor.u32 255, 127
    %s550 = sand.u32 %s549, 85
    %s551 = sshrl.u32 %s550, 1
    %s552 = sor.u32 %s550, %s551
    %s553 = sand.u32 51, %s552
    %s554 = sshrl.u32 %s553, 2
    %s555 = sor.u32 %s553, %s554
    %s556 = sand.u32 15, %s555
    %v557 = vld [vmem:[%s547] sm:%s556]
    %v558 = vunpack.c.l.bf16 %v557
    %v559 = vunpack.c.h.bf16 %v557
    %v560 = vlaneseq
    %v561 = vand.u32 %v560, 127
    %vm563 = vcmp.lt.s32.totalorder %v561, 36
    %v564 = vsel %vm563, %v558, %v10
    %s565 = scalar_lea.vmem [#allocation7], 92
    %v566 = vpack.c.bf16 0.0, %v564
    %s568 = ssub.s32 16, 1
    %569 = vst [vmem:[%s565] sm:%s568] %v566
    %s570 = scalar_lea.vmem %s2, 96
    %s572 = sor.u32 255, 127
    %s573 = sand.u32 %s572, 85
    %s574 = sshrl.u32 %s573, 1
    %s575 = sor.u32 %s573, %s574
    %s576 = sand.u32 51, %s575
    %s577 = sshrl.u32 %s576, 2
    %s578 = sor.u32 %s576, %s577
    %s579 = sand.u32 15, %s578
    %v580 = vld [vmem:[%s570] sm:%s579]
    %v581 = vunpack.c.l.bf16 %v580
    %v582 = vunpack.c.h.bf16 %v580
    %v583 = vlaneseq
    %v584 = vand.u32 %v583, 127
    %vm586 = vcmp.lt.s32.totalorder %v584, 36
    %v587 = vsel %vm586, %v581, %v10
    %s588 = scalar_lea.vmem [#allocation7], 96
    %v589 = vpack.c.bf16 0.0, %v587
    %s591 = ssub.s32 16, 1
    %592 = vst [vmem:[%s588] sm:%s591] %v589
    %s593 = scalar_lea.vmem %s2, 100
    %s595 = sor.u32 255, 127
    %s596 = sand.u32 %s595, 85
    %s597 = sshrl.u32 %s596, 1
    %s598 = sor.u32 %s596, %s597
    %s599 = sand.u32 51, %s598
    %s600 = sshrl.u32 %s599, 2
    %s601 = sor.u32 %s599, %s600
    %s602 = sand.u32 15, %s601
    %v603 = vld [vmem:[%s593] sm:%s602]
    %v604 = vunpack.c.l.bf16 %v603
    %v605 = vunpack.c.h.bf16 %v603
    %v606 = vlaneseq
    %v607 = vand.u32 %v606, 127
    %vm609 = vcmp.lt.s32.totalorder %v607, 36
    %v610 = vsel %vm609, %v604, %v10
    %s611 = scalar_lea.vmem [#allocation7], 100
    %v612 = vpack.c.bf16 0.0, %v610
    %s614 = ssub.s32 16, 1
    %615 = vst [vmem:[%s611] sm:%s614] %v612
    %s616 = scalar_lea.vmem %s2, 104
    %s618 = sor.u32 255, 127
    %s619 = sand.u32 %s618, 85
    %s620 = sshrl.u32 %s619, 1
    %s621 = sor.u32 %s619, %s620
    %s622 = sand.u32 51, %s621
    %s623 = sshrl.u32 %s622, 2
    %s624 = sor.u32 %s622, %s623
    %s625 = sand.u32 15, %s624
    %v626 = vld [vmem:[%s616] sm:%s625]
    %v627 = vunpack.c.l.bf16 %v626
    %v628 = vunpack.c.h.bf16 %v626
    %v629 = vlaneseq
    %v630 = vand.u32 %v629, 127
    %vm632 = vcmp.lt.s32.totalorder %v630, 36
    %v633 = vsel %vm632, %v627, %v10
    %s634 = scalar_lea.vmem [#allocation7], 104
    %v635 = vpack.c.bf16 0.0, %v633
    %s637 = ssub.s32 16, 1
    %638 = vst [vmem:[%s634] sm:%s637] %v635
    %s639 = scalar_lea.vmem %s2, 108
    %s641 = sor.u32 255, 127
    %s642 = sand.u32 %s641, 85
    %s643 = sshrl.u32 %s642, 1
    %s644 = sor.u32 %s642, %s643
    %s645 = sand.u32 51, %s644
    %s646 = sshrl.u32 %s645, 2
    %s647 = sor.u32 %s645, %s646
    %s648 = sand.u32 15, %s647
    %v649 = vld [vmem:[%s639] sm:%s648]
    %v650 = vunpack.c.l.bf16 %v649
    %v651 = vunpack.c.h.bf16 %v649
    %v652 = vlaneseq
    %v653 = vand.u32 %v652, 127
    %vm655 = vcmp.lt.s32.totalorder %v653, 36
    %v656 = vsel %vm655, %v650, %v10
    %s657 = scalar_lea.vmem [#allocation7], 108
    %v658 = vpack.c.bf16 0.0, %v656
    %s660 = ssub.s32 16, 1
    %661 = vst [vmem:[%s657] sm:%s660] %v658
    %s662 = scalar_lea.vmem %s2, 112
    %s664 = sor.u32 255, 127
    %s665 = sand.u32 %s664, 85
    %s666 = sshrl.u32 %s665, 1
    %s667 = sor.u32 %s665, %s666
    %s668 = sand.u32 51, %s667
    %s669 = sshrl.u32 %s668, 2
    %s670 = sor.u32 %s668, %s669
    %s671 = sand.u32 15, %s670
    %v672 = vld [vmem:[%s662] sm:%s671]
    %v673 = vunpack.c.l.bf16 %v672
    %v674 = vunpack.c.h.bf16 %v672
    %v675 = vlaneseq
    %v676 = vand.u32 %v675, 127
    %vm678 = vcmp.lt.s32.totalorder %v676, 36
    %v679 = vsel %vm678, %v673, %v10
    %s680 = scalar_lea.vmem [#allocation7], 112
    %v681 = vpack.c.bf16 0.0, %v679
    %s683 = ssub.s32 16, 1
    %684 = vst [vmem:[%s680] sm:%s683] %v681
    %s685 = scalar_lea.vmem %s2, 116
    %s687 = sor.u32 255, 127
    %s688 = sand.u32 %s687, 85
    %s689 = sshrl.u32 %s688, 1
    %s690 = sor.u32 %s688, %s689
    %s691 = sand.u32 51, %s690
    %s692 = sshrl.u32 %s691, 2
    %s693 = sor.u32 %s691, %s692
    %s694 = sand.u32 15, %s693
    %v695 = vld [vmem:[%s685] sm:%s694]
    %v696 = vunpack.c.l.bf16 %v695
    %v697 = vunpack.c.h.bf16 %v695
    %v698 = vlaneseq
    %v699 = vand.u32 %v698, 127
    %vm701 = vcmp.lt.s32.totalorder %v699, 36
    %v702 = vsel %vm701, %v696, %v10
    %s703 = scalar_lea.vmem [#allocation7], 116
    %v704 = vpack.c.bf16 0.0, %v702
    %s706 = ssub.s32 16, 1
    %707 = vst [vmem:[%s703] sm:%s706] %v704
    %s708 = scalar_lea.vmem %s2, 120
    %s710 = sor.u32 255, 127
    %s711 = sand.u32 %s710, 85
    %s712 = sshrl.u32 %s711, 1
    %s713 = sor.u32 %s711, %s712
    %s714 = sand.u32 51, %s713
    %s715 = sshrl.u32 %s714, 2
    %s716 = sor.u32 %s714, %s715
    %s717 = sand.u32 15, %s716
    %v718 = vld [vmem:[%s708] sm:%s717]
    %v719 = vunpack.c.l.bf16 %v718
    %v720 = vunpack.c.h.bf16 %v718
    %v721 = vlaneseq
    %v722 = vand.u32 %v721, 127
    %vm724 = vcmp.lt.s32.totalorder %v722, 36
    %v725 = vsel %vm724, %v719, %v10
    %s726 = scalar_lea.vmem [#allocation7], 120
    %v727 = vpack.c.bf16 0.0, %v725
    %s729 = ssub.s32 16, 1
    %730 = vst [vmem:[%s726] sm:%s729] %v727
    %s731 = scalar_lea.vmem %s2, 124
    %s733 = sor.u32 255, 127
    %s734 = sand.u32 %s733, 85
    %s735 = sshrl.u32 %s734, 1
    %s736 = sor.u32 %s734, %s735
    %s737 = sand.u32 51, %s736
    %s738 = sshrl.u32 %s737, 2
    %s739 = sor.u32 %s737, %s738
    %s740 = sand.u32 15, %s739
    %v741 = vld [vmem:[%s731] sm:%s740]
    %v742 = vunpack.c.l.bf16 %v741
    %v743 = vunpack.c.h.bf16 %v741
    %v744 = vlaneseq
    %v745 = vand.u32 %v744, 127
    %vm747 = vcmp.lt.s32.totalorder %v745, 36
    %v748 = vsel %vm747, %v742, %v10
    %s749 = scalar_lea.vmem [#allocation7], 124
    %v750 = vpack.c.bf16 0.0, %v748
    %s752 = ssub.s32 16, 1
    %753 = vst [vmem:[%s749] sm:%s752] %v750
    %s754 = scalar_lea.vmem %s2, 128
    %s756 = sor.u32 255, 127
    %s757 = sand.u32 %s756, 85
    %s758 = sshrl.u32 %s757, 1
    %s759 = sor.u32 %s757, %s758
    %s760 = sand.u32 51, %s759
    %s761 = sshrl.u32 %s760, 2
    %s762 = sor.u32 %s760, %s761
    %s763 = sand.u32 15, %s762
    %v764 = vld [vmem:[%s754] sm:%s763]
    %v765 = vunpack.c.l.bf16 %v764
    %v766 = vunpack.c.h.bf16 %v764
    %v767 = vlaneseq
    %v768 = vand.u32 %v767, 127
    %vm770 = vcmp.lt.s32.totalorder %v768, 36
    %v771 = vsel %vm770, %v765, %v10
    %s772 = scalar_lea.vmem [#allocation7], 128
    %v773 = vpack.c.bf16 0.0, %v771
    %s775 = ssub.s32 16, 1
    %776 = vst [vmem:[%s772] sm:%s775] %v773
    %s777 = scalar_lea.vmem %s2, 132
    %s779 = sor.u32 255, 127
    %s780 = sand.u32 %s779, 85
    %s781 = sshrl.u32 %s780, 1
    %s782 = sor.u32 %s780, %s781
    %s783 = sand.u32 51, %s782
    %s784 = sshrl.u32 %s783, 2
    %s785 = sor.u32 %s783, %s784
    %s786 = sand.u32 15, %s785
    %v787 = vld [vmem:[%s777] sm:%s786]
    %v788 = vunpack.c.l.bf16 %v787
    %v789 = vunpack.c.h.bf16 %v787
    %v790 = vlaneseq
    %v791 = vand.u32 %v790, 127
    %vm793 = vcmp.lt.s32.totalorder %v791, 36
    %v794 = vsel %vm793, %v788, %v10
    %s795 = scalar_lea.vmem [#allocation7], 132
    %v796 = vpack.c.bf16 0.0, %v794
    %s798 = ssub.s32 16, 1
    %799 = vst [vmem:[%s795] sm:%s798] %v796
    %s800 = scalar_lea.vmem %s2, 136
    %s802 = sor.u32 255, 127
    %s803 = sand.u32 %s802, 85
    %s804 = sshrl.u32 %s803, 1
    %s805 = sor.u32 %s803, %s804
    %s806 = sand.u32 51, %s805
    %s807 = sshrl.u32 %s806, 2
    %s808 = sor.u32 %s806, %s807
    %s809 = sand.u32 15, %s808
    %v810 = vld [vmem:[%s800] sm:%s809]
    %v811 = vunpack.c.l.bf16 %v810
    %v812 = vunpack.c.h.bf16 %v810
    %v813 = vlaneseq
    %v814 = vand.u32 %v813, 127
    %vm816 = vcmp.lt.s32.totalorder %v814, 36
    %v817 = vsel %vm816, %v811, %v10
    %s818 = scalar_lea.vmem [#allocation7], 136
    %v819 = vpack.c.bf16 0.0, %v817
    %s821 = ssub.s32 16, 1
    %822 = vst [vmem:[%s818] sm:%s821] %v819
    %s823 = scalar_lea.vmem %s2, 140
    %s825 = sor.u32 255, 127
    %s826 = sand.u32 %s825, 85
    %s827 = sshrl.u32 %s826, 1
    %s828 = sor.u32 %s826, %s827
    %s829 = sand.u32 51, %s828
    %s830 = sshrl.u32 %s829, 2
    %s831 = sor.u32 %s829, %s830
    %s832 = sand.u32 15, %s831
    %v833 = vld [vmem:[%s823] sm:%s832]
    %v834 = vunpack.c.l.bf16 %v833
    %v835 = vunpack.c.h.bf16 %v833
    %v836 = vlaneseq
    %v837 = vand.u32 %v836, 127
    %vm839 = vcmp.lt.s32.totalorder %v837, 36
    %v840 = vsel %vm839, %v834, %v10
    %s841 = scalar_lea.vmem [#allocation7], 140
    %v842 = vpack.c.bf16 0.0, %v840
    %s844 = ssub.s32 16, 1
    %845 = vst [vmem:[%s841] sm:%s844] %v842
    %s846 = scalar_lea.vmem %s2, 144
    %s848 = sor.u32 255, 127
    %s849 = sand.u32 %s848, 85
    %s850 = sshrl.u32 %s849, 1
    %s851 = sor.u32 %s849, %s850
    %s852 = sand.u32 51, %s851
    %s853 = sshrl.u32 %s852, 2
    %s854 = sor.u32 %s852, %s853
    %s855 = sand.u32 15, %s854
    %v856 = vld [vmem:[%s846] sm:%s855]
    %v857 = vunpack.c.l.bf16 %v856
    %v858 = vunpack.c.h.bf16 %v856
    %v859 = vlaneseq
    %v860 = vand.u32 %v859, 127
    %vm862 = vcmp.lt.s32.totalorder %v860, 36
    %v863 = vsel %vm862, %v857, %v10
    %s864 = scalar_lea.vmem [#allocation7], 144
    %v865 = vpack.c.bf16 0.0, %v863
    %s867 = ssub.s32 16, 1
    %868 = vst [vmem:[%s864] sm:%s867] %v865
    %s869 = scalar_lea.vmem %s2, 148
    %s871 = sor.u32 255, 127
    %s872 = sand.u32 %s871, 85
    %s873 = sshrl.u32 %s872, 1
    %s874 = sor.u32 %s872, %s873
    %s875 = sand.u32 51, %s874
    %s876 = sshrl.u32 %s875, 2
    %s877 = sor.u32 %s875, %s876
    %s878 = sand.u32 15, %s877
    %v879 = vld [vmem:[%s869] sm:%s878]
    %v880 = vunpack.c.l.bf16 %v879
    %v881 = vunpack.c.h.bf16 %v879
    %v882 = vlaneseq
    %v883 = vand.u32 %v882, 127
    %vm885 = vcmp.lt.s32.totalorder %v883, 36
    %v886 = vsel %vm885, %v880, %v10
    %s887 = scalar_lea.vmem [#allocation7], 148
    %v888 = vpack.c.bf16 0.0, %v886
    %s890 = ssub.s32 16, 1
    %891 = vst [vmem:[%s887] sm:%s890] %v888
    %s892 = scalar_lea.vmem %s2, 152
    %s894 = sor.u32 255, 127
    %s895 = sand.u32 %s894, 85
    %s896 = sshrl.u32 %s895, 1
    %s897 = sor.u32 %s895, %s896
    %s898 = sand.u32 51, %s897
    %s899 = sshrl.u32 %s898, 2
    %s900 = sor.u32 %s898, %s899
    %s901 = sand.u32 15, %s900
    %v902 = vld [vmem:[%s892] sm:%s901]
    %v903 = vunpack.c.l.bf16 %v902
    %v904 = vunpack.c.h.bf16 %v902
    %v905 = vlaneseq
    %v906 = vand.u32 %v905, 127
    %vm908 = vcmp.lt.s32.totalorder %v906, 36
    %v909 = vsel %vm908, %v903, %v10
    %s910 = scalar_lea.vmem [#allocation7], 152
    %v911 = vpack.c.bf16 0.0, %v909
    %s913 = ssub.s32 16, 1
    %914 = vst [vmem:[%s910] sm:%s913] %v911
    %s915 = scalar_lea.vmem %s2, 156
    %s917 = sor.u32 255, 127
    %s918 = sand.u32 %s917, 85
    %s919 = sshrl.u32 %s918, 1
    %s920 = sor.u32 %s918, %s919
    %s921 = sand.u32 51, %s920
    %s922 = sshrl.u32 %s921, 2
    %s923 = sor.u32 %s921, %s922
    %s924 = sand.u32 15, %s923
    %v925 = vld [vmem:[%s915] sm:%s924]
    %v926 = vunpack.c.l.bf16 %v925
    %v927 = vunpack.c.h.bf16 %v925
    %v928 = vlaneseq
    %v929 = vand.u32 %v928, 127
    %vm931 = vcmp.lt.s32.totalorder %v929, 36
    %v932 = vsel %vm931, %v926, %v10
    %s933 = scalar_lea.vmem [#allocation7], 156
    %v934 = vpack.c.bf16 0.0, %v932
    %s936 = ssub.s32 16, 1
    %937 = vst [vmem:[%s933] sm:%s936] %v934
    %s938 = scalar_lea.vmem %s2, 160
    %s940 = sor.u32 255, 127
    %s941 = sand.u32 %s940, 85
    %s942 = sshrl.u32 %s941, 1
    %s943 = sor.u32 %s941, %s942
    %s944 = sand.u32 51, %s943
    %s945 = sshrl.u32 %s944, 2
    %s946 = sor.u32 %s944, %s945
    %s947 = sand.u32 15, %s946
    %v948 = vld [vmem:[%s938] sm:%s947]
    %v949 = vunpack.c.l.bf16 %v948
    %v950 = vunpack.c.h.bf16 %v948
    %v951 = vlaneseq
    %v952 = vand.u32 %v951, 127
    %vm954 = vcmp.lt.s32.totalorder %v952, 36
    %v955 = vsel %vm954, %v949, %v10
    %s956 = scalar_lea.vmem [#allocation7], 160
    %v957 = vpack.c.bf16 0.0, %v955
    %s959 = ssub.s32 16, 1
    %960 = vst [vmem:[%s956] sm:%s959] %v957
    %s961 = scalar_lea.vmem %s2, 164
    %s963 = sor.u32 255, 127
    %s964 = sand.u32 %s963, 85
    %s965 = sshrl.u32 %s964, 1
    %s966 = sor.u32 %s964, %s965
    %s967 = sand.u32 51, %s966
    %s968 = sshrl.u32 %s967, 2
    %s969 = sor.u32 %s967, %s968
    %s970 = sand.u32 15, %s969
    %v971 = vld [vmem:[%s961] sm:%s970]
    %v972 = vunpack.c.l.bf16 %v971
    %v973 = vunpack.c.h.bf16 %v971
    %v974 = vlaneseq
    %v975 = vand.u32 %v974, 127
    %vm977 = vcmp.lt.s32.totalorder %v975, 36
    %v978 = vsel %vm977, %v972, %v10
    %s979 = scalar_lea.vmem [#allocation7], 164
    %v980 = vpack.c.bf16 0.0, %v978
    %s982 = ssub.s32 16, 1
    %983 = vst [vmem:[%s979] sm:%s982] %v980
    %s984 = scalar_lea.vmem %s2, 168
    %s986 = sor.u32 255, 127
    %s987 = sand.u32 %s986, 85
    %s988 = sshrl.u32 %s987, 1
    %s989 = sor.u32 %s987, %s988
    %s990 = sand.u32 51, %s989
    %s991 = sshrl.u32 %s990, 2
    %s992 = sor.u32 %s990, %s991
    %s993 = sand.u32 15, %s992
    %v994 = vld [vmem:[%s984] sm:%s993]
    %v995 = vunpack.c.l.bf16 %v994
    %v996 = vunpack.c.h.bf16 %v994
    %v997 = vlaneseq
    %v998 = vand.u32 %v997, 127
    %vm1000 = vcmp.lt.s32.totalorder %v998, 36
    %v1001 = vsel %vm1000, %v995, %v10
    %s1002 = scalar_lea.vmem [#allocation7], 168
    %v1003 = vpack.c.bf16 0.0, %v1001
    %s1005 = ssub.s32 16, 1
    %1006 = vst [vmem:[%s1002] sm:%s1005] %v1003
    %s1007 = scalar_lea.vmem %s2, 172
    %s1009 = sor.u32 255, 127
    %s1010 = sand.u32 %s1009, 85
    %s1011 = sshrl.u32 %s1010, 1
    %s1012 = sor.u32 %s1010, %s1011
    %s1013 = sand.u32 51, %s1012
    %s1014 = sshrl.u32 %s1013, 2
    %s1015 = sor.u32 %s1013, %s1014
    %s1016 = sand.u32 15, %s1015
    %v1017 = vld [vmem:[%s1007] sm:%s1016]
    %v1018 = vunpack.c.l.bf16 %v1017
    %v1019 = vunpack.c.h.bf16 %v1017
    %v1020 = vlaneseq
    %v1021 = vand.u32 %v1020, 127
    %vm1023 = vcmp.lt.s32.totalorder %v1021, 36
    %v1024 = vsel %vm1023, %v1018, %v10
    %s1025 = scalar_lea.vmem [#allocation7], 172
    %v1026 = vpack.c.bf16 0.0, %v1024
    %s1028 = ssub.s32 16, 1
    %1029 = vst [vmem:[%s1025] sm:%s1028] %v1026
    %s1030 = scalar_lea.vmem %s2, 176
    %s1032 = sor.u32 255, 127
    %s1033 = sand.u32 %s1032, 85
    %s1034 = sshrl.u32 %s1033, 1
    %s1035 = sor.u32 %s1033, %s1034
    %s1036 = sand.u32 51, %s1035
    %s1037 = sshrl.u32 %s1036, 2
    %s1038 = sor.u32 %s1036, %s1037
    %s1039 = sand.u32 15, %s1038
    %v1040 = vld [vmem:[%s1030] sm:%s1039]
    %v1041 = vunpack.c.l.bf16 %v1040
    %v1042 = vunpack.c.h.bf16 %v1040
    %v1043 = vlaneseq
    %v1044 = vand.u32 %v1043, 127
    %vm1046 = vcmp.lt.s32.totalorder %v1044, 36
    %v1047 = vsel %vm1046, %v1041, %v10
    %s1048 = scalar_lea.vmem [#allocation7], 176
    %v1049 = vpack.c.bf16 0.0, %v1047
    %s1051 = ssub.s32 16, 1
    %1052 = vst [vmem:[%s1048] sm:%s1051] %v1049
    %s1053 = scalar_lea.vmem %s2, 180
    %s1055 = sor.u32 255, 127
    %s1056 = sand.u32 %s1055, 85
    %s1057 = sshrl.u32 %s1056, 1
    %s1058 = sor.u32 %s1056, %s1057
    %s1059 = sand.u32 51, %s1058
    %s1060 = sshrl.u32 %s1059, 2
    %s1061 = sor.u32 %s1059, %s1060
    %s1062 = sand.u32 15, %s1061
    %v1063 = vld [vmem:[%s1053] sm:%s1062]
    %v1064 = vunpack.c.l.bf16 %v1063
    %v1065 = vunpack.c.h.bf16 %v1063
    %v1066 = vlaneseq
    %v1067 = vand.u32 %v1066, 127
    %vm1069 = vcmp.lt.s32.totalorder %v1067, 36
    %v1070 = vsel %vm1069, %v1064, %v10
    %s1071 = scalar_lea.vmem [#allocation7], 180
    %v1072 = vpack.c.bf16 0.0, %v1070
    %s1074 = ssub.s32 16, 1
    %1075 = vst [vmem:[%s1071] sm:%s1074] %v1072
    %s1076 = scalar_lea.vmem %s2, 184
    %s1078 = sor.u32 255, 127
    %s1079 = sand.u32 %s1078, 85
    %s1080 = sshrl.u32 %s1079, 1
    %s1081 = sor.u32 %s1079, %s1080
    %s1082 = sand.u32 51, %s1081
    %s1083 = sshrl.u32 %s1082, 2
    %s1084 = sor.u32 %s1082, %s1083
    %s1085 = sand.u32 15, %s1084
    %v1086 = vld [vmem:[%s1076] sm:%s1085]
    %v1087 = vunpack.c.l.bf16 %v1086
    %v1088 = vunpack.c.h.bf16 %v1086
    %v1089 = vlaneseq
    %v1090 = vand.u32 %v1089, 127
    %vm1092 = vcmp.lt.s32.totalorder %v1090, 36
    %v1093 = vsel %vm1092, %v1087, %v10
    %s1094 = scalar_lea.vmem [#allocation7], 184
    %v1095 = vpack.c.bf16 0.0, %v1093
    %s1097 = ssub.s32 16, 1
    %1098 = vst [vmem:[%s1094] sm:%s1097] %v1095
    %s1099 = scalar_lea.vmem %s2, 188
    %s1101 = sor.u32 255, 127
    %s1102 = sand.u32 %s1101, 85
    %s1103 = sshrl.u32 %s1102, 1
    %s1104 = sor.u32 %s1102, %s1103
    %s1105 = sand.u32 51, %s1104
    %s1106 = sshrl.u32 %s1105, 2
    %s1107 = sor.u32 %s1105, %s1106
    %s1108 = sand.u32 15, %s1107
    %v1109 = vld [vmem:[%s1099] sm:%s1108]
    %v1110 = vunpack.c.l.bf16 %v1109
    %v1111 = vunpack.c.h.bf16 %v1109
    %v1112 = vlaneseq
    %v1113 = vand.u32 %v1112, 127
    %vm1115 = vcmp.lt.s32.totalorder %v1113, 36
    %v1116 = vsel %vm1115, %v1110, %v10
    %s1117 = scalar_lea.vmem [#allocation7], 188
    %v1118 = vpack.c.bf16 0.0, %v1116
    %s1120 = ssub.s32 16, 1
    %1121 = vst [vmem:[%s1117] sm:%s1120] %v1118
    %s1122 = scalar_lea.vmem %s2, 192
    %s1124 = sor.u32 255, 127
    %s1125 = sand.u32 %s1124, 85
    %s1126 = sshrl.u32 %s1125, 1
    %s1127 = sor.u32 %s1125, %s1126
    %s1128 = sand.u32 51, %s1127
    %s1129 = sshrl.u32 %s1128, 2
    %s1130 = sor.u32 %s1128, %s1129
    %s1131 = sand.u32 15, %s1130
    %v1132 = vld [vmem:[%s1122] sm:%s1131]
    %v1133 = vunpack.c.l.bf16 %v1132
    %v1134 = vunpack.c.h.bf16 %v1132
    %v1135 = vlaneseq
    %v1136 = vand.u32 %v1135, 127
    %vm1138 = vcmp.lt.s32.totalorder %v1136, 36
    %v1139 = vsel %vm1138, %v1133, %v10
    %s1140 = scalar_lea.vmem [#allocation7], 192
    %v1141 = vpack.c.bf16 0.0, %v1139
    %s1143 = ssub.s32 16, 1
    %1144 = vst [vmem:[%s1140] sm:%s1143] %v1141
    %s1145 = scalar_lea.vmem %s2, 196
    %s1147 = sor.u32 255, 127
    %s1148 = sand.u32 %s1147, 85
    %s1149 = sshrl.u32 %s1148, 1
    %s1150 = sor.u32 %s1148, %s1149
    %s1151 = sand.u32 51, %s1150
    %s1152 = sshrl.u32 %s1151, 2
    %s1153 = sor.u32 %s1151, %s1152
    %s1154 = sand.u32 15, %s1153
    %v1155 = vld [vmem:[%s1145] sm:%s1154]
    %v1156 = vunpack.c.l.bf16 %v1155
    %v1157 = vunpack.c.h.bf16 %v1155
    %v1158 = vlaneseq
    %v1159 = vand.u32 %v1158, 127
    %vm1161 = vcmp.lt.s32.totalorder %v1159, 36
    %v1162 = vsel %vm1161, %v1156, %v10
    %s1163 = scalar_lea.vmem [#allocation7], 196
    %v1164 = vpack.c.bf16 0.0, %v1162
    %s1166 = ssub.s32 16, 1
    %1167 = vst [vmem:[%s1163] sm:%s1166] %v1164
    %s1168 = scalar_lea.vmem %s2, 200
    %s1170 = sor.u32 255, 127
    %s1171 = sand.u32 %s1170, 85
    %s1172 = sshrl.u32 %s1171, 1
    %s1173 = sor.u32 %s1171, %s1172
    %s1174 = sand.u32 51, %s1173
    %s1175 = sshrl.u32 %s1174, 2
    %s1176 = sor.u32 %s1174, %s1175
    %s1177 = sand.u32 15, %s1176
    %v1178 = vld [vmem:[%s1168] sm:%s1177]
    %v1179 = vunpack.c.l.bf16 %v1178
    %v1180 = vunpack.c.h.bf16 %v1178
    %v1181 = vlaneseq
    %v1182 = vand.u32 %v1181, 127
    %vm1184 = vcmp.lt.s32.totalorder %v1182, 36
    %v1185 = vsel %vm1184, %v1179, %v10
    %s1186 = scalar_lea.vmem [#allocation7], 200
    %v1187 = vpack.c.bf16 0.0, %v1185
    %s1189 = ssub.s32 16, 1
    %1190 = vst [vmem:[%s1186] sm:%s1189] %v1187
    %s1191 = scalar_lea.vmem %s2, 204
    %s1193 = sor.u32 255, 127
    %s1194 = sand.u32 %s1193, 85
    %s1195 = sshrl.u32 %s1194, 1
    %s1196 = sor.u32 %s1194, %s1195
    %s1197 = sand.u32 51, %s1196
    %s1198 = sshrl.u32 %s1197, 2
    %s1199 = sor.u32 %s1197, %s1198
    %s1200 = sand.u32 15, %s1199
    %v1201 = vld [vmem:[%s1191] sm:%s1200]
    %v1202 = vunpack.c.l.bf16 %v1201
    %v1203 = vunpack.c.h.bf16 %v1201
    %v1204 = vlaneseq
    %v1205 = vand.u32 %v1204, 127
    %vm1207 = vcmp.lt.s32.totalorder %v1205, 36
    %v1208 = vsel %vm1207, %v1202, %v10
    %s1209 = scalar_lea.vmem [#allocation7], 204
    %v1210 = vpack.c.bf16 0.0, %v1208
    %s1212 = ssub.s32 16, 1
    %1213 = vst [vmem:[%s1209] sm:%s1212] %v1210
    %s1214 = scalar_lea.vmem %s2, 208
    %s1216 = sor.u32 255, 127
    %s1217 = sand.u32 %s1216, 85
    %s1218 = sshrl.u32 %s1217, 1
    %s1219 = sor.u32 %s1217, %s1218
    %s1220 = sand.u32 51, %s1219
    %s1221 = sshrl.u32 %s1220, 2
    %s1222 = sor.u32 %s1220, %s1221
    %s1223 = sand.u32 15, %s1222
    %v1224 = vld [vmem:[%s1214] sm:%s1223]
    %v1225 = vunpack.c.l.bf16 %v1224
    %v1226 = vunpack.c.h.bf16 %v1224
    %v1227 = vlaneseq
    %v1228 = vand.u32 %v1227, 127
    %vm1230 = vcmp.lt.s32.totalorder %v1228, 36
    %v1231 = vsel %vm1230, %v1225, %v10
    %s1232 = scalar_lea.vmem [#allocation7], 208
    %v1233 = vpack.c.bf16 0.0, %v1231
    %s1235 = ssub.s32 16, 1
    %1236 = vst [vmem:[%s1232] sm:%s1235] %v1233
    %s1237 = scalar_lea.vmem %s2, 212
    %s1239 = sor.u32 255, 127
    %s1240 = sand.u32 %s1239, 85
    %s1241 = sshrl.u32 %s1240, 1
    %s1242 = sor.u32 %s1240, %s1241
    %s1243 = sand.u32 51, %s1242
    %s1244 = sshrl.u32 %s1243, 2
    %s1245 = sor.u32 %s1243, %s1244
    %s1246 = sand.u32 15, %s1245
    %v1247 = vld [vmem:[%s1237] sm:%s1246]
    %v1248 = vunpack.c.l.bf16 %v1247
    %v1249 = vunpack.c.h.bf16 %v1247
    %v1250 = vlaneseq
    %v1251 = vand.u32 %v1250, 127
    %vm1253 = vcmp.lt.s32.totalorder %v1251, 36
    %v1254 = vsel %vm1253, %v1248, %v10
    %s1255 = scalar_lea.vmem [#allocation7], 212
    %v1256 = vpack.c.bf16 0.0, %v1254
    %s1258 = ssub.s32 16, 1
    %1259 = vst [vmem:[%s1255] sm:%s1258] %v1256
    %s1260 = scalar_lea.vmem %s2, 216
    %s1262 = sor.u32 255, 127
    %s1263 = sand.u32 %s1262, 85
    %s1264 = sshrl.u32 %s1263, 1
    %s1265 = sor.u32 %s1263, %s1264
    %s1266 = sand.u32 51, %s1265
    %s1267 = sshrl.u32 %s1266, 2
    %s1268 = sor.u32 %s1266, %s1267
    %s1269 = sand.u32 15, %s1268
    %v1270 = vld [vmem:[%s1260] sm:%s1269]
    %v1271 = vunpack.c.l.bf16 %v1270
    %v1272 = vunpack.c.h.bf16 %v1270
    %v1273 = vlaneseq
    %v1274 = vand.u32 %v1273, 127
    %vm1276 = vcmp.lt.s32.totalorder %v1274, 36
    %v1277 = vsel %vm1276, %v1271, %v10
    %s1278 = scalar_lea.vmem [#allocation7], 216
    %v1279 = vpack.c.bf16 0.0, %v1277
    %s1281 = ssub.s32 16, 1
    %1282 = vst [vmem:[%s1278] sm:%s1281] %v1279
    %s1283 = scalar_lea.vmem %s2, 220
    %s1285 = sor.u32 255, 127
    %s1286 = sand.u32 %s1285, 85
    %s1287 = sshrl.u32 %s1286, 1
    %s1288 = sor.u32 %s1286, %s1287
    %s1289 = sand.u32 51, %s1288
    %s1290 = sshrl.u32 %s1289, 2
    %s1291 = sor.u32 %s1289, %s1290
    %s1292 = sand.u32 15, %s1291
    %v1293 = vld [vmem:[%s1283] sm:%s1292]
    %v1294 = vunpack.c.l.bf16 %v1293
    %v1295 = vunpack.c.h.bf16 %v1293
    %v1296 = vlaneseq
    %v1297 = vand.u32 %v1296, 127
    %vm1299 = vcmp.lt.s32.totalorder %v1297, 36
    %v1300 = vsel %vm1299, %v1294, %v10
    %s1301 = scalar_lea.vmem [#allocation7], 220
    %v1302 = vpack.c.bf16 0.0, %v1300
    %s1304 = ssub.s32 16, 1
    %1305 = vst [vmem:[%s1301] sm:%s1304] %v1302
    %s1306 = scalar_lea.vmem %s2, 224
    %s1308 = sor.u32 255, 127
    %s1309 = sand.u32 %s1308, 85
    %s1310 = sshrl.u32 %s1309, 1
    %s1311 = sor.u32 %s1309, %s1310
    %s1312 = sand.u32 51, %s1311
    %s1313 = sshrl.u32 %s1312, 2
    %s1314 = sor.u32 %s1312, %s1313
    %s1315 = sand.u32 15, %s1314
    %v1316 = vld [vmem:[%s1306] sm:%s1315]
    %v1317 = vunpack.c.l.bf16 %v1316
    %v1318 = vunpack.c.h.bf16 %v1316
    %v1319 = vlaneseq
    %v1320 = vand.u32 %v1319, 127
    %vm1322 = vcmp.lt.s32.totalorder %v1320, 36
    %v1323 = vsel %vm1322, %v1317, %v10
    %s1324 = scalar_lea.vmem [#allocation7], 224
    %v1325 = vpack.c.bf16 0.0, %v1323
    %s1327 = ssub.s32 16, 1
    %1328 = vst [vmem:[%s1324] sm:%s1327] %v1325
    %s1329 = scalar_lea.vmem %s2, 228
    %s1331 = sor.u32 255, 127
    %s1332 = sand.u32 %s1331, 85
    %s1333 = sshrl.u32 %s1332, 1
    %s1334 = sor.u32 %s1332, %s1333
    %s1335 = sand.u32 51, %s1334
    %s1336 = sshrl.u32 %s1335, 2
    %s1337 = sor.u32 %s1335, %s1336
    %s1338 = sand.u32 15, %s1337
    %v1339 = vld [vmem:[%s1329] sm:%s1338]
    %v1340 = vunpack.c.l.bf16 %v1339
    %v1341 = vunpack.c.h.bf16 %v1339
    %v1342 = vlaneseq
    %v1343 = vand.u32 %v1342, 127
    %vm1345 = vcmp.lt.s32.totalorder %v1343, 36
    %v1346 = vsel %vm1345, %v1340, %v10
    %s1347 = scalar_lea.vmem [#allocation7], 228
    %v1348 = vpack.c.bf16 0.0, %v1346
    %s1350 = ssub.s32 16, 1
    %1351 = vst [vmem:[%s1347] sm:%s1350] %v1348
    %s1352 = scalar_lea.vmem %s2, 232
    %s1354 = sor.u32 255, 127
    %s1355 = sand.u32 %s1354, 85
    %s1356 = sshrl.u32 %s1355, 1
    %s1357 = sor.u32 %s1355, %s1356
    %s1358 = sand.u32 51, %s1357
    %s1359 = sshrl.u32 %s1358, 2
    %s1360 = sor.u32 %s1358, %s1359
    %s1361 = sand.u32 15, %s1360
    %v1362 = vld [vmem:[%s1352] sm:%s1361]
    %v1363 = vunpack.c.l.bf16 %v1362
    %v1364 = vunpack.c.h.bf16 %v1362
    %v1365 = vlaneseq
    %v1366 = vand.u32 %v1365, 127
    %vm1368 = vcmp.lt.s32.totalorder %v1366, 36
    %v1369 = vsel %vm1368, %v1363, %v10
    %s1370 = scalar_lea.vmem [#allocation7], 232
    %v1371 = vpack.c.bf16 0.0, %v1369
    %s1373 = ssub.s32 16, 1
    %1374 = vst [vmem:[%s1370] sm:%s1373] %v1371
    %s1375 = scalar_lea.vmem %s2, 236
    %s1377 = sor.u32 255, 127
    %s1378 = sand.u32 %s1377, 85
    %s1379 = sshrl.u32 %s1378, 1
    %s1380 = sor.u32 %s1378, %s1379
    %s1381 = sand.u32 51, %s1380
    %s1382 = sshrl.u32 %s1381, 2
    %s1383 = sor.u32 %s1381, %s1382
    %s1384 = sand.u32 15, %s1383
    %v1385 = vld [vmem:[%s1375] sm:%s1384]
    %v1386 = vunpack.c.l.bf16 %v1385
    %v1387 = vunpack.c.h.bf16 %v1385
    %v1388 = vlaneseq
    %v1389 = vand.u32 %v1388, 127
    %vm1391 = vcmp.lt.s32.totalorder %v1389, 36
    %v1392 = vsel %vm1391, %v1386, %v10
    %s1393 = scalar_lea.vmem [#allocation7], 236
    %v1394 = vpack.c.bf16 0.0, %v1392
    %s1396 = ssub.s32 16, 1
    %1397 = vst [vmem:[%s1393] sm:%s1396] %v1394
    %s1398 = scalar_lea.vmem %s2, 240
    %s1400 = sor.u32 255, 127
    %s1401 = sand.u32 %s1400, 85
    %s1402 = sshrl.u32 %s1401, 1
    %s1403 = sor.u32 %s1401, %s1402
    %s1404 = sand.u32 51, %s1403
    %s1405 = sshrl.u32 %s1404, 2
    %s1406 = sor.u32 %s1404, %s1405
    %s1407 = sand.u32 15, %s1406
    %v1408 = vld [vmem:[%s1398] sm:%s1407]
    %v1409 = vunpack.c.l.bf16 %v1408
    %v1410 = vunpack.c.h.bf16 %v1408
    %v1411 = vlaneseq
    %v1412 = vand.u32 %v1411, 127
    %vm1414 = vcmp.lt.s32.totalorder %v1412, 36
    %v1415 = vsel %vm1414, %v1409, %v10
    %s1416 = scalar_lea.vmem [#allocation7], 240
    %v1417 = vpack.c.bf16 0.0, %v1415
    %s1419 = ssub.s32 16, 1
    %1420 = vst [vmem:[%s1416] sm:%s1419] %v1417
    %s1421 = scalar_lea.vmem %s2, 244
    %s1423 = sor.u32 255, 127
    %s1424 = sand.u32 %s1423, 85
    %s1425 = sshrl.u32 %s1424, 1
    %s1426 = sor.u32 %s1424, %s1425
    %s1427 = sand.u32 51, %s1426
    %s1428 = sshrl.u32 %s1427, 2
    %s1429 = sor.u32 %s1427, %s1428
    %s1430 = sand.u32 15, %s1429
    %v1431 = vld [vmem:[%s1421] sm:%s1430]
    %v1432 = vunpack.c.l.bf16 %v1431
    %v1433 = vunpack.c.h.bf16 %v1431
    %v1434 = vlaneseq
    %v1435 = vand.u32 %v1434, 127
    %vm1437 = vcmp.lt.s32.totalorder %v1435, 36
    %v1438 = vsel %vm1437, %v1432, %v10
    %s1439 = scalar_lea.vmem [#allocation7], 244
    %v1440 = vpack.c.bf16 0.0, %v1438
    %s1442 = ssub.s32 16, 1
    %1443 = vst [vmem:[%s1439] sm:%s1442] %v1440
    %s1444 = scalar_lea.vmem %s2, 248
    %s1446 = sor.u32 255, 127
    %s1447 = sand.u32 %s1446, 85
    %s1448 = sshrl.u32 %s1447, 1
    %s1449 = sor.u32 %s1447, %s1448
    %s1450 = sand.u32 51, %s1449
    %s1451 = sshrl.u32 %s1450, 2
    %s1452 = sor.u32 %s1450, %s1451
    %s1453 = sand.u32 15, %s1452
    %v1454 = vld [vmem:[%s1444] sm:%s1453]
    %v1455 = vunpack.c.l.bf16 %v1454
    %v1456 = vunpack.c.h.bf16 %v1454
    %v1457 = vlaneseq
    %v1458 = vand.u32 %v1457, 127
    %vm1460 = vcmp.lt.s32.totalorder %v1458, 36
    %v1461 = vsel %vm1460, %v1455, %v10
    %s1462 = scalar_lea.vmem [#allocation7], 248
    %v1463 = vpack.c.bf16 0.0, %v1461
    %s1465 = ssub.s32 16, 1
    %1466 = vst [vmem:[%s1462] sm:%s1465] %v1463
    %s1467 = scalar_lea.vmem %s2, 252
    %s1469 = sor.u32 255, 127
    %s1470 = sand.u32 %s1469, 85
    %s1471 = sshrl.u32 %s1470, 1
    %s1472 = sor.u32 %s1470, %s1471
    %s1473 = sand.u32 51, %s1472
    %s1474 = sshrl.u32 %s1473, 2
    %s1475 = sor.u32 %s1473, %s1474
    %s1476 = sand.u32 15, %s1475
    %v1477 = vld [vmem:[%s1467] sm:%s1476]
    %v1478 = vunpack.c.l.bf16 %v1477
    %v1479 = vunpack.c.h.bf16 %v1477
    %v1480 = vlaneseq
    %v1481 = vand.u32 %v1480, 127
    %vm1483 = vcmp.lt.s32.totalorder %v1481, 36
    %v1484 = vsel %vm1483, %v1478, %v10
    %s1485 = scalar_lea.vmem [#allocation7], 252
    %v1486 = vpack.c.bf16 0.0, %v1484
    %s1488 = ssub.s32 16, 1
    %1489 = vst [vmem:[%s1485] sm:%s1488] %v1486
    %v1490 = vld [vmem:[#allocation7] sm:$0xf]
    %v1491 = vld [vmem:[#allocation7 + $0x4] sm:$0xf]
    %v1492 = vld [vmem:[#allocation7 + $0x8] sm:$0xf]
    %v1493 = vld [vmem:[#allocation7 + $0xc] sm:$0xf]
    %v1494 = vld [vmem:[#allocation7 + $0x10] sm:$0xf]
    %v1495 = vld [vmem:[#allocation7 + $0x14] sm:$0xf]
    %v1496 = vld [vmem:[#allocation7 + $0x18] sm:$0xf]
    %v1497 = vld [vmem:[#allocation7 + $0x1c] sm:$0xf]
    %v1498 = vld [vmem:[#allocation7 + $0x20] sm:$0xf]
    %v1499 = vld [vmem:[#allocation7 + $0x24] sm:$0xf]
    %v1500 = vld [vmem:[#allocation7 + $0x28] sm:$0xf]
    %v1501 = vld [vmem:[#allocation7 + $0x2c] sm:$0xf]
    %v1502 = vld [vmem:[#allocation7 + $0x30] sm:$0xf]
    %v1503 = vld [vmem:[#allocation7 + $0x34] sm:$0xf]
    %v1504 = vld [vmem:[#allocation7 + $0x38] sm:$0xf]
    %v1505 = vld [vmem:[#allocation7 + $0x3c] sm:$0xf]
    %v1506 = vld [vmem:[#allocation7 + $0x40] sm:$0xf]
    %v1507 = vld [vmem:[#allocation7 + $0x44] sm:$0xf]
    %v1508 = vld [vmem:[#allocation7 + $0x48] sm:$0xf]
    %v1509 = vld [vmem:[#allocation7 + $0x4c] sm:$0xf]
    %v1510 = vld [vmem:[#allocation7 + $0x50] sm:$0xf]
    %v1511 = vld [vmem:[#allocation7 + $0x54] sm:$0xf]
    %v1512 = vld [vmem:[#allocation7 + $0x58] sm:$0xf]
    %v1513 = vld [vmem:[#allocation7 + $0x5c] sm:$0xf]
    %v1514 = vld [vmem:[#allocation7 + $0x60] sm:$0xf]
    %v1515 = vld [vmem:[#allocation7 + $0x64] sm:$0xf]
    %v1516 = vld [vmem:[#allocation7 + $0x68] sm:$0xf]
    %v1517 = vld [vmem:[#allocation7 + $0x6c] sm:$0xf]
    %v1518 = vld [vmem:[#allocation7 + $0x70] sm:$0xf]
    %v1519 = vld [vmem:[#allocation7 + $0x74] sm:$0xf]
    %v1520 = vld [vmem:[#allocation7 + $0x78] sm:$0xf]
    %v1521 = vld [vmem:[#allocation7 + $0x7c] sm:$0xf]
    %v1522 = vld [vmem:[#allocation7 + $0x80] sm:$0xf]
    %v1523 = vld [vmem:[#allocation7 + $0x84] sm:$0xf]
    %v1524 = vld [vmem:[#allocation7 + $0x88] sm:$0xf]
    %v1525 = vld [vmem:[#allocation7 + $0x8c] sm:$0xf]
    %v1526 = vld [vmem:[#allocation7 + $0x90] sm:$0xf]
    %v1527 = vld [vmem:[#allocation7 + $0x94] sm:$0xf]
    %v1528 = vld [vmem:[#allocation7 + $0x98] sm:$0xf]
    %v1529 = vld [vmem:[#allocation7 + $0x9c] sm:$0xf]
    %v1530 = vld [vmem:[#allocation7 + $0xa0] sm:$0xf]
    %v1531 = vld [vmem:[#allocation7 + $0xa4] sm:$0xf]
    %v1532 = vld [vmem:[#allocation7 + $0xa8] sm:$0xf]
    %v1533 = vld [vmem:[#allocation7 + $0xac] sm:$0xf]
    %v1534 = vld [vmem:[#allocation7 + $0xb0] sm:$0xf]
    %v1535 = vld [vmem:[#allocation7 + $0xb4] sm:$0xf]
    %v1536 = vld [vmem:[#allocation7 + $0xb8] sm:$0xf]
    %v1537 = vld [vmem:[#allocation7 + $0xbc] sm:$0xf]
    %v1538 = vld [vmem:[#allocation7 + $0xc0] sm:$0xf]
    %v1539 = vld [vmem:[#allocation7 + $0xc4] sm:$0xf]
    %v1540 = vld [vmem:[#allocation7 + $0xc8] sm:$0xf]
    %v1541 = vld [vmem:[#allocation7 + $0xcc] sm:$0xf]
    %v1542 = vld [vmem:[#allocation7 + $0xd0] sm:$0xf]
    %v1543 = vld [vmem:[#allocation7 + $0xd4] sm:$0xf]
    %v1544 = vld [vmem:[#allocation7 + $0xd8] sm:$0xf]
    %v1545 = vld [vmem:[#allocation7 + $0xdc] sm:$0xf]
    %v1546 = vld [vmem:[#allocation7 + $0xe0] sm:$0xf]
    %v1547 = vld [vmem:[#allocation7 + $0xe4] sm:$0xf]
    %v1548 = vld [vmem:[#allocation7 + $0xe8] sm:$0xf]
    %v1549 = vld [vmem:[#allocation7 + $0xec] sm:$0xf]
    %v1550 = vld [vmem:[#allocation7 + $0xf0] sm:$0xf]
    %v1551 = vld [vmem:[#allocation7 + $0xf4] sm:$0xf]
    %v1552 = vld [vmem:[#allocation7 + $0xf8] sm:$0xf]
    %v1553 = vld [vmem:[#allocation7 + $0xfc] sm:$0xf]
    %v1554 = vld [vmem:[%s0] sm:$0xf]
    %v1555 = vld [vmem:[%s0 + $0x4] sm:$0xf]
    %v1556 = vld [vmem:[%s0 + $0x8] sm:$0xf]
    %v1557 = vld [vmem:[%s0 + $0xc] sm:$0xf]
    %v1558 = vld [vmem:[%s0 + $0x10] sm:$0xf]
    %v1559 = vld [vmem:[%s0 + $0x14] sm:$0xf]
    %v1560 = vld [vmem:[%s0 + $0x18] sm:$0xf]
    %v1561 = vld [vmem:[%s0 + $0x1c] sm:$0xf]
    %v1562 = vld [vmem:[%s0 + $0x20] sm:$0xf]
    %v1563 = vld [vmem:[%s0 + $0x24] sm:$0xf]
    %v1564 = vld [vmem:[%s0 + $0x28] sm:$0xf]
    %v1565 = vld [vmem:[%s0 + $0x2c] sm:$0xf]
    %v1566 = vld [vmem:[%s0 + $0x30] sm:$0xf]
    %v1567 = vld [vmem:[%s0 + $0x34] sm:$0xf]
    %v1568 = vld [vmem:[%s0 + $0x38] sm:$0xf]
    %v1569 = vld [vmem:[%s0 + $0x3c] sm:$0xf]
    %v1634 = vunpack.c.l.b16 %v1490
    %v1635 = vunpack.c.l.b16 %v1491
    %v1636 = vunpack.c.l.b16 %v1492
    %v1637 = vunpack.c.l.b16 %v1493
    %v1638 = vunpack.c.l.b16 %v1494
    %v1639 = vunpack.c.l.b16 %v1495
    %v1640 = vunpack.c.l.b16 %v1496
    %v1641 = vunpack.c.l.b16 %v1497
    %v1642 = vunpack.c.l.b16 %v1498
    %v1643 = vunpack.c.l.b16 %v1499
    %v1644 = vunpack.c.l.b16 %v1500
    %v1645 = vunpack.c.l.b16 %v1501
    %v1646 = vunpack.c.l.b16 %v1502
    %v1647 = vunpack.c.l.b16 %v1503
    %v1648 = vunpack.c.l.b16 %v1504
    %v1649 = vunpack.c.l.b16 %v1505
    %v1650 = vunpack.c.l.b16 %v1506
    %v1651 = vunpack.c.l.b16 %v1507
    %v1652 = vunpack.c.l.b16 %v1508
    %v1653 = vunpack.c.l.b16 %v1509
    %v1654 = vunpack.c.l.b16 %v1510
    %v1655 = vunpack.c.l.b16 %v1511
    %v1656 = vunpack.c.l.b16 %v1512
    %v1657 = vunpack.c.l.b16 %v1513
    %v1658 = vunpack.c.l.b16 %v1514
    %v1659 = vunpack.c.l.b16 %v1515
    %v1660 = vunpack.c.l.b16 %v1516
    %v1661 = vunpack.c.l.b16 %v1517
    %v1662 = vunpack.c.l.b16 %v1518
    %v1663 = vunpack.c.l.b16 %v1519
    %v1664 = vunpack.c.l.b16 %v1520
    %v1665 = vunpack.c.l.b16 %v1521
    %v1666 = vunpack.c.l.b16 %v1522
    %v1667 = vunpack.c.l.b16 %v1523
    %v1668 = vunpack.c.l.b16 %v1524
    %v1669 = vunpack.c.l.b16 %v1525
    %v1670 = vunpack.c.l.b16 %v1526
    %v1671 = vunpack.c.l.b16 %v1527
    %v1672 = vunpack.c.l.b16 %v1528
    %v1673 = vunpack.c.l.b16 %v1529
    %v1674 = vunpack.c.l.b16 %v1530
    %v1675 = vunpack.c.l.b16 %v1531
    %v1676 = vunpack.c.l.b16 %v1532
    %v1677 = vunpack.c.l.b16 %v1533
    %v1678 = vunpack.c.l.b16 %v1534
    %v1679 = vunpack.c.l.b16 %v1535
    %v1680 = vunpack.c.l.b16 %v1536
    %v1681 = vunpack.c.l.b16 %v1537
    %v1682 = vunpack.c.l.b16 %v1538
    %v1683 = vunpack.c.l.b16 %v1539
    %v1684 = vunpack.c.l.b16 %v1540
    %v1685 = vunpack.c.l.b16 %v1541
    %v1686 = vunpack.c.l.b16 %v1542
    %v1687 = vunpack.c.l.b16 %v1543
    %v1688 = vunpack.c.l.b16 %v1544
    %v1689 = vunpack.c.l.b16 %v1545
    %v1690 = vunpack.c.l.b16 %v1546
    %v1691 = vunpack.c.l.b16 %v1547
    %v1692 = vunpack.c.l.b16 %v1548
    %v1693 = vunpack.c.l.b16 %v1549
    %v1694 = vunpack.c.l.b16 %v1550
    %v1695 = vunpack.c.l.b16 %v1551
    %v1696 = vunpack.c.l.b16 %v1552
    %v1697 = vunpack.c.l.b16 %v1553
    %v1698 = vpack.c.b16 %v1635, %v1634
    %v1699 = vpack.c.b16 %v1637, %v1636
    %v1700 = vpack.c.b16 %v1639, %v1638
    %v1701 = vpack.c.b16 %v1641, %v1640
    %v1702 = vpack.c.b16 %v1643, %v1642
    %v1703 = vpack.c.b16 %v1645, %v1644
    %v1704 = vpack.c.b16 %v1647, %v1646
    %v1705 = vpack.c.b16 %v1649, %v1648
    %v1706 = vpack.c.b16 %v1651, %v1650
    %v1707 = vpack.c.b16 %v1653, %v1652
    %v1708 = vpack.c.b16 %v1655, %v1654
    %v1709 = vpack.c.b16 %v1657, %v1656
    %v1710 = vpack.c.b16 %v1659, %v1658
    %v1711 = vpack.c.b16 %v1661, %v1660
    %v1712 = vpack.c.b16 %v1663, %v1662
    %v1713 = vpack.c.b16 %v1665, %v1664
    %v1714 = vpack.c.b16 %v1667, %v1666
    %v1715 = vpack.c.b16 %v1669, %v1668
    %v1716 = vpack.c.b16 %v1671, %v1670
    %v1717 = vpack.c.b16 %v1673, %v1672
    %v1718 = vpack.c.b16 %v1675, %v1674
    %v1719 = vpack.c.b16 %v1677, %v1676
    %v1720 = vpack.c.b16 %v1679, %v1678
    %v1721 = vpack.c.b16 %v1681, %v1680
    %v1722 = vpack.c.b16 %v1683, %v1682
    %v1723 = vpack.c.b16 %v1685, %v1684
    %v1724 = vpack.c.b16 %v1687, %v1686
    %v1725 = vpack.c.b16 %v1689, %v1688
    %v1726 = vpack.c.b16 %v1691, %v1690
    %v1727 = vpack.c.b16 %v1693, %v1692
    %v1728 = vpack.c.b16 %v1695, %v1694
    %v1729 = vpack.c.b16 %v1697, %v1696
    %v1778 = vunpack.c.l.b16 %v1554
    %v1779 = vunpack.c.l.b16 %v1555
    %v1780 = vunpack.c.l.b16 %v1556
    %v1781 = vunpack.c.l.b16 %v1557
    %v1782 = vunpack.c.l.b16 %v1558
    %v1783 = vunpack.c.l.b16 %v1559
    %v1784 = vunpack.c.l.b16 %v1560
    %v1785 = vunpack.c.l.b16 %v1561
    %v1786 = vunpack.c.l.b16 %v1562
    %v1787 = vunpack.c.l.b16 %v1563
    %v1788 = vunpack.c.l.b16 %v1564
    %v1789 = vunpack.c.l.b16 %v1565
    %v1790 = vunpack.c.l.b16 %v1566
    %v1791 = vunpack.c.l.b16 %v1567
    %v1792 = vunpack.c.l.b16 %v1568
    %v1793 = vunpack.c.l.b16 %v1569
    %v1794 = vpack.c.b16 %v1779, %v1778
    %v1795 = vpack.c.b16 %v1781, %v1780
    %v1796 = vpack.c.b16 %v1783, %v1782
    %v1797 = vpack.c.b16 %v1785, %v1784
    %v1798 = vpack.c.b16 %v1787, %v1786
    %v1799 = vpack.c.b16 %v1789, %v1788
    %v1800 = vpack.c.b16 %v1791, %v1790
    %v1801 = vpack.c.b16 %v1793, %v1792
    %1810 = vmatpush.bf16.msra.mxu0 %v1801
    %1811 = vmatpush.bf16.msra.mxu0 %v1800
    %1812 = vmatpush.bf16.msra.mxu0 %v1799
    %1813 = vmatpush.bf16.msra.mxu0 %v1798
    %1814 = vmatpush.bf16.msra.mxu0 %v1797
    %1815 = vmatpush.bf16.msra.mxu0 %v1796
    %1816 = vmatpush.bf16.msra.mxu0 %v1795
    %1817 = vmatpush.bf16.msra.mxu0 %v1794
    %1818 = vmatmul.bf16.gmra.mxu0 %v1698
    %v1819 = vpop.f32.mrf.mxu0
    %v1820 = vadd.f32 0.0, %v1819
    %v1821 = vpop.f32.mrf.mxu0
    %v1822 = vadd.f32 0.0, %v1821
    %1823 = vmatmul.bf16.gmra.mxu0 %v1699
    %v1824 = vpop.f32.mrf.mxu0
    %v1825 = vadd.f32 0.0, %v1824
    %v1826 = vpop.f32.mrf.mxu0
    %v1827 = vadd.f32 0.0, %v1826
    %1828 = vmatmul.bf16.gmra.mxu0 %v1700
    %v1829 = vpop.f32.mrf.mxu0
    %v1830 = vadd.f32 0.0, %v1829
    %v1831 = vpop.f32.mrf.mxu0
    %v1832 = vadd.f32 0.0, %v1831
    %1833 = vmatmul.bf16.gmra.mxu0 %v1701
    %v1834 = vpop.f32.mrf.mxu0
    %v1835 = vadd.f32 0.0, %v1834
    %v1836 = vpop.f32.mrf.mxu0
    %v1837 = vadd.f32 0.0, %v1836
    %1838 = vmatmul.bf16.gmra.mxu0 %v1702
    %v1839 = vpop.f32.mrf.mxu0
    %v1840 = vadd.f32 0.0, %v1839
    %v1841 = vpop.f32.mrf.mxu0
    %v1842 = vadd.f32 0.0, %v1841
    %1843 = vmatmul.bf16.gmra.mxu0 %v1703
    %v1844 = vpop.f32.mrf.mxu0
    %v1845 = vadd.f32 0.0, %v1844
    %v1846 = vpop.f32.mrf.mxu0
    %v1847 = vadd.f32 0.0, %v1846
    %1848 = vmatmul.bf16.gmra.mxu0 %v1704
    %v1849 = vpop.f32.mrf.mxu0
    %v1850 = vadd.f32 0.0, %v1849
    %v1851 = vpop.f32.mrf.mxu0
    %v1852 = vadd.f32 0.0, %v1851
    %1853 = vmatmul.bf16.gmra.mxu0 %v1705
    %v1854 = vpop.f32.mrf.mxu0
    %v1855 = vadd.f32 0.0, %v1854
    %v1856 = vpop.f32.mrf.mxu0
    %v1857 = vadd.f32 0.0, %v1856
    %1858 = vmatmul.bf16.gmra.mxu0 %v1706
    %v1859 = vpop.f32.mrf.mxu0
    %v1860 = vadd.f32 0.0, %v1859
    %v1861 = vpop.f32.mrf.mxu0
    %v1862 = vadd.f32 0.0, %v1861
    %1863 = vmatmul.bf16.gmra.mxu0 %v1707
    %v1864 = vpop.f32.mrf.mxu0
    %v1865 = vadd.f32 0.0, %v1864
    %v1866 = vpop.f32.mrf.mxu0
    %v1867 = vadd.f32 0.0, %v1866
    %1868 = vmatmul.bf16.gmra.mxu0 %v1708
    %v1869 = vpop.f32.mrf.mxu0
    %v1870 = vadd.f32 0.0, %v1869
    %v1871 = vpop.f32.mrf.mxu0
    %v1872 = vadd.f32 0.0, %v1871
    %1873 = vmatmul.bf16.gmra.mxu0 %v1709
    %v1874 = vpop.f32.mrf.mxu0
    %v1875 = vadd.f32 0.0, %v1874
    %v1876 = vpop.f32.mrf.mxu0
    %v1877 = vadd.f32 0.0, %v1876
    %1878 = vmatmul.bf16.gmra.mxu0 %v1710
    %v1879 = vpop.f32.mrf.mxu0
    %v1880 = vadd.f32 0.0, %v1879
    %v1881 = vpop.f32.mrf.mxu0
    %v1882 = vadd.f32 0.0, %v1881
    %1883 = vmatmul.bf16.gmra.mxu0 %v1711
    %v1884 = vpop.f32.mrf.mxu0
    %v1885 = vadd.f32 0.0, %v1884
    %v1886 = vpop.f32.mrf.mxu0
    %v1887 = vadd.f32 0.0, %v1886
    %1888 = vmatmul.bf16.gmra.mxu0 %v1712
    %v1889 = vpop.f32.mrf.mxu0
    %v1890 = vadd.f32 0.0, %v1889
    %v1891 = vpop.f32.mrf.mxu0
    %v1892 = vadd.f32 0.0, %v1891
    %1893 = vmatmul.bf16.gmra.mxu0 %v1713
    %v1894 = vpop.f32.mrf.mxu0
    %v1895 = vadd.f32 0.0, %v1894
    %v1896 = vpop.f32.mrf.mxu0
    %v1897 = vadd.f32 0.0, %v1896
    %1898 = vmatmul.bf16.gmra.mxu0 %v1714
    %v1899 = vpop.f32.mrf.mxu0
    %v1900 = vadd.f32 0.0, %v1899
    %v1901 = vpop.f32.mrf.mxu0
    %v1902 = vadd.f32 0.0, %v1901
    %1903 = vmatmul.bf16.gmra.mxu0 %v1715
    %v1904 = vpop.f32.mrf.mxu0
    %v1905 = vadd.f32 0.0, %v1904
    %v1906 = vpop.f32.mrf.mxu0
    %v1907 = vadd.f32 0.0, %v1906
    %1908 = vmatmul.bf16.gmra.mxu0 %v1716
    %v1909 = vpop.f32.mrf.mxu0
    %v1910 = vadd.f32 0.0, %v1909
    %v1911 = vpop.f32.mrf.mxu0
    %v1912 = vadd.f32 0.0, %v1911
    %1913 = vmatmul.bf16.gmra.mxu0 %v1717
    %v1914 = vpop.f32.mrf.mxu0
    %v1915 = vadd.f32 0.0, %v1914
    %v1916 = vpop.f32.mrf.mxu0
    %v1917 = vadd.f32 0.0, %v1916
    %1918 = vmatmul.bf16.gmra.mxu0 %v1718
    %v1919 = vpop.f32.mrf.mxu0
    %v1920 = vadd.f32 0.0, %v1919
    %v1921 = vpop.f32.mrf.mxu0
    %v1922 = vadd.f32 0.0, %v1921
    %1923 = vmatmul.bf16.gmra.mxu0 %v1719
    %v1924 = vpop.f32.mrf.mxu0
    %v1925 = vadd.f32 0.0, %v1924
    %v1926 = vpop.f32.mrf.mxu0
    %v1927 = vadd.f32 0.0, %v1926
    %1928 = vmatmul.bf16.gmra.mxu0 %v1720
    %v1929 = vpop.f32.mrf.mxu0
    %v1930 = vadd.f32 0.0, %v1929
    %v1931 = vpop.f32.mrf.mxu0
    %v1932 = vadd.f32 0.0, %v1931
    %1933 = vmatmul.bf16.gmra.mxu0 %v1721
    %v1934 = vpop.f32.mrf.mxu0
    %v1935 = vadd.f32 0.0, %v1934
    %v1936 = vpop.f32.mrf.mxu0
    %v1937 = vadd.f32 0.0, %v1936
    %1938 = vmatmul.bf16.gmra.mxu0 %v1722
    %v1939 = vpop.f32.mrf.mxu0
    %v1940 = vadd.f32 0.0, %v1939
    %v1941 = vpop.f32.mrf.mxu0
    %v1942 = vadd.f32 0.0, %v1941
    %1943 = vmatmul.bf16.gmra.mxu0 %v1723
    %v1944 = vpop.f32.mrf.mxu0
    %v1945 = vadd.f32 0.0, %v1944
    %v1946 = vpop.f32.mrf.mxu0
    %v1947 = vadd.f32 0.0, %v1946
    %1948 = vmatmul.bf16.gmra.mxu0 %v1724
    %v1949 = vpop.f32.mrf.mxu0
    %v1950 = vadd.f32 0.0, %v1949
    %v1951 = vpop.f32.mrf.mxu0
    %v1952 = vadd.f32 0.0, %v1951
    %1953 = vmatmul.bf16.gmra.mxu0 %v1725
    %v1954 = vpop.f32.mrf.mxu0
    %v1955 = vadd.f32 0.0, %v1954
    %v1956 = vpop.f32.mrf.mxu0
    %v1957 = vadd.f32 0.0, %v1956
    %1958 = vmatmul.bf16.gmra.mxu0 %v1726
    %v1959 = vpop.f32.mrf.mxu0
    %v1960 = vadd.f32 0.0, %v1959
    %v1961 = vpop.f32.mrf.mxu0
    %v1962 = vadd.f32 0.0, %v1961
    %1963 = vmatmul.bf16.gmra.mxu0 %v1727
    %v1964 = vpop.f32.mrf.mxu0
    %v1965 = vadd.f32 0.0, %v1964
    %v1966 = vpop.f32.mrf.mxu0
    %v1967 = vadd.f32 0.0, %v1966
    %1968 = vmatmul.bf16.gmra.mxu0 %v1728
    %v1969 = vpop.f32.mrf.mxu0
    %v1970 = vadd.f32 0.0, %v1969
    %v1971 = vpop.f32.mrf.mxu0
    %v1972 = vadd.f32 0.0, %v1971
    %1973 = vmatmul.bf16.gmra.mxu0 %v1729
    %v1974 = vpop.f32.mrf.mxu0
    %v1975 = vadd.f32 0.0, %v1974
    %v1976 = vpop.f32.mrf.mxu0
    %v1977 = vadd.f32 0.0, %v1976
    %1978 = vdwg.mxu0
    %v1979 = vld [vmem:[%s1] sm:$0x1]
    %v1980 = vperm.slane %v1979, 0
    %v1981 = vmul.f32 %v1820, %v1980
    %v1982 = vmul.f32 %v1822, %v1980
    %v1983 = vmul.f32 %v1825, %v1980
    %v1984 = vmul.f32 %v1827, %v1980
    %v1985 = vmul.f32 %v1830, %v1980
    %v1986 = vmul.f32 %v1832, %v1980
    %v1987 = vmul.f32 %v1835, %v1980
    %v1988 = vmul.f32 %v1837, %v1980
    %v1989 = vmul.f32 %v1840, %v1980
    %v1990 = vmul.f32 %v1842, %v1980
    %v1991 = vmul.f32 %v1845, %v1980
    %v1992 = vmul.f32 %v1847, %v1980
    %v1993 = vmul.f32 %v1850, %v1980
    %v1994 = vmul.f32 %v1852, %v1980
    %v1995 = vmul.f32 %v1855, %v1980
    %v1996 = vmul.f32 %v1857, %v1980
    %v1997 = vmul.f32 %v1860, %v1980
    %v1998 = vmul.f32 %v1862, %v1980
    %v1999 = vmul.f32 %v1865, %v1980
    %v2000 = vmul.f32 %v1867, %v1980
    %v2001 = vmul.f32 %v1870, %v1980
    %v2002 = vmul.f32 %v1872, %v1980
    %v2003 = vmul.f32 %v1875, %v1980
    %v2004 = vmul.f32 %v1877, %v1980
    %v2005 = vmul.f32 %v1880, %v1980
    %v2006 = vmul.f32 %v1882, %v1980
    %v2007 = vmul.f32 %v1885, %v1980
    %v2008 = vmul.f32 %v1887, %v1980
    %v2009 = vmul.f32 %v1890, %v1980
    %v2010 = vmul.f32 %v1892, %v1980
    %v2011 = vmul.f32 %v1895, %v1980
    %v2012 = vmul.f32 %v1897, %v1980
    %v2013 = vmul.f32 %v1900, %v1980
    %v2014 = vmul.f32 %v1902, %v1980
    %v2015 = vmul.f32 %v1905, %v1980
    %v2016 = vmul.f32 %v1907, %v1980
    %v2017 = vmul.f32 %v1910, %v1980
    %v2018 = vmul.f32 %v1912, %v1980
    %v2019 = vmul.f32 %v1915, %v1980
    %v2020 = vmul.f32 %v1917, %v1980
    %v2021 = vmul.f32 %v1920, %v1980
    %v2022 = vmul.f32 %v1922, %v1980
    %v2023 = vmul.f32 %v1925, %v1980
    %v2024 = vmul.f32 %v1927, %v1980
    %v2025 = vmul.f32 %v1930, %v1980
    %v2026 = vmul.f32 %v1932, %v1980
    %v2027 = vmul.f32 %v1935, %v1980
    %v2028 = vmul.f32 %v1937, %v1980
    %v2029 = vmul.f32 %v1940, %v1980
    %v2030 = vmul.f32 %v1942, %v1980
    %v2031 = vmul.f32 %v1945, %v1980
    %v2032 = vmul.f32 %v1947, %v1980
    %v2033 = vmul.f32 %v1950, %v1980
    %v2034 = vmul.f32 %v1952, %v1980
    %v2035 = vmul.f32 %v1955, %v1980
    %v2036 = vmul.f32 %v1957, %v1980
    %v2037 = vmul.f32 %v1960, %v1980
    %v2038 = vmul.f32 %v1962, %v1980
    %v2039 = vmul.f32 %v1965, %v1980
    %v2040 = vmul.f32 %v1967, %v1980
    %v2041 = vmul.f32 %v1970, %v1980
    %v2042 = vmul.f32 %v1972, %v1980
    %v2043 = vmul.f32 %v1975, %v1980
    %v2044 = vmul.f32 %v1977, %v1980
    %v2045 = vld [vmem:[%s1 + $0x1] sm:$0x1]
    %v2046 = vperm.slane %v2045, 0
    %v2047 = vadd.f32 %v1981, %v2046
    %v2048 = vadd.f32 %v1982, %v2046
    %v2049 = vadd.f32 %v1983, %v2046
    %v2050 = vadd.f32 %v1984, %v2046
    %v2051 = vadd.f32 %v1985, %v2046
    %v2052 = vadd.f32 %v1986, %v2046
    %v2053 = vadd.f32 %v1987, %v2046
    %v2054 = vadd.f32 %v1988, %v2046
    %v2055 = vadd.f32 %v1989, %v2046
    %v2056 = vadd.f32 %v1990, %v2046
    %v2057 = vadd.f32 %v1991, %v2046
    %v2058 = vadd.f32 %v1992, %v2046
    %v2059 = vadd.f32 %v1993, %v2046
    %v2060 = vadd.f32 %v1994, %v2046
    %v2061 = vadd.f32 %v1995, %v2046
    %v2062 = vadd.f32 %v1996, %v2046
    %v2063 = vadd.f32 %v1997, %v2046
    %v2064 = vadd.f32 %v1998, %v2046
    %v2065 = vadd.f32 %v1999, %v2046
    %v2066 = vadd.f32 %v2000, %v2046
    %v2067 = vadd.f32 %v2001, %v2046
    %v2068 = vadd.f32 %v2002, %v2046
    %v2069 = vadd.f32 %v2003, %v2046
    %v2070 = vadd.f32 %v2004, %v2046
    %v2071 = vadd.f32 %v2005, %v2046
    %v2072 = vadd.f32 %v2006, %v2046
    %v2073 = vadd.f32 %v2007, %v2046
    %v2074 = vadd.f32 %v2008, %v2046
    %v2075 = vadd.f32 %v2009, %v2046
    %v2076 = vadd.f32 %v2010, %v2046
    %v2077 = vadd.f32 %v2011, %v2046
    %v2078 = vadd.f32 %v2012, %v2046
    %v2079 = vadd.f32 %v2013, %v2046
    %v2080 = vadd.f32 %v2014, %v2046
    %v2081 = vadd.f32 %v2015, %v2046
    %v2082 = vadd.f32 %v2016, %v2046
    %v2083 = vadd.f32 %v2017, %v2046
    %v2084 = vadd.f32 %v2018, %v2046
    %v2085 = vadd.f32 %v2019, %v2046
    %v2086 = vadd.f32 %v2020, %v2046
    %v2087 = vadd.f32 %v2021, %v2046
    %v2088 = vadd.f32 %v2022, %v2046
    %v2089 = vadd.f32 %v2023, %v2046
    %v2090 = vadd.f32 %v2024, %v2046
    %v2091 = vadd.f32 %v2025, %v2046
    %v2092 = vadd.f32 %v2026, %v2046
    %v2093 = vadd.f32 %v2027, %v2046
    %v2094 = vadd.f32 %v2028, %v2046
    %v2095 = vadd.f32 %v2029, %v2046
    %v2096 = vadd.f32 %v2030, %v2046
    %v2097 = vadd.f32 %v2031, %v2046
    %v2098 = vadd.f32 %v2032, %v2046
    %v2099 = vadd.f32 %v2033, %v2046
    %v2100 = vadd.f32 %v2034, %v2046
    %v2101 = vadd.f32 %v2035, %v2046
    %v2102 = vadd.f32 %v2036, %v2046
    %v2103 = vadd.f32 %v2037, %v2046
    %v2104 = vadd.f32 %v2038, %v2046
    %v2105 = vadd.f32 %v2039, %v2046
    %v2106 = vadd.f32 %v2040, %v2046
    %v2107 = vadd.f32 %v2041, %v2046
    %v2108 = vadd.f32 %v2042, %v2046
    %v2109 = vadd.f32 %v2043, %v2046
    %v2110 = vadd.f32 %v2044, %v2046
    %v2111 = vmax.f32 %v2047, 0.0
    %v2112 = vmax.f32 %v2048, 0.0
    %v2113 = vmax.f32 %v2049, 0.0
    %v2114 = vmax.f32 %v2050, 0.0
    %v2115 = vmax.f32 %v2051, 0.0
    %v2116 = vmax.f32 %v2052, 0.0
    %v2117 = vmax.f32 %v2053, 0.0
    %v2118 = vmax.f32 %v2054, 0.0
    %v2119 = vmax.f32 %v2055, 0.0
    %v2120 = vmax.f32 %v2056, 0.0
    %v2121 = vmax.f32 %v2057, 0.0
    %v2122 = vmax.f32 %v2058, 0.0
    %v2123 = vmax.f32 %v2059, 0.0
    %v2124 = vmax.f32 %v2060, 0.0
    %v2125 = vmax.f32 %v2061, 0.0
    %v2126 = vmax.f32 %v2062, 0.0
    %v2127 = vmax.f32 %v2063, 0.0
    %v2128 = vmax.f32 %v2064, 0.0
    %v2129 = vmax.f32 %v2065, 0.0
    %v2130 = vmax.f32 %v2066, 0.0
    %v2131 = vmax.f32 %v2067, 0.0
    %v2132 = vmax.f32 %v2068, 0.0
    %v2133 = vmax.f32 %v2069, 0.0
    %v2134 = vmax.f32 %v2070, 0.0
    %v2135 = vmax.f32 %v2071, 0.0
    %v2136 = vmax.f32 %v2072, 0.0
    %v2137 = vmax.f32 %v2073, 0.0
    %v2138 = vmax.f32 %v2074, 0.0
    %v2139 = vmax.f32 %v2075, 0.0
    %v2140 = vmax.f32 %v2076, 0.0
    %v2141 = vmax.f32 %v2077, 0.0
    %v2142 = vmax.f32 %v2078, 0.0
    %v2143 = vmax.f32 %v2079, 0.0
    %v2144 = vmax.f32 %v2080, 0.0
    %v2145 = vmax.f32 %v2081, 0.0
    %v2146 = vmax.f32 %v2082, 0.0
    %v2147 = vmax.f32 %v2083, 0.0
    %v2148 = vmax.f32 %v2084, 0.0
    %v2149 = vmax.f32 %v2085, 0.0
    %v2150 = vmax.f32 %v2086, 0.0
    %v2151 = vmax.f32 %v2087, 0.0
    %v2152 = vmax.f32 %v2088, 0.0
    %v2153 = vmax.f32 %v2089, 0.0
    %v2154 = vmax.f32 %v2090, 0.0
    %v2155 = vmax.f32 %v2091, 0.0
    %v2156 = vmax.f32 %v2092, 0.0
    %v2157 = vmax.f32 %v2093, 0.0
    %v2158 = vmax.f32 %v2094, 0.0
    %v2159 = vmax.f32 %v2095, 0.0
    %v2160 = vmax.f32 %v2096, 0.0
    %v2161 = vmax.f32 %v2097, 0.0
    %v2162 = vmax.f32 %v2098, 0.0
    %v2163 = vmax.f32 %v2099, 0.0
    %v2164 = vmax.f32 %v2100, 0.0
    %v2165 = vmax.f32 %v2101, 0.0
    %v2166 = vmax.f32 %v2102, 0.0
    %v2167 = vmax.f32 %v2103, 0.0
    %v2168 = vmax.f32 %v2104, 0.0
    %v2169 = vmax.f32 %v2105, 0.0
    %v2170 = vmax.f32 %v2106, 0.0
    %v2171 = vmax.f32 %v2107, 0.0
    %v2172 = vmax.f32 %v2108, 0.0
    %v2173 = vmax.f32 %v2109, 0.0
    %v2174 = vmax.f32 %v2110, 0.0
    %2175 = vst [vmem:[%s4] sm:$0xff] %v2111
    %2176 = vst [vmem:[%s4 + $0x8] sm:$0xff] %v2112
    %2177 = vst [vmem:[%s4 + $0x10] sm:$0xff] %v2113
    %2178 = vst [vmem:[%s4 + $0x18] sm:$0xff] %v2114
    %2179 = vst [vmem:[%s4 + $0x20] sm:$0xff] %v2115
    %2180 = vst [vmem:[%s4 + $0x28] sm:$0xff] %v2116
    %2181 = vst [vmem:[%s4 + $0x30] sm:$0xff] %v2117
    %2182 = vst [vmem:[%s4 + $0x38] sm:$0xff] %v2118
    %2183 = vst [vmem:[%s4 + $0x40] sm:$0xff] %v2119
    %2184 = vst [vmem:[%s4 + $0x48] sm:$0xff] %v2120
    %2185 = vst [vmem:[%s4 + $0x50] sm:$0xff] %v2121
    %2186 = vst [vmem:[%s4 + $0x58] sm:$0xff] %v2122
    %2187 = vst [vmem:[%s4 + $0x60] sm:$0xff] %v2123
    %2188 = vst [vmem:[%s4 + $0x68] sm:$0xff] %v2124
    %2189 = vst [vmem:[%s4 + $0x70] sm:$0xff] %v2125
    %2190 = vst [vmem:[%s4 + $0x78] sm:$0xff] %v2126
    %2191 = vst [vmem:[%s4 + $0x80] sm:$0xff] %v2127
    %2192 = vst [vmem:[%s4 + $0x88] sm:$0xff] %v2128
    %2193 = vst [vmem:[%s4 + $0x90] sm:$0xff] %v2129
    %2194 = vst [vmem:[%s4 + $0x98] sm:$0xff] %v2130
    %2195 = vst [vmem:[%s4 + $0xa0] sm:$0xff] %v2131
    %2196 = vst [vmem:[%s4 + $0xa8] sm:$0xff] %v2132
    %2197 = vst [vmem:[%s4 + $0xb0] sm:$0xff] %v2133
    %2198 = vst [vmem:[%s4 + $0xb8] sm:$0xff] %v2134
    %2199 = vst [vmem:[%s4 + $0xc0] sm:$0xff] %v2135
    %2200 = vst [vmem:[%s4 + $0xc8] sm:$0xff] %v2136
    %2201 = vst [vmem:[%s4 + $0xd0] sm:$0xff] %v2137
    %2202 = vst [vmem:[%s4 + $0xd8] sm:$0xff] %v2138
    %2203 = vst [vmem:[%s4 + $0xe0] sm:$0xff] %v2139
    %2204 = vst [vmem:[%s4 + $0xe8] sm:$0xff] %v2140
    %2205 = vst [vmem:[%s4 + $0xf0] sm:$0xff] %v2141
    %2206 = vst [vmem:[%s4 + $0xf8] sm:$0xff] %v2142
    %2207 = vst [vmem:[%s4 + $0x100] sm:$0xff] %v2143
    %2208 = vst [vmem:[%s4 + $0x108] sm:$0xff] %v2144
    %2209 = vst [vmem:[%s4 + $0x110] sm:$0xff] %v2145
    %2210 = vst [vmem:[%s4 + $0x118] sm:$0xff] %v2146
    %2211 = vst [vmem:[%s4 + $0x120] sm:$0xff] %v2147
    %2212 = vst [vmem:[%s4 + $0x128] sm:$0xff] %v2148
    %2213 = vst [vmem:[%s4 + $0x130] sm:$0xff] %v2149
    %2214 = vst [vmem:[%s4 + $0x138] sm:$0xff] %v2150
    %2215 = vst [vmem:[%s4 + $0x140] sm:$0xff] %v2151
    %2216 = vst [vmem:[%s4 + $0x148] sm:$0xff] %v2152
    %2217 = vst [vmem:[%s4 + $0x150] sm:$0xff] %v2153
    %2218 = vst [vmem:[%s4 + $0x158] sm:$0xff] %v2154
    %2219 = vst [vmem:[%s4 + $0x160] sm:$0xff] %v2155
    %2220 = vst [vmem:[%s4 + $0x168] sm:$0xff] %v2156
    %2221 = vst [vmem:[%s4 + $0x170] sm:$0xff] %v2157
    %2222 = vst [vmem:[%s4 + $0x178] sm:$0xff] %v2158
    %2223 = vst [vmem:[%s4 + $0x180] sm:$0xff] %v2159
    %2224 = vst [vmem:[%s4 + $0x188] sm:$0xff] %v2160
    %2225 = vst [vmem:[%s4 + $0x190] sm:$0xff] %v2161
    %2226 = vst [vmem:[%s4 + $0x198] sm:$0xff] %v2162
    %2227 = vst [vmem:[%s4 + $0x1a0] sm:$0xff] %v2163
    %2228 = vst [vmem:[%s4 + $0x1a8] sm:$0xff] %v2164
    %2229 = vst [vmem:[%s4 + $0x1b0] sm:$0xff] %v2165
    %2230 = vst [vmem:[%s4 + $0x1b8] sm:$0xff] %v2166
    %2231 = vst [vmem:[%s4 + $0x1c0] sm:$0xff] %v2167
    %2232 = vst [vmem:[%s4 + $0x1c8] sm:$0xff] %v2168
    %2233 = vst [vmem:[%s4 + $0x1d0] sm:$0xff] %v2169
    %2234 = vst [vmem:[%s4 + $0x1d8] sm:$0xff] %v2170
    %2235 = vst [vmem:[%s4 + $0x1e0] sm:$0xff] %v2171
    %2236 = vst [vmem:[%s4 + $0x1e8] sm:$0xff] %v2172
    %2237 = vst [vmem:[%s4 + $0x1f0] sm:$0xff] %v2173
    %2238 = vst [vmem:[%s4 + $0x1f8] sm:$0xff] %v2174
    // Predicated region
    $region14: #{conv_block_forward.4} parent=1 // pred_check
      _
    $region15: #{conv_block_forward.4} parent=1 // pred_check_branch
      %2240 = sbr.rel (0) target = $region17
    $region16: #{conv_block_forward.4} parent=1 // pred_region
      _
    $region17: #{conv_block_forward.4} parent=1 // pred_fallthru
      _
    // Predicated region
    $region18: #{conv_block_forward.4} parent=1 // pred_check
      _
    $region19: #{conv_block_forward.4} parent=1 // pred_check_branch
      %2242 = sbr.rel (0) target = $region21
    $region20: #{conv_block_forward.4} parent=1 // pred_region
      _
    $region21: #{conv_block_forward.4} parent=1 // pred_fallthru
      _

</llo_original>
